<compile_context>
chip_gen: v7x
topology: tpu7x:2x2x1
jax: 0.10.0
libtpu: 0.0.40
codegen_flags: <defaults>
</compile_context>

<pallas_src>
import math

import jax
import jax.numpy as jnp
from jax import lax
from jax.experimental import pallas as pl
from jax.experimental.pallas import tpu as pltpu

# ----------------------------- tiny synthetic BERT config -----------------------------
VOCAB = 64
TYPE_VOCAB = 2
MAX_POS = 16
HIDDEN = 32
HEADS = 2
HEAD_DIM = HIDDEN // HEADS
INTER = 64
LAYERS = 2
BATCH = 2
SEQ = 8
LN_EPS = 1e-12

_VMEM_SPEC = pl.BlockSpec(memory_space=pltpu.MemorySpace.VMEM)
_PER_LAYER_ARGS = 7   # wqkv, wo, w1, w2, bqkv, b1, vecs(6,H)


# ----------------------------------- in-kernel helpers --------------------------------
def _layernorm(x, g, b):
    mu = jnp.mean(x, axis=-1, keepdims=True)
    var = jnp.mean(jnp.square(x - mu), axis=-1, keepdims=True)
    return (x - mu) * lax.rsqrt(var + LN_EPS) * g + b


def _erf(x):
    # Abramowitz & Stegun 7.1.26 polynomial (|err| <= 1.5e-7): matches original
    # BERT's exact-erf GELU using only VPU/EUP ops (no erf lowering dependency).
    a1, a2, a3, a4, a5 = 0.254829592, -0.284496736, 1.421413741, -1.453152027, 1.061405429
    p = 0.3275911
    ax = jnp.abs(x)
    t = 1.0 / (1.0 + p * ax)
    poly = ((((a5 * t + a4) * t + a3) * t + a2) * t + a1) * t
    y = 1.0 - poly * jnp.exp(-ax * ax)
    return jnp.where(x >= 0, y, -y)


def _gelu_erf(x):
    return 0.5 * x * (1.0 + _erf(x * (1.0 / math.sqrt(2.0))))


# ----------------------------------- fused kernel --------------------------------------
def fused_bert_kernel(x_ref, mask_ref, label_ref, emb_ln_ref, *rest):
    # rest = LAYERS*7 per-layer refs, pool_w, head_vecs, cls_b  (inputs), loss_ref (output)
    n_l = LAYERS * _PER_LAYER_ARGS
    layer_refs = rest[:n_l]
    pool_w_ref, head_vecs_ref, cls_b_ref, loss_ref = rest[n_l:]

    scale = 1.0 / math.sqrt(HEAD_DIM)

    # --- embedding LayerNorm (x is the summed word+pos+type embeddings) -----------------
    emb_ln = emb_ln_ref[...]                                        # (2, H) [gamma; beta]
    h = _layernorm(x_ref[...], emb_ln[0:1, :], emb_ln[1:2, :])      # (B*S, H)

    # --- additive attention bias from the padding mask, kept as (B, S) ------------------
    bias_all = (1.0 - mask_ref[...].astype(jnp.float32)) * -10000.0  # (B, S)

    for l in range(LAYERS):
        (wqkv_ref, wo_ref, w1_ref, w2_ref,
         bqkv_ref, b1_ref, vecs_ref) = layer_refs[l * _PER_LAYER_ARGS:(l + 1) * _PER_LAYER_ARGS]
        wo = wo_ref[...]                                            # (H, H)
        vecs = vecs_ref[...]                                        # (6, H)
        bo, ln1g, ln1b = vecs[0:1, :], vecs[1:2, :], vecs[2:3, :]
        b2, ln2g, ln2b = vecs[3:4, :], vecs[4:5, :], vecs[5:6, :]

        # one packed QKV matmul over the whole (B*S, H) slab
        qkv = jnp.dot(h, wqkv_ref[...], preferred_element_type=jnp.float32) + bqkv_ref[...]

        # attention: static Python loops over batch & heads (tiny, traced once);
        # head concat replaced by a sum over per-head row-slices of Wo.
        attn_rows = []
        for b in range(BATCH):
            rows = slice(b * SEQ, (b + 1) * SEQ)
            bias_b = bias_all[b:b + 1, :]                           # (1, S) -> bcast over (S, S)
            ctx_out = None
            for hd in range(HEADS):
                qh = qkv[rows, hd * HEAD_DIM:(hd + 1) * HEAD_DIM]
                kh = qkv[rows, HIDDEN + hd * HEAD_DIM:HIDDEN + (hd + 1) * HEAD_DIM]
                vh = qkv[rows, 2 * HIDDEN + hd * HEAD_DIM:2 * HIDDEN + (hd + 1) * HEAD_DIM]
                s = lax.dot_general(qh, kh, (((1,), (1,)), ((), ())),
                                    preferred_element_type=jnp.float32) * scale + bias_b
                s = s - jnp.max(s, axis=-1, keepdims=True)
                p = jnp.exp(s)
                p = p * pl.reciprocal(jnp.sum(p, axis=-1, keepdims=True), approx=True)
                ctx_h = jnp.dot(p, vh, preferred_element_type=jnp.float32)        # (S, HEAD_DIM)
                contrib = jnp.dot(ctx_h, wo[hd * HEAD_DIM:(hd + 1) * HEAD_DIM, :],
                                  preferred_element_type=jnp.float32)             # (S, H)
                ctx_out = contrib if ctx_out is None else ctx_out + contrib
            attn_rows.append(ctx_out)
        attn_out = jnp.concatenate(attn_rows, axis=0) + bo          # (B*S, H)

        h1 = _layernorm(h + attn_out, ln1g, ln1b)
        ff = jnp.dot(h1, w1_ref[...], preferred_element_type=jnp.float32) + b1_ref[...]
        ff = _gelu_erf(ff)
        ff = jnp.dot(ff, w2_ref[...], preferred_element_type=jnp.float32) + b2
        h = _layernorm(h1 + ff, ln2g, ln2b)

    # --- pooler ([CLS] -> dense -> tanh), classifier, sigmoid, BCE(reduction='none') ----
    hcls = jnp.concatenate([h[b * SEQ:b * SEQ + 1, :] for b in range(BATCH)], axis=0)  # (B, H)
    hv = head_vecs_ref[...]                                         # (2, H): [pool_b; cls_w]
    pooled = jnp.tanh(jnp.dot(hcls, pool_w_ref[...], preferred_element_type=jnp.float32)
                      + hv[0:1, :])
    # TODO(synk): nn.Dropout(p=0.1) is identity in eval mode; not applied here.
    # classifier Linear(H, 1): VPU multiply + lane reduction (avoids an N=1 MXU matmul)
    scores = jnp.sum(pooled * hv[1:2, :], axis=-1, keepdims=True) + cls_b_ref[...]     # (B, 1)
    prob = jax.nn.sigmoid(scores)
    y = label_ref[...]                                              # (B, 1) float
    # nn.BCELoss clamps the log terms at -100.
    logp = jnp.maximum(jnp.log(prob), -100.0)
    log1mp = jnp.maximum(jnp.log(1.0 - prob), -100.0)
    loss_ref[...] = -(y * logp + (1.0 - y) * log1mp)


# ------------------------------------ wrapper -------------------------------------------
def bert_binary_classification_loss(params, word_ids, segment_ids, masks, label):
    B, S = word_ids.shape
    # Embedding-table gathers stay in XLA (glue); everything else is one fused kernel.
    emb = (params["word_emb"][word_ids]
           + params["pos_emb"][None, :S, :]
           + params["type_emb"][segment_ids])
    x2d = emb.reshape(B * S, HIDDEN)

    layer_args = [arr for lp in params["layers"] for arr in lp]
    n_in = 4 + len(layer_args) + 3
    # NOTE(scaling): at real BERT sizes (H=768, INTER=3072) the full-weight-in-VMEM
    # pattern must become K-tiled, single-buffered BlockSpecs with vmem_limit_bytes
    # set (v7x has 64 MiB VMEM); at H=32 everything fits trivially.
    loss = pl.pallas_call(
        fused_bert_kernel,
        out_shape=jax.ShapeDtypeStruct((B, 1), jnp.float32),
        in_specs=[_VMEM_SPEC] * n_in,
        out_specs=_VMEM_SPEC,
    )(x2d, masks, label.astype(jnp.float32).reshape(B, 1), params["emb_ln"],
      *layer_args, params["pool_w"], params["head_vecs"], params["cls_b"])
    return loss.reshape(-1)                  # matches logprob.view(-1) / BCE 'none'


# ------------------------------------ parameter init -----------------------------------
def init_params(key):
    cnt = [0]

    def nxt():
        cnt[0] += 1
        return jax.random.fold_in(key, cnt[0])

    def normal(shape):
        return (0.02 * jax.random.normal(nxt(), shape)).astype(jnp.float32)

    params = {
        "word_emb": normal((VOCAB, HIDDEN)),
        "pos_emb": normal((MAX_POS, HIDDEN)),
        "type_emb": normal((TYPE_VOCAB, HIDDEN)),
        # embedding LayerNorm packed as rows [gamma; beta]
        "emb_ln": jnp.concatenate([jnp.ones((1, HIDDEN), jnp.float32),
                                   jnp.zeros((1, HIDDEN), jnp.float32)], axis=0),
        "pool_w": normal((HIDDEN, HIDDEN)),
        # head_vecs rows: [pooler bias; classifier weight row]
        # classifier init_weights(): weight ~ N(0, 0.02), bias = 0
        "head_vecs": jnp.concatenate([jnp.zeros((1, HIDDEN), jnp.float32),
                                      normal((1, HIDDEN))], axis=0),
        "cls_b": jnp.zeros((1, 1), jnp.float32),
        "layers": [],
    }
    for _ in range(LAYERS):
        wq, wk, wv = normal((HIDDEN, HIDDEN)), normal((HIDDEN, HIDDEN)), normal((HIDDEN, HIDDEN))
        wqkv = jnp.concatenate([wq, wk, wv], axis=1)            # packed (H, 3H)
        bqkv = jnp.zeros((1, 3 * HIDDEN), jnp.float32)
        wo = normal((HIDDEN, HIDDEN))
        w1, b1 = normal((HIDDEN, INTER)), jnp.zeros((1, INTER), jnp.float32)
        w2 = normal((INTER, HIDDEN))
        # vecs rows: [bo, ln1_gamma, ln1_beta, ffn_b2, ln2_gamma, ln2_beta]
        vecs = jnp.concatenate([
            jnp.zeros((1, HIDDEN), jnp.float32),   # bo
            jnp.ones((1, HIDDEN), jnp.float32),    # ln1 gamma
            jnp.zeros((1, HIDDEN), jnp.float32),   # ln1 beta
            jnp.zeros((1, HIDDEN), jnp.float32),   # b2
            jnp.ones((1, HIDDEN), jnp.float32),    # ln2 gamma
            jnp.zeros((1, HIDDEN), jnp.float32),   # ln2 beta
        ], axis=0)
        params["layers"].append((wqkv, wo, w1, w2, bqkv, b1, vecs))
    return params


# ---------------------------------------- main ------------------------------------------
if __name__ == "__main__":
    key = jax.random.PRNGKey(0)
    params = init_params(jax.random.fold_in(key, 123))

    word_ids = jax.random.randint(jax.random.fold_in(key, 1), (BATCH, SEQ), 0, VOCAB,
                                  dtype=jnp.int32)
    segment_ids = jnp.concatenate(
        [jnp.zeros((BATCH, SEQ // 2), jnp.int32), jnp.ones((BATCH, SEQ // 2), jnp.int32)],
        axis=1)
    masks = jnp.ones((BATCH, SEQ), jnp.int32).at[1, SEQ - 2:].set(0)  # some padding
    label = jax.random.randint(jax.random.fold_in(key, 2), (BATCH,), 0, 2,
                               dtype=jnp.int32)

    loss = jax.jit(bert_binary_classification_loss)(params, word_ids, segment_ids,
                                                    masks, label)
    loss = jax.block_until_ready(loss)
    assert loss.shape == (BATCH,) and bool(jnp.all(jnp.isfinite(loss)))
    print("KERNEL_OK")
</pallas_src>

<mosaic_0001>
module attributes {stable_mosaic.version = 11 : i64} {
  func.func @fused_bert_kernel(%arg0: memref<16x32xf32, #tpu.memory_space<vmem>>, %arg1: memref<2x8xi32, #tpu.memory_space<vmem>>, %arg2: memref<2x1xf32, #tpu.memory_space<vmem>>, %arg3: memref<2x32xf32, #tpu.memory_space<vmem>>, %arg4: memref<32x96xf32, #tpu.memory_space<vmem>>, %arg5: memref<32x32xf32, #tpu.memory_space<vmem>>, %arg6: memref<32x64xf32, #tpu.memory_space<vmem>>, %arg7: memref<64x32xf32, #tpu.memory_space<vmem>>, %arg8: memref<1x96xf32, #tpu.memory_space<vmem>>, %arg9: memref<1x64xf32, #tpu.memory_space<vmem>>, %arg10: memref<6x32xf32, #tpu.memory_space<vmem>>, %arg11: memref<32x96xf32, #tpu.memory_space<vmem>>, %arg12: memref<32x32xf32, #tpu.memory_space<vmem>>, %arg13: memref<32x64xf32, #tpu.memory_space<vmem>>, %arg14: memref<64x32xf32, #tpu.memory_space<vmem>>, %arg15: memref<1x96xf32, #tpu.memory_space<vmem>>, %arg16: memref<1x64xf32, #tpu.memory_space<vmem>>, %arg17: memref<6x32xf32, #tpu.memory_space<vmem>>, %arg18: memref<32x32xf32, #tpu.memory_space<vmem>>, %arg19: memref<2x32xf32, #tpu.memory_space<vmem>>, %arg20: memref<1x1xf32, #tpu.memory_space<vmem>>, %arg21: memref<2x1xf32, #tpu.memory_space<vmem>>) attributes {dimension_semantics = [], scalar_prefetch = 0 : i64, scratch_operands = 0 : i64, tpu.core_type = #tpu.core_type<tc>} {
    %c0 = arith.constant 0 : index
    %c0_0 = arith.constant 0 : index
    %0 = vector.load %arg3[%c0, %c0_0] : memref<2x32xf32, #tpu.memory_space<vmem>>, vector<2x32xf32>
    %c0_1 = arith.constant 0 : index
    %c0_2 = arith.constant 0 : index
    %1 = vector.load %arg0[%c0_1, %c0_2] : memref<16x32xf32, #tpu.memory_space<vmem>>, vector<16x32xf32>
    %2 = vector.extract_strided_slice %0 {offsets = [0, 0], sizes = [1, 32], strides = [1, 1]} : vector<2x32xf32> to vector<1x32xf32>
    %3 = vector.extract_strided_slice %0 {offsets = [1, 0], sizes = [1, 32], strides = [1, 1]} : vector<2x32xf32> to vector<1x32xf32>
    %cst = arith.constant dense<0.000000e+00> : vector<16xf32>
    %4 = vector.multi_reduction <add>, %1, %cst [1] : vector<16x32xf32> to vector<16xf32>
    %5 = vector.shape_cast %4 : vector<16xf32> to vector<16x1xf32>
    %cst_3 = arith.constant 3.200000e+01 : f32
    %6 = vector.broadcast %cst_3 : f32 to vector<16x1xf32>
    %7 = arith.divf %5, %6 : vector<16x1xf32>
    %8 = vector.broadcast %7 : vector<16x1xf32> to vector<16x32xf32>
    %9 = arith.subf %1, %8 : vector<16x32xf32>
    %10 = arith.mulf %9, %9 : vector<16x32xf32>
    %cst_4 = arith.constant dense<0.000000e+00> : vector<16xf32>
    %11 = vector.multi_reduction <add>, %10, %cst_4 [1] : vector<16x32xf32> to vector<16xf32>
    %12 = vector.shape_cast %11 : vector<16xf32> to vector<16x1xf32>
    %cst_5 = arith.constant 3.200000e+01 : f32
    %13 = vector.broadcast %cst_5 : f32 to vector<16x1xf32>
    %14 = arith.divf %12, %13 : vector<16x1xf32>
    %15 = vector.broadcast %7 : vector<16x1xf32> to vector<16x32xf32>
    %16 = arith.subf %1, %15 : vector<16x32xf32>
    %cst_6 = arith.constant 9.99999996E-13 : f32
    %17 = vector.broadcast %cst_6 : f32 to vector<16x1xf32>
    %18 = arith.addf %14, %17 : vector<16x1xf32>
    %19 = math.rsqrt %18 : vector<16x1xf32>
    %20 = vector.broadcast %19 : vector<16x1xf32> to vector<16x32xf32>
    %21 = arith.mulf %16, %20 : vector<16x32xf32>
    %22 = vector.broadcast %2 : vector<1x32xf32> to vector<16x32xf32>
    %23 = arith.mulf %21, %22 : vector<16x32xf32>
    %24 = vector.broadcast %3 : vector<1x32xf32> to vector<16x32xf32>
    %25 = arith.addf %23, %24 : vector<16x32xf32>
    %c0_7 = arith.constant 0 : index
    %c0_8 = arith.constant 0 : index
    %26 = vector.load %arg1[%c0_7, %c0_8] : memref<2x8xi32, #tpu.memory_space<vmem>>, vector<2x8xi32>
    %27 = arith.sitofp %26 : vector<2x8xi32> to vector<2x8xf32>
    %cst_9 = arith.constant 1.000000e+00 : f32
    %28 = vector.broadcast %cst_9 : f32 to vector<2x8xf32>
    %29 = arith.subf %28, %27 : vector<2x8xf32>
    %cst_10 = arith.constant -1.000000e+04 : f32
    %30 = vector.broadcast %cst_10 : f32 to vector<2x8xf32>
    %31 = arith.mulf %29, %30 : vector<2x8xf32>
    %c0_11 = arith.constant 0 : index
    %c0_12 = arith.constant 0 : index
    %32 = vector.load %arg5[%c0_11, %c0_12] : memref<32x32xf32, #tpu.memory_space<vmem>>, vector<32x32xf32>
    %c0_13 = arith.constant 0 : index
    %c0_14 = arith.constant 0 : index
    %33 = vector.load %arg10[%c0_13, %c0_14] : memref<6x32xf32, #tpu.memory_space<vmem>>, vector<6x32xf32>
    %34 = vector.extract_strided_slice %33 {offsets = [0, 0], sizes = [1, 32], strides = [1, 1]} : vector<6x32xf32> to vector<1x32xf32>
    %35 = vector.extract_strided_slice %33 {offsets = [1, 0], sizes = [1, 32], strides = [1, 1]} : vector<6x32xf32> to vector<1x32xf32>
    %36 = vector.extract_strided_slice %33 {offsets = [2, 0], sizes = [1, 32], strides = [1, 1]} : vector<6x32xf32> to vector<1x32xf32>
    %37 = vector.extract_strided_slice %33 {offsets = [3, 0], sizes = [1, 32], strides = [1, 1]} : vector<6x32xf32> to vector<1x32xf32>
    %38 = vector.extract_strided_slice %33 {offsets = [4, 0], sizes = [1, 32], strides = [1, 1]} : vector<6x32xf32> to vector<1x32xf32>
    %39 = vector.extract_strided_slice %33 {offsets = [5, 0], sizes = [1, 32], strides = [1, 1]} : vector<6x32xf32> to vector<1x32xf32>
    %c0_15 = arith.constant 0 : index
    %c0_16 = arith.constant 0 : index
    %40 = vector.load %arg4[%c0_15, %c0_16] : memref<32x96xf32, #tpu.memory_space<vmem>>, vector<32x96xf32>
    %cst_17 = arith.constant dense<0.000000e+00> : vector<16x96xf32>
    %41 = tpu.matmul %25, %40, %cst_17 {dimension_numbers = #tpu.dot_dimension_numbers<[1], [0], [0], [1], [0, 0, 1, 1], [], []>} : vector<16x32xf32>, vector<32x96xf32>, vector<16x96xf32> -> vector<16x96xf32>
    %c0_18 = arith.constant 0 : index
    %c0_19 = arith.constant 0 : index
    %42 = vector.load %arg8[%c0_18, %c0_19] : memref<1x96xf32, #tpu.memory_space<vmem>>, vector<1x96xf32>
    %43 = vector.broadcast %42 : vector<1x96xf32> to vector<16x96xf32>
    %44 = arith.addf %41, %43 : vector<16x96xf32>
    %45 = vector.extract_strided_slice %31 {offsets = [0, 0], sizes = [1, 8], strides = [1, 1]} : vector<2x8xf32> to vector<1x8xf32>
    %46 = vector.extract_strided_slice %44 {offsets = [0, 0], sizes = [8, 16], strides = [1, 1]} : vector<16x96xf32> to vector<8x16xf32>
    %47 = vector.extract_strided_slice %44 {offsets = [0, 32], sizes = [8, 16], strides = [1, 1]} : vector<16x96xf32> to vector<8x16xf32>
    %48 = vector.extract_strided_slice %44 {offsets = [0, 64], sizes = [8, 16], strides = [1, 1]} : vector<16x96xf32> to vector<8x16xf32>
    %cst_20 = arith.constant dense<0.000000e+00> : vector<8x8xf32>
    %49 = tpu.matmul %46, %47, %cst_20 {dimension_numbers = #tpu.dot_dimension_numbers<[1], [1], [0], [0], [0, 0, 1, 0], [], []>} : vector<8x16xf32>, vector<8x16xf32>, vector<8x8xf32> -> vector<8x8xf32>
    %cst_21 = arith.constant 2.500000e-01 : f32
    %50 = vector.broadcast %cst_21 : f32 to vector<8x8xf32>
    %51 = arith.mulf %49, %50 : vector<8x8xf32>
    %52 = vector.broadcast %45 : vector<1x8xf32> to vector<8x8xf32>
    %53 = arith.addf %51, %52 : vector<8x8xf32>
    %cst_22 = arith.constant dense<0xFF800000> : vector<8xf32>
    %54 = vector.multi_reduction <maximumf>, %53, %cst_22 [1] : vector<8x8xf32> to vector<8xf32>
    %55 = vector.shape_cast %54 : vector<8xf32> to vector<8x1xf32>
    %56 = vector.broadcast %55 : vector<8x1xf32> to vector<8x8xf32>
    %57 = arith.subf %53, %56 : vector<8x8xf32>
    %58 = math.exp %57 : vector<8x8xf32>
    %cst_23 = arith.constant dense<0.000000e+00> : vector<8xf32>
    %59 = vector.multi_reduction <add>, %58, %cst_23 [1] : vector<8x8xf32> to vector<8xf32>
    %60 = vector.shape_cast %59 : vector<8xf32> to vector<8x1xf32>
    %61 = tpu.reciprocal %60 {approx = true} : vector<8x1xf32> -> vector<8x1xf32>
    %62 = vector.broadcast %61 : vector<8x1xf32> to vector<8x8xf32>
    %63 = arith.mulf %58, %62 : vector<8x8xf32>
    %cst_24 = arith.constant dense<0.000000e+00> : vector<8x16xf32>
    %64 = tpu.matmul %63, %48, %cst_24 {dimension_numbers = #tpu.dot_dimension_numbers<[1], [0], [0], [1], [0, 0, 1, 1], [], []>} : vector<8x8xf32>, vector<8x16xf32>, vector<8x16xf32> -> vector<8x16xf32>
    %65 = vector.extract_strided_slice %32 {offsets = [0, 0], sizes = [16, 32], strides = [1, 1]} : vector<32x32xf32> to vector<16x32xf32>
    %cst_25 = arith.constant dense<0.000000e+00> : vector<8x32xf32>
    %66 = tpu.matmul %64, %65, %cst_25 {dimension_numbers = #tpu.dot_dimension_numbers<[1], [0], [0], [1], [0, 0, 1, 1], [], []>} : vector<8x16xf32>, vector<16x32xf32>, vector<8x32xf32> -> vector<8x32xf32>
    %67 = vector.extract_strided_slice %44 {offsets = [0, 16], sizes = [8, 16], strides = [1, 1]} : vector<16x96xf32> to vector<8x16xf32>
    %68 = vector.extract_strided_slice %44 {offsets = [0, 48], sizes = [8, 16], strides = [1, 1]} : vector<16x96xf32> to vector<8x16xf32>
    %69 = vector.extract_strided_slice %44 {offsets = [0, 80], sizes = [8, 16], strides = [1, 1]} : vector<16x96xf32> to vector<8x16xf32>
    %cst_26 = arith.constant dense<0.000000e+00> : vector<8x8xf32>
    %70 = tpu.matmul %67, %68, %cst_26 {dimension_numbers = #tpu.dot_dimension_numbers<[1], [1], [0], [0], [0, 0, 1, 0], [], []>} : vector<8x16xf32>, vector<8x16xf32>, vector<8x8xf32> -> vector<8x8xf32>
    %cst_27 = arith.constant 2.500000e-01 : f32
    %71 = vector.broadcast %cst_27 : f32 to vector<8x8xf32>
    %72 = arith.mulf %70, %71 : vector<8x8xf32>
    %73 = vector.broadcast %45 : vector<1x8xf32> to vector<8x8xf32>
    %74 = arith.addf %72, %73 : vector<8x8xf32>
    %cst_28 = arith.constant dense<0xFF800000> : vector<8xf32>
    %75 = vector.multi_reduction <maximumf>, %74, %cst_28 [1] : vector<8x8xf32> to vector<8xf32>
    %76 = vector.shape_cast %75 : vector<8xf32> to vector<8x1xf32>
    %77 = vector.broadcast %76 : vector<8x1xf32> to vector<8x8xf32>
    %78 = arith.subf %74, %77 : vector<8x8xf32>
    %79 = math.exp %78 : vector<8x8xf32>
    %cst_29 = arith.constant dense<0.000000e+00> : vector<8xf32>
    %80 = vector.multi_reduction <add>, %79, %cst_29 [1] : vector<8x8xf32> to vector<8xf32>
    %81 = vector.shape_cast %80 : vector<8xf32> to vector<8x1xf32>
    %82 = tpu.reciprocal %81 {approx = true} : vector<8x1xf32> -> vector<8x1xf32>
    %83 = vector.broadcast %82 : vector<8x1xf32> to vector<8x8xf32>
    %84 = arith.mulf %79, %83 : vector<8x8xf32>
    %cst_30 = arith.constant dense<0.000000e+00> : vector<8x16xf32>
    %85 = tpu.matmul %84, %69, %cst_30 {dimension_numbers = #tpu.dot_dimension_numbers<[1], [0], [0], [1], [0, 0, 1, 1], [], []>} : vector<8x8xf32>, vector<8x16xf32>, vector<8x16xf32> -> vector<8x16xf32>
    %86 = vector.extract_strided_slice %32 {offsets = [16, 0], sizes = [16, 32], strides = [1, 1]} : vector<32x32xf32> to vector<16x32xf32>
    %cst_31 = arith.constant dense<0.000000e+00> : vector<8x32xf32>
    %87 = tpu.matmul %85, %86, %cst_31 {dimension_numbers = #tpu.dot_dimension_numbers<[1], [0], [0], [1], [0, 0, 1, 1], [], []>} : vector<8x16xf32>, vector<16x32xf32>, vector<8x32xf32> -> vector<8x32xf32>
    %88 = arith.addf %66, %87 : vector<8x32xf32>
    %89 = vector.extract_strided_slice %31 {offsets = [1, 0], sizes = [1, 8], strides = [1, 1]} : vector<2x8xf32> to vector<1x8xf32>
    %90 = vector.extract_strided_slice %44 {offsets = [8, 0], sizes = [8, 16], strides = [1, 1]} : vector<16x96xf32> to vector<8x16xf32>
    %91 = vector.extract_strided_slice %44 {offsets = [8, 32], sizes = [8, 16], strides = [1, 1]} : vector<16x96xf32> to vector<8x16xf32>
    %92 = vector.extract_strided_slice %44 {offsets = [8, 64], sizes = [8, 16], strides = [1, 1]} : vector<16x96xf32> to vector<8x16xf32>
    %cst_32 = arith.constant dense<0.000000e+00> : vector<8x8xf32>
    %93 = tpu.matmul %90, %91, %cst_32 {dimension_numbers = #tpu.dot_dimension_numbers<[1], [1], [0], [0], [0, 0, 1, 0], [], []>} : vector<8x16xf32>, vector<8x16xf32>, vector<8x8xf32> -> vector<8x8xf32>
    %cst_33 = arith.constant 2.500000e-01 : f32
    %94 = vector.broadcast %cst_33 : f32 to vector<8x8xf32>
    %95 = arith.mulf %93, %94 : vector<8x8xf32>
    %96 = vector.broadcast %89 : vector<1x8xf32> to vector<8x8xf32>
    %97 = arith.addf %95, %96 : vector<8x8xf32>
    %cst_34 = arith.constant dense<0xFF800000> : vector<8xf32>
    %98 = vector.multi_reduction <maximumf>, %97, %cst_34 [1] : vector<8x8xf32> to vector<8xf32>
    %99 = vector.shape_cast %98 : vector<8xf32> to vector<8x1xf32>
    %100 = vector.broadcast %99 : vector<8x1xf32> to vector<8x8xf32>
    %101 = arith.subf %97, %100 : vector<8x8xf32>
    %102 = math.exp %101 : vector<8x8xf32>
    %cst_35 = arith.constant dense<0.000000e+00> : vector<8xf32>
    %103 = vector.multi_reduction <add>, %102, %cst_35 [1] : vector<8x8xf32> to vector<8xf32>
    %104 = vector.shape_cast %103 : vector<8xf32> to vector<8x1xf32>
    %105 = tpu.reciprocal %104 {approx = true} : vector<8x1xf32> -> vector<8x1xf32>
    %106 = vector.broadcast %105 : vector<8x1xf32> to vector<8x8xf32>
    %107 = arith.mulf %102, %106 : vector<8x8xf32>
    %cst_36 = arith.constant dense<0.000000e+00> : vector<8x16xf32>
    %108 = tpu.matmul %107, %92, %cst_36 {dimension_numbers = #tpu.dot_dimension_numbers<[1], [0], [0], [1], [0, 0, 1, 1], [], []>} : vector<8x8xf32>, vector<8x16xf32>, vector<8x16xf32> -> vector<8x16xf32>
    %109 = vector.extract_strided_slice %32 {offsets = [0, 0], sizes = [16, 32], strides = [1, 1]} : vector<32x32xf32> to vector<16x32xf32>
    %cst_37 = arith.constant dense<0.000000e+00> : vector<8x32xf32>
    %110 = tpu.matmul %108, %109, %cst_37 {dimension_numbers = #tpu.dot_dimension_numbers<[1], [0], [0], [1], [0, 0, 1, 1], [], []>} : vector<8x16xf32>, vector<16x32xf32>, vector<8x32xf32> -> vector<8x32xf32>
    %111 = vector.extract_strided_slice %44 {offsets = [8, 16], sizes = [8, 16], strides = [1, 1]} : vector<16x96xf32> to vector<8x16xf32>
    %112 = vector.extract_strided_slice %44 {offsets = [8, 48], sizes = [8, 16], strides = [1, 1]} : vector<16x96xf32> to vector<8x16xf32>
    %113 = vector.extract_strided_slice %44 {offsets = [8, 80], sizes = [8, 16], strides = [1, 1]} : vector<16x96xf32> to vector<8x16xf32>
    %cst_38 = arith.constant dense<0.000000e+00> : vector<8x8xf32>
    %114 = tpu.matmul %111, %112, %cst_38 {dimension_numbers = #tpu.dot_dimension_numbers<[1], [1], [0], [0], [0, 0, 1, 0], [], []>} : vector<8x16xf32>, vector<8x16xf32>, vector<8x8xf32> -> vector<8x8xf32>
    %cst_39 = arith.constant 2.500000e-01 : f32
    %115 = vector.broadcast %cst_39 : f32 to vector<8x8xf32>
    %116 = arith.mulf %114, %115 : vector<8x8xf32>
    %117 = vector.broadcast %89 : vector<1x8xf32> to vector<8x8xf32>
    %118 = arith.addf %116, %117 : vector<8x8xf32>
    %cst_40 = arith.constant dense<0xFF800000> : vector<8xf32>
    %119 = vector.multi_reduction <maximumf>, %118, %cst_40 [1] : vector<8x8xf32> to vector<8xf32>
    %120 = vector.shape_cast %119 : vector<8xf32> to vector<8x1xf32>
    %121 = vector.broadcast %120 : vector<8x1xf32> to vector<8x8xf32>
    %122 = arith.subf %118, %121 : vector<8x8xf32>
    %123 = math.exp %122 : vector<8x8xf32>
    %cst_41 = arith.constant dense<0.000000e+00> : vector<8xf32>
    %124 = vector.multi_reduction <add>, %123, %cst_41 [1] : vector<8x8xf32> to vector<8xf32>
    %125 = vector.shape_cast %124 : vector<8xf32> to vector<8x1xf32>
    %126 = tpu.reciprocal %125 {approx = true} : vector<8x1xf32> -> vector<8x1xf32>
    %127 = vector.broadcast %126 : vector<8x1xf32> to vector<8x8xf32>
    %128 = arith.mulf %123, %127 : vector<8x8xf32>
    %cst_42 = arith.constant dense<0.000000e+00> : vector<8x16xf32>
    %129 = tpu.matmul %128, %113, %cst_42 {dimension_numbers = #tpu.dot_dimension_numbers<[1], [0], [0], [1], [0, 0, 1, 1], [], []>} : vector<8x8xf32>, vector<8x16xf32>, vector<8x16xf32> -> vector<8x16xf32>
    %130 = vector.extract_strided_slice %32 {offsets = [16, 0], sizes = [16, 32], strides = [1, 1]} : vector<32x32xf32> to vector<16x32xf32>
    %cst_43 = arith.constant dense<0.000000e+00> : vector<8x32xf32>
    %131 = tpu.matmul %129, %130, %cst_43 {dimension_numbers = #tpu.dot_dimension_numbers<[1], [0], [0], [1], [0, 0, 1, 1], [], []>} : vector<8x16xf32>, vector<16x32xf32>, vector<8x32xf32> -> vector<8x32xf32>
    %132 = arith.addf %110, %131 : vector<8x32xf32>
    %133 = tpu.concatenate %88, %132 in 0 : vector<8x32xf32>, vector<8x32xf32> -> vector<16x32xf32>
    %134 = vector.broadcast %34 : vector<1x32xf32> to vector<16x32xf32>
    %135 = arith.addf %133, %134 : vector<16x32xf32>
    %136 = arith.addf %25, %135 : vector<16x32xf32>
    %cst_44 = arith.constant dense<0.000000e+00> : vector<16xf32>
    %137 = vector.multi_reduction <add>, %136, %cst_44 [1] : vector<16x32xf32> to vector<16xf32>
    %138 = vector.shape_cast %137 : vector<16xf32> to vector<16x1xf32>
    %cst_45 = arith.constant 3.200000e+01 : f32
    %139 = vector.broadcast %cst_45 : f32 to vector<16x1xf32>
    %140 = arith.divf %138, %139 : vector<16x1xf32>
    %141 = vector.broadcast %140 : vector<16x1xf32> to vector<16x32xf32>
    %142 = arith.subf %136, %141 : vector<16x32xf32>
    %143 = arith.mulf %142, %142 : vector<16x32xf32>
    %cst_46 = arith.constant dense<0.000000e+00> : vector<16xf32>
    %144 = vector.multi_reduction <add>, %143, %cst_46 [1] : vector<16x32xf32> to vector<16xf32>
    %145 = vector.shape_cast %144 : vector<16xf32> to vector<16x1xf32>
    %cst_47 = arith.constant 3.200000e+01 : f32
    %146 = vector.broadcast %cst_47 : f32 to vector<16x1xf32>
    %147 = arith.divf %145, %146 : vector<16x1xf32>
    %148 = vector.broadcast %140 : vector<16x1xf32> to vector<16x32xf32>
    %149 = arith.subf %136, %148 : vector<16x32xf32>
    %cst_48 = arith.constant 9.99999996E-13 : f32
    %150 = vector.broadcast %cst_48 : f32 to vector<16x1xf32>
    %151 = arith.addf %147, %150 : vector<16x1xf32>
    %152 = math.rsqrt %151 : vector<16x1xf32>
    %153 = vector.broadcast %152 : vector<16x1xf32> to vector<16x32xf32>
    %154 = arith.mulf %149, %153 : vector<16x32xf32>
    %155 = vector.broadcast %35 : vector<1x32xf32> to vector<16x32xf32>
    %156 = arith.mulf %154, %155 : vector<16x32xf32>
    %157 = vector.broadcast %36 : vector<1x32xf32> to vector<16x32xf32>
    %158 = arith.addf %156, %157 : vector<16x32xf32>
    %c0_49 = arith.constant 0 : index
    %c0_50 = arith.constant 0 : index
    %159 = vector.load %arg6[%c0_49, %c0_50] : memref<32x64xf32, #tpu.memory_space<vmem>>, vector<32x64xf32>
    %cst_51 = arith.constant dense<0.000000e+00> : vector<16x64xf32>
    %160 = tpu.matmul %158, %159, %cst_51 {dimension_numbers = #tpu.dot_dimension_numbers<[1], [0], [0], [1], [0, 0, 1, 1], [], []>} : vector<16x32xf32>, vector<32x64xf32>, vector<16x64xf32> -> vector<16x64xf32>
    %c0_52 = arith.constant 0 : index
    %c0_53 = arith.constant 0 : index
    %161 = vector.load %arg9[%c0_52, %c0_53] : memref<1x64xf32, #tpu.memory_space<vmem>>, vector<1x64xf32>
    %162 = vector.broadcast %161 : vector<1x64xf32> to vector<16x64xf32>
    %163 = arith.addf %160, %162 : vector<16x64xf32>
    %cst_54 = arith.constant 5.000000e-01 : f32
    %164 = vector.broadcast %cst_54 : f32 to vector<16x64xf32>
    %165 = arith.mulf %164, %163 : vector<16x64xf32>
    %cst_55 = arith.constant 0.707106769 : f32
    %166 = vector.broadcast %cst_55 : f32 to vector<16x64xf32>
    %167 = arith.mulf %163, %166 : vector<16x64xf32>
    %168 = math.absf %167 : vector<16x64xf32>
    %cst_56 = arith.constant 0.327591091 : f32
    %169 = vector.broadcast %cst_56 : f32 to vector<16x64xf32>
    %170 = arith.mulf %169, %168 : vector<16x64xf32>
    %cst_57 = arith.constant 1.000000e+00 : f32
    %171 = vector.broadcast %cst_57 : f32 to vector<16x64xf32>
    %172 = arith.addf %171, %170 : vector<16x64xf32>
    %cst_58 = arith.constant 1.000000e+00 : f32
    %173 = vector.broadcast %cst_58 : f32 to vector<16x64xf32>
    %174 = arith.divf %173, %172 : vector<16x64xf32>
    %cst_59 = arith.constant 1.06140542 : f32
    %175 = vector.broadcast %cst_59 : f32 to vector<16x64xf32>
    %176 = arith.mulf %175, %174 : vector<16x64xf32>
    %cst_60 = arith.constant -1.45315206 : f32
    %177 = vector.broadcast %cst_60 : f32 to vector<16x64xf32>
    %178 = arith.addf %176, %177 : vector<16x64xf32>
    %179 = arith.mulf %178, %174 : vector<16x64xf32>
    %cst_61 = arith.constant 1.42141378 : f32
    %180 = vector.broadcast %cst_61 : f32 to vector<16x64xf32>
    %181 = arith.addf %179, %180 : vector<16x64xf32>
    %182 = arith.mulf %181, %174 : vector<16x64xf32>
    %cst_62 = arith.constant -0.284496725 : f32
    %183 = vector.broadcast %cst_62 : f32 to vector<16x64xf32>
    %184 = arith.addf %182, %183 : vector<16x64xf32>
    %185 = arith.mulf %184, %174 : vector<16x64xf32>
    %cst_63 = arith.constant 0.254829586 : f32
    %186 = vector.broadcast %cst_63 : f32 to vector<16x64xf32>
    %187 = arith.addf %185, %186 : vector<16x64xf32>
    %188 = arith.mulf %187, %174 : vector<16x64xf32>
    %cst_64 = arith.constant 0.000000e+00 : f32
    %189 = vector.broadcast %cst_64 : f32 to vector<16x64xf32>
    %190 = arith.subf %189, %168 : vector<16x64xf32>
    %191 = arith.mulf %190, %168 : vector<16x64xf32>
    %192 = math.exp %191 : vector<16x64xf32>
    %193 = arith.mulf %188, %192 : vector<16x64xf32>
    %cst_65 = arith.constant 1.000000e+00 : f32
    %194 = vector.broadcast %cst_65 : f32 to vector<16x64xf32>
    %195 = arith.subf %194, %193 : vector<16x64xf32>
    %cst_66 = arith.constant 0.000000e+00 : f32
    %196 = vector.broadcast %cst_66 : f32 to vector<16x64xf32>
    %197 = arith.cmpf oge, %167, %196 : vector<16x64xf32>
    %cst_67 = arith.constant 0.000000e+00 : f32
    %198 = vector.broadcast %cst_67 : f32 to vector<16x64xf32>
    %199 = arith.subf %198, %195 : vector<16x64xf32>
    %200 = arith.select %197, %195, %199 : vector<16x64xi1>, vector<16x64xf32>
    %cst_68 = arith.constant 1.000000e+00 : f32
    %201 = vector.broadcast %cst_68 : f32 to vector<16x64xf32>
    %202 = arith.addf %201, %200 : vector<16x64xf32>
    %203 = arith.mulf %165, %202 : vector<16x64xf32>
    %c0_69 = arith.constant 0 : index
    %c0_70 = arith.constant 0 : index
    %204 = vector.load %arg7[%c0_69, %c0_70] : memref<64x32xf32, #tpu.memory_space<vmem>>, vector<64x32xf32>
    %cst_71 = arith.constant dense<0.000000e+00> : vector<16x32xf32>
    %205 = tpu.matmul %203, %204, %cst_71 {dimension_numbers = #tpu.dot_dimension_numbers<[1], [0], [0], [1], [0, 0, 1, 1], [], []>} : vector<16x64xf32>, vector<64x32xf32>, vector<16x32xf32> -> vector<16x32xf32>
    %206 = vector.broadcast %37 : vector<1x32xf32> to vector<16x32xf32>
    %207 = arith.addf %205, %206 : vector<16x32xf32>
    %208 = arith.addf %158, %207 : vector<16x32xf32>
    %cst_72 = arith.constant dense<0.000000e+00> : vector<16xf32>
    %209 = vector.multi_reduction <add>, %208, %cst_72 [1] : vector<16x32xf32> to vector<16xf32>
    %210 = vector.shape_cast %209 : vector<16xf32> to vector<16x1xf32>
    %cst_73 = arith.constant 3.200000e+01 : f32
    %211 = vector.broadcast %cst_73 : f32 to vector<16x1xf32>
    %212 = arith.divf %210, %211 : vector<16x1xf32>
    %213 = vector.broadcast %212 : vector<16x1xf32> to vector<16x32xf32>
    %214 = arith.subf %208, %213 : vector<16x32xf32>
    %215 = arith.mulf %214, %214 : vector<16x32xf32>
    %cst_74 = arith.constant dense<0.000000e+00> : vector<16xf32>
    %216 = vector.multi_reduction <add>, %215, %cst_74 [1] : vector<16x32xf32> to vector<16xf32>
    %217 = vector.shape_cast %216 : vector<16xf32> to vector<16x1xf32>
    %cst_75 = arith.constant 3.200000e+01 : f32
    %218 = vector.broadcast %cst_75 : f32 to vector<16x1xf32>
    %219 = arith.divf %217, %218 : vector<16x1xf32>
    %220 = vector.broadcast %212 : vector<16x1xf32> to vector<16x32xf32>
    %221 = arith.subf %208, %220 : vector<16x32xf32>
    %cst_76 = arith.constant 9.99999996E-13 : f32
    %222 = vector.broadcast %cst_76 : f32 to vector<16x1xf32>
    %223 = arith.addf %219, %222 : vector<16x1xf32>
    %224 = math.rsqrt %223 : vector<16x1xf32>
    %225 = vector.broadcast %224 : vector<16x1xf32> to vector<16x32xf32>
    %226 = arith.mulf %221, %225 : vector<16x32xf32>
    %227 = vector.broadcast %38 : vector<1x32xf32> to vector<16x32xf32>
    %228 = arith.mulf %226, %227 : vector<16x32xf32>
    %229 = vector.broadcast %39 : vector<1x32xf32> to vector<16x32xf32>
    %230 = arith.addf %228, %229 : vector<16x32xf32>
    %c0_77 = arith.constant 0 : index
    %c0_78 = arith.constant 0 : index
    %231 = vector.load %arg12[%c0_77, %c0_78] : memref<32x32xf32, #tpu.memory_space<vmem>>, vector<32x32xf32>
    %c0_79 = arith.constant 0 : index
    %c0_80 = arith.constant 0 : index
    %232 = vector.load %arg17[%c0_79, %c0_80] : memref<6x32xf32, #tpu.memory_space<vmem>>, vector<6x32xf32>
    %233 = vector.extract_strided_slice %232 {offsets = [0, 0], sizes = [1, 32], strides = [1, 1]} : vector<6x32xf32> to vector<1x32xf32>
    %234 = vector.extract_strided_slice %232 {offsets = [1, 0], sizes = [1, 32], strides = [1, 1]} : vector<6x32xf32> to vector<1x32xf32>
    %235 = vector.extract_strided_slice %232 {offsets = [2, 0], sizes = [1, 32], strides = [1, 1]} : vector<6x32xf32> to vector<1x32xf32>
    %236 = vector.extract_strided_slice %232 {offsets = [3, 0], sizes = [1, 32], strides = [1, 1]} : vector<6x32xf32> to vector<1x32xf32>
    %237 = vector.extract_strided_slice %232 {offsets = [4, 0], sizes = [1, 32], strides = [1, 1]} : vector<6x32xf32> to vector<1x32xf32>
    %238 = vector.extract_strided_slice %232 {offsets = [5, 0], sizes = [1, 32], strides = [1, 1]} : vector<6x32xf32> to vector<1x32xf32>
    %c0_81 = arith.constant 0 : index
    %c0_82 = arith.constant 0 : index
    %239 = vector.load %arg11[%c0_81, %c0_82] : memref<32x96xf32, #tpu.memory_space<vmem>>, vector<32x96xf32>
    %cst_83 = arith.constant dense<0.000000e+00> : vector<16x96xf32>
    %240 = tpu.matmul %230, %239, %cst_83 {dimension_numbers = #tpu.dot_dimension_numbers<[1], [0], [0], [1], [0, 0, 1, 1], [], []>} : vector<16x32xf32>, vector<32x96xf32>, vector<16x96xf32> -> vector<16x96xf32>
    %c0_84 = arith.constant 0 : index
    %c0_85 = arith.constant 0 : index
    %241 = vector.load %arg15[%c0_84, %c0_85] : memref<1x96xf32, #tpu.memory_space<vmem>>, vector<1x96xf32>
    %242 = vector.broadcast %241 : vector<1x96xf32> to vector<16x96xf32>
    %243 = arith.addf %240, %242 : vector<16x96xf32>
    %244 = vector.extract_strided_slice %31 {offsets = [0, 0], sizes = [1, 8], strides = [1, 1]} : vector<2x8xf32> to vector<1x8xf32>
    %245 = vector.extract_strided_slice %243 {offsets = [0, 0], sizes = [8, 16], strides = [1, 1]} : vector<16x96xf32> to vector<8x16xf32>
    %246 = vector.extract_strided_slice %243 {offsets = [0, 32], sizes = [8, 16], strides = [1, 1]} : vector<16x96xf32> to vector<8x16xf32>
    %247 = vector.extract_strided_slice %243 {offsets = [0, 64], sizes = [8, 16], strides = [1, 1]} : vector<16x96xf32> to vector<8x16xf32>
    %cst_86 = arith.constant dense<0.000000e+00> : vector<8x8xf32>
    %248 = tpu.matmul %245, %246, %cst_86 {dimension_numbers = #tpu.dot_dimension_numbers<[1], [1], [0], [0], [0, 0, 1, 0], [], []>} : vector<8x16xf32>, vector<8x16xf32>, vector<8x8xf32> -> vector<8x8xf32>
    %cst_87 = arith.constant 2.500000e-01 : f32
    %249 = vector.broadcast %cst_87 : f32 to vector<8x8xf32>
    %250 = arith.mulf %248, %249 : vector<8x8xf32>
    %251 = vector.broadcast %244 : vector<1x8xf32> to vector<8x8xf32>
    %252 = arith.addf %250, %251 : vector<8x8xf32>
    %cst_88 = arith.constant dense<0xFF800000> : vector<8xf32>
    %253 = vector.multi_reduction <maximumf>, %252, %cst_88 [1] : vector<8x8xf32> to vector<8xf32>
    %254 = vector.shape_cast %253 : vector<8xf32> to vector<8x1xf32>
    %255 = vector.broadcast %254 : vector<8x1xf32> to vector<8x8xf32>
    %256 = arith.subf %252, %255 : vector<8x8xf32>
    %257 = math.exp %256 : vector<8x8xf32>
    %cst_89 = arith.constant dense<0.000000e+00> : vector<8xf32>
    %258 = vector.multi_reduction <add>, %257, %cst_89 [1] : vector<8x8xf32> to vector<8xf32>
    %259 = vector.shape_cast %258 : vector<8xf32> to vector<8x1xf32>
    %260 = tpu.reciprocal %259 {approx = true} : vector<8x1xf32> -> vector<8x1xf32>
    %261 = vector.broadcast %260 : vector<8x1xf32> to vector<8x8xf32>
    %262 = arith.mulf %257, %261 : vector<8x8xf32>
    %cst_90 = arith.constant dense<0.000000e+00> : vector<8x16xf32>
    %263 = tpu.matmul %262, %247, %cst_90 {dimension_numbers = #tpu.dot_dimension_numbers<[1], [0], [0], [1], [0, 0, 1, 1], [], []>} : vector<8x8xf32>, vector<8x16xf32>, vector<8x16xf32> -> vector<8x16xf32>
    %264 = vector.extract_strided_slice %231 {offsets = [0, 0], sizes = [16, 32], strides = [1, 1]} : vector<32x32xf32> to vector<16x32xf32>
    %cst_91 = arith.constant dense<0.000000e+00> : vector<8x32xf32>
    %265 = tpu.matmul %263, %264, %cst_91 {dimension_numbers = #tpu.dot_dimension_numbers<[1], [0], [0], [1], [0, 0, 1, 1], [], []>} : vector<8x16xf32>, vector<16x32xf32>, vector<8x32xf32> -> vector<8x32xf32>
    %266 = vector.extract_strided_slice %243 {offsets = [0, 16], sizes = [8, 16], strides = [1, 1]} : vector<16x96xf32> to vector<8x16xf32>
    %267 = vector.extract_strided_slice %243 {offsets = [0, 48], sizes = [8, 16], strides = [1, 1]} : vector<16x96xf32> to vector<8x16xf32>
    %268 = vector.extract_strided_slice %243 {offsets = [0, 80], sizes = [8, 16], strides = [1, 1]} : vector<16x96xf32> to vector<8x16xf32>
    %cst_92 = arith.constant dense<0.000000e+00> : vector<8x8xf32>
    %269 = tpu.matmul %266, %267, %cst_92 {dimension_numbers = #tpu.dot_dimension_numbers<[1], [1], [0], [0], [0, 0, 1, 0], [], []>} : vector<8x16xf32>, vector<8x16xf32>, vector<8x8xf32> -> vector<8x8xf32>
    %cst_93 = arith.constant 2.500000e-01 : f32
    %270 = vector.broadcast %cst_93 : f32 to vector<8x8xf32>
    %271 = arith.mulf %269, %270 : vector<8x8xf32>
    %272 = vector.broadcast %244 : vector<1x8xf32> to vector<8x8xf32>
    %273 = arith.addf %271, %272 : vector<8x8xf32>
    %cst_94 = arith.constant dense<0xFF800000> : vector<8xf32>
    %274 = vector.multi_reduction <maximumf>, %273, %cst_94 [1] : vector<8x8xf32> to vector<8xf32>
    %275 = vector.shape_cast %274 : vector<8xf32> to vector<8x1xf32>
    %276 = vector.broadcast %275 : vector<8x1xf32> to vector<8x8xf32>
    %277 = arith.subf %273, %276 : vector<8x8xf32>
    %278 = math.exp %277 : vector<8x8xf32>
    %cst_95 = arith.constant dense<0.000000e+00> : vector<8xf32>
    %279 = vector.multi_reduction <add>, %278, %cst_95 [1] : vector<8x8xf32> to vector<8xf32>
    %280 = vector.shape_cast %279 : vector<8xf32> to vector<8x1xf32>
    %281 = tpu.reciprocal %280 {approx = true} : vector<8x1xf32> -> vector<8x1xf32>
    %282 = vector.broadcast %281 : vector<8x1xf32> to vector<8x8xf32>
    %283 = arith.mulf %278, %282 : vector<8x8xf32>
    %cst_96 = arith.constant dense<0.000000e+00> : vector<8x16xf32>
    %284 = tpu.matmul %283, %268, %cst_96 {dimension_numbers = #tpu.dot_dimension_numbers<[1], [0], [0], [1], [0, 0, 1, 1], [], []>} : vector<8x8xf32>, vector<8x16xf32>, vector<8x16xf32> -> vector<8x16xf32>
    %285 = vector.extract_strided_slice %231 {offsets = [16, 0], sizes = [16, 32], strides = [1, 1]} : vector<32x32xf32> to vector<16x32xf32>
    %cst_97 = arith.constant dense<0.000000e+00> : vector<8x32xf32>
    %286 = tpu.matmul %284, %285, %cst_97 {dimension_numbers = #tpu.dot_dimension_numbers<[1], [0], [0], [1], [0, 0, 1, 1], [], []>} : vector<8x16xf32>, vector<16x32xf32>, vector<8x32xf32> -> vector<8x32xf32>
    %287 = arith.addf %265, %286 : vector<8x32xf32>
    %288 = vector.extract_strided_slice %31 {offsets = [1, 0], sizes = [1, 8], strides = [1, 1]} : vector<2x8xf32> to vector<1x8xf32>
    %289 = vector.extract_strided_slice %243 {offsets = [8, 0], sizes = [8, 16], strides = [1, 1]} : vector<16x96xf32> to vector<8x16xf32>
    %290 = vector.extract_strided_slice %243 {offsets = [8, 32], sizes = [8, 16], strides = [1, 1]} : vector<16x96xf32> to vector<8x16xf32>
    %291 = vector.extract_strided_slice %243 {offsets = [8, 64], sizes = [8, 16], strides = [1, 1]} : vector<16x96xf32> to vector<8x16xf32>
    %cst_98 = arith.constant dense<0.000000e+00> : vector<8x8xf32>
    %292 = tpu.matmul %289, %290, %cst_98 {dimension_numbers = #tpu.dot_dimension_numbers<[1], [1], [0], [0], [0, 0, 1, 0], [], []>} : vector<8x16xf32>, vector<8x16xf32>, vector<8x8xf32> -> vector<8x8xf32>
    %cst_99 = arith.constant 2.500000e-01 : f32
    %293 = vector.broadcast %cst_99 : f32 to vector<8x8xf32>
    %294 = arith.mulf %292, %293 : vector<8x8xf32>
    %295 = vector.broadcast %288 : vector<1x8xf32> to vector<8x8xf32>
    %296 = arith.addf %294, %295 : vector<8x8xf32>
    %cst_100 = arith.constant dense<0xFF800000> : vector<8xf32>
    %297 = vector.multi_reduction <maximumf>, %296, %cst_100 [1] : vector<8x8xf32> to vector<8xf32>
    %298 = vector.shape_cast %297 : vector<8xf32> to vector<8x1xf32>
    %299 = vector.broadcast %298 : vector<8x1xf32> to vector<8x8xf32>
    %300 = arith.subf %296, %299 : vector<8x8xf32>
    %301 = math.exp %300 : vector<8x8xf32>
    %cst_101 = arith.constant dense<0.000000e+00> : vector<8xf32>
    %302 = vector.multi_reduction <add>, %301, %cst_101 [1] : vector<8x8xf32> to vector<8xf32>
    %303 = vector.shape_cast %302 : vector<8xf32> to vector<8x1xf32>
    %304 = tpu.reciprocal %303 {approx = true} : vector<8x1xf32> -> vector<8x1xf32>
    %305 = vector.broadcast %304 : vector<8x1xf32> to vector<8x8xf32>
    %306 = arith.mulf %301, %305 : vector<8x8xf32>
    %cst_102 = arith.constant dense<0.000000e+00> : vector<8x16xf32>
    %307 = tpu.matmul %306, %291, %cst_102 {dimension_numbers = #tpu.dot_dimension_numbers<[1], [0], [0], [1], [0, 0, 1, 1], [], []>} : vector<8x8xf32>, vector<8x16xf32>, vector<8x16xf32> -> vector<8x16xf32>
    %308 = vector.extract_strided_slice %231 {offsets = [0, 0], sizes = [16, 32], strides = [1, 1]} : vector<32x32xf32> to vector<16x32xf32>
    %cst_103 = arith.constant dense<0.000000e+00> : vector<8x32xf32>
    %309 = tpu.matmul %307, %308, %cst_103 {dimension_numbers = #tpu.dot_dimension_numbers<[1], [0], [0], [1], [0, 0, 1, 1], [], []>} : vector<8x16xf32>, vector<16x32xf32>, vector<8x32xf32> -> vector<8x32xf32>
    %310 = vector.extract_strided_slice %243 {offsets = [8, 16], sizes = [8, 16], strides = [1, 1]} : vector<16x96xf32> to vector<8x16xf32>
    %311 = vector.extract_strided_slice %243 {offsets = [8, 48], sizes = [8, 16], strides = [1, 1]} : vector<16x96xf32> to vector<8x16xf32>
    %312 = vector.extract_strided_slice %243 {offsets = [8, 80], sizes = [8, 16], strides = [1, 1]} : vector<16x96xf32> to vector<8x16xf32>
    %cst_104 = arith.constant dense<0.000000e+00> : vector<8x8xf32>
    %313 = tpu.matmul %310, %311, %cst_104 {dimension_numbers = #tpu.dot_dimension_numbers<[1], [1], [0], [0], [0, 0, 1, 0], [], []>} : vector<8x16xf32>, vector<8x16xf32>, vector<8x8xf32> -> vector<8x8xf32>
    %cst_105 = arith.constant 2.500000e-01 : f32
    %314 = vector.broadcast %cst_105 : f32 to vector<8x8xf32>
    %315 = arith.mulf %313, %314 : vector<8x8xf32>
    %316 = vector.broadcast %288 : vector<1x8xf32> to vector<8x8xf32>
    %317 = arith.addf %315, %316 : vector<8x8xf32>
    %cst_106 = arith.constant dense<0xFF800000> : vector<8xf32>
    %318 = vector.multi_reduction <maximumf>, %317, %cst_106 [1] : vector<8x8xf32> to vector<8xf32>
    %319 = vector.shape_cast %318 : vector<8xf32> to vector<8x1xf32>
    %320 = vector.broadcast %319 : vector<8x1xf32> to vector<8x8xf32>
    %321 = arith.subf %317, %320 : vector<8x8xf32>
    %322 = math.exp %321 : vector<8x8xf32>
    %cst_107 = arith.constant dense<0.000000e+00> : vector<8xf32>
    %323 = vector.multi_reduction <add>, %322, %cst_107 [1] : vector<8x8xf32> to vector<8xf32>
    %324 = vector.shape_cast %323 : vector<8xf32> to vector<8x1xf32>
    %325 = tpu.reciprocal %324 {approx = true} : vector<8x1xf32> -> vector<8x1xf32>
    %326 = vector.broadcast %325 : vector<8x1xf32> to vector<8x8xf32>
    %327 = arith.mulf %322, %326 : vector<8x8xf32>
    %cst_108 = arith.constant dense<0.000000e+00> : vector<8x16xf32>
    %328 = tpu.matmul %327, %312, %cst_108 {dimension_numbers = #tpu.dot_dimension_numbers<[1], [0], [0], [1], [0, 0, 1, 1], [], []>} : vector<8x8xf32>, vector<8x16xf32>, vector<8x16xf32> -> vector<8x16xf32>
    %329 = vector.extract_strided_slice %231 {offsets = [16, 0], sizes = [16, 32], strides = [1, 1]} : vector<32x32xf32> to vector<16x32xf32>
    %cst_109 = arith.constant dense<0.000000e+00> : vector<8x32xf32>
    %330 = tpu.matmul %328, %329, %cst_109 {dimension_numbers = #tpu.dot_dimension_numbers<[1], [0], [0], [1], [0, 0, 1, 1], [], []>} : vector<8x16xf32>, vector<16x32xf32>, vector<8x32xf32> -> vector<8x32xf32>
    %331 = arith.addf %309, %330 : vector<8x32xf32>
    %332 = tpu.concatenate %287, %331 in 0 : vector<8x32xf32>, vector<8x32xf32> -> vector<16x32xf32>
    %333 = vector.broadcast %233 : vector<1x32xf32> to vector<16x32xf32>
    %334 = arith.addf %332, %333 : vector<16x32xf32>
    %335 = arith.addf %230, %334 : vector<16x32xf32>
    %cst_110 = arith.constant dense<0.000000e+00> : vector<16xf32>
    %336 = vector.multi_reduction <add>, %335, %cst_110 [1] : vector<16x32xf32> to vector<16xf32>
    %337 = vector.shape_cast %336 : vector<16xf32> to vector<16x1xf32>
    %cst_111 = arith.constant 3.200000e+01 : f32
    %338 = vector.broadcast %cst_111 : f32 to vector<16x1xf32>
    %339 = arith.divf %337, %338 : vector<16x1xf32>
    %340 = vector.broadcast %339 : vector<16x1xf32> to vector<16x32xf32>
    %341 = arith.subf %335, %340 : vector<16x32xf32>
    %342 = arith.mulf %341, %341 : vector<16x32xf32>
    %cst_112 = arith.constant dense<0.000000e+00> : vector<16xf32>
    %343 = vector.multi_reduction <add>, %342, %cst_112 [1] : vector<16x32xf32> to vector<16xf32>
    %344 = vector.shape_cast %343 : vector<16xf32> to vector<16x1xf32>
    %cst_113 = arith.constant 3.200000e+01 : f32
    %345 = vector.broadcast %cst_113 : f32 to vector<16x1xf32>
    %346 = arith.divf %344, %345 : vector<16x1xf32>
    %347 = vector.broadcast %339 : vector<16x1xf32> to vector<16x32xf32>
    %348 = arith.subf %335, %347 : vector<16x32xf32>
    %cst_114 = arith.constant 9.99999996E-13 : f32
    %349 = vector.broadcast %cst_114 : f32 to vector<16x1xf32>
    %350 = arith.addf %346, %349 : vector<16x1xf32>
    %351 = math.rsqrt %350 : vector<16x1xf32>
    %352 = vector.broadcast %351 : vector<16x1xf32> to vector<16x32xf32>
    %353 = arith.mulf %348, %352 : vector<16x32xf32>
    %354 = vector.broadcast %234 : vector<1x32xf32> to vector<16x32xf32>
    %355 = arith.mulf %353, %354 : vector<16x32xf32>
    %356 = vector.broadcast %235 : vector<1x32xf32> to vector<16x32xf32>
    %357 = arith.addf %355, %356 : vector<16x32xf32>
    %c0_115 = arith.constant 0 : index
    %c0_116 = arith.constant 0 : index
    %358 = vector.load %arg13[%c0_115, %c0_116] : memref<32x64xf32, #tpu.memory_space<vmem>>, vector<32x64xf32>
    %cst_117 = arith.constant dense<0.000000e+00> : vector<16x64xf32>
    %359 = tpu.matmul %357, %358, %cst_117 {dimension_numbers = #tpu.dot_dimension_numbers<[1], [0], [0], [1], [0, 0, 1, 1], [], []>} : vector<16x32xf32>, vector<32x64xf32>, vector<16x64xf32> -> vector<16x64xf32>
    %c0_118 = arith.constant 0 : index
    %c0_119 = arith.constant 0 : index
    %360 = vector.load %arg16[%c0_118, %c0_119] : memref<1x64xf32, #tpu.memory_space<vmem>>, vector<1x64xf32>
    %361 = vector.broadcast %360 : vector<1x64xf32> to vector<16x64xf32>
    %362 = arith.addf %359, %361 : vector<16x64xf32>
    %cst_120 = arith.constant 5.000000e-01 : f32
    %363 = vector.broadcast %cst_120 : f32 to vector<16x64xf32>
    %364 = arith.mulf %363, %362 : vector<16x64xf32>
    %cst_121 = arith.constant 0.707106769 : f32
    %365 = vector.broadcast %cst_121 : f32 to vector<16x64xf32>
    %366 = arith.mulf %362, %365 : vector<16x64xf32>
    %367 = math.absf %366 : vector<16x64xf32>
    %cst_122 = arith.constant 0.327591091 : f32
    %368 = vector.broadcast %cst_122 : f32 to vector<16x64xf32>
    %369 = arith.mulf %368, %367 : vector<16x64xf32>
    %cst_123 = arith.constant 1.000000e+00 : f32
    %370 = vector.broadcast %cst_123 : f32 to vector<16x64xf32>
    %371 = arith.addf %370, %369 : vector<16x64xf32>
    %cst_124 = arith.constant 1.000000e+00 : f32
    %372 = vector.broadcast %cst_124 : f32 to vector<16x64xf32>
    %373 = arith.divf %372, %371 : vector<16x64xf32>
    %cst_125 = arith.constant 1.06140542 : f32
    %374 = vector.broadcast %cst_125 : f32 to vector<16x64xf32>
    %375 = arith.mulf %374, %373 : vector<16x64xf32>
    %cst_126 = arith.constant -1.45315206 : f32
    %376 = vector.broadcast %cst_126 : f32 to vector<16x64xf32>
    %377 = arith.addf %375, %376 : vector<16x64xf32>
    %378 = arith.mulf %377, %373 : vector<16x64xf32>
    %cst_127 = arith.constant 1.42141378 : f32
    %379 = vector.broadcast %cst_127 : f32 to vector<16x64xf32>
    %380 = arith.addf %378, %379 : vector<16x64xf32>
    %381 = arith.mulf %380, %373 : vector<16x64xf32>
    %cst_128 = arith.constant -0.284496725 : f32
    %382 = vector.broadcast %cst_128 : f32 to vector<16x64xf32>
    %383 = arith.addf %381, %382 : vector<16x64xf32>
    %384 = arith.mulf %383, %373 : vector<16x64xf32>
    %cst_129 = arith.constant 0.254829586 : f32
    %385 = vector.broadcast %cst_129 : f32 to vector<16x64xf32>
    %386 = arith.addf %384, %385 : vector<16x64xf32>
    %387 = arith.mulf %386, %373 : vector<16x64xf32>
    %cst_130 = arith.constant 0.000000e+00 : f32
    %388 = vector.broadcast %cst_130 : f32 to vector<16x64xf32>
    %389 = arith.subf %388, %367 : vector<16x64xf32>
    %390 = arith.mulf %389, %367 : vector<16x64xf32>
    %391 = math.exp %390 : vector<16x64xf32>
    %392 = arith.mulf %387, %391 : vector<16x64xf32>
    %cst_131 = arith.constant 1.000000e+00 : f32
    %393 = vector.broadcast %cst_131 : f32 to vector<16x64xf32>
    %394 = arith.subf %393, %392 : vector<16x64xf32>
    %cst_132 = arith.constant 0.000000e+00 : f32
    %395 = vector.broadcast %cst_132 : f32 to vector<16x64xf32>
    %396 = arith.cmpf oge, %366, %395 : vector<16x64xf32>
    %cst_133 = arith.constant 0.000000e+00 : f32
    %397 = vector.broadcast %cst_133 : f32 to vector<16x64xf32>
    %398 = arith.subf %397, %394 : vector<16x64xf32>
    %399 = arith.select %396, %394, %398 : vector<16x64xi1>, vector<16x64xf32>
    %cst_134 = arith.constant 1.000000e+00 : f32
    %400 = vector.broadcast %cst_134 : f32 to vector<16x64xf32>
    %401 = arith.addf %400, %399 : vector<16x64xf32>
    %402 = arith.mulf %364, %401 : vector<16x64xf32>
    %c0_135 = arith.constant 0 : index
    %c0_136 = arith.constant 0 : index
    %403 = vector.load %arg14[%c0_135, %c0_136] : memref<64x32xf32, #tpu.memory_space<vmem>>, vector<64x32xf32>
    %cst_137 = arith.constant dense<0.000000e+00> : vector<16x32xf32>
    %404 = tpu.matmul %402, %403, %cst_137 {dimension_numbers = #tpu.dot_dimension_numbers<[1], [0], [0], [1], [0, 0, 1, 1], [], []>} : vector<16x64xf32>, vector<64x32xf32>, vector<16x32xf32> -> vector<16x32xf32>
    %405 = vector.broadcast %236 : vector<1x32xf32> to vector<16x32xf32>
    %406 = arith.addf %404, %405 : vector<16x32xf32>
    %407 = arith.addf %357, %406 : vector<16x32xf32>
    %cst_138 = arith.constant dense<0.000000e+00> : vector<16xf32>
    %408 = vector.multi_reduction <add>, %407, %cst_138 [1] : vector<16x32xf32> to vector<16xf32>
    %409 = vector.shape_cast %408 : vector<16xf32> to vector<16x1xf32>
    %cst_139 = arith.constant 3.200000e+01 : f32
    %410 = vector.broadcast %cst_139 : f32 to vector<16x1xf32>
    %411 = arith.divf %409, %410 : vector<16x1xf32>
    %412 = vector.broadcast %411 : vector<16x1xf32> to vector<16x32xf32>
    %413 = arith.subf %407, %412 : vector<16x32xf32>
    %414 = arith.mulf %413, %413 : vector<16x32xf32>
    %cst_140 = arith.constant dense<0.000000e+00> : vector<16xf32>
    %415 = vector.multi_reduction <add>, %414, %cst_140 [1] : vector<16x32xf32> to vector<16xf32>
    %416 = vector.shape_cast %415 : vector<16xf32> to vector<16x1xf32>
    %cst_141 = arith.constant 3.200000e+01 : f32
    %417 = vector.broadcast %cst_141 : f32 to vector<16x1xf32>
    %418 = arith.divf %416, %417 : vector<16x1xf32>
    %419 = vector.broadcast %411 : vector<16x1xf32> to vector<16x32xf32>
    %420 = arith.subf %407, %419 : vector<16x32xf32>
    %cst_142 = arith.constant 9.99999996E-13 : f32
    %421 = vector.broadcast %cst_142 : f32 to vector<16x1xf32>
    %422 = arith.addf %418, %421 : vector<16x1xf32>
    %423 = math.rsqrt %422 : vector<16x1xf32>
    %424 = vector.broadcast %423 : vector<16x1xf32> to vector<16x32xf32>
    %425 = arith.mulf %420, %424 : vector<16x32xf32>
    %426 = vector.broadcast %237 : vector<1x32xf32> to vector<16x32xf32>
    %427 = arith.mulf %425, %426 : vector<16x32xf32>
    %428 = vector.broadcast %238 : vector<1x32xf32> to vector<16x32xf32>
    %429 = arith.addf %427, %428 : vector<16x32xf32>
    %430 = vector.extract_strided_slice %429 {offsets = [0, 0], sizes = [1, 32], strides = [1, 1]} : vector<16x32xf32> to vector<1x32xf32>
    %431 = vector.extract_strided_slice %429 {offsets = [8, 0], sizes = [1, 32], strides = [1, 1]} : vector<16x32xf32> to vector<1x32xf32>
    %432 = tpu.concatenate %430, %431 in 0 : vector<1x32xf32>, vector<1x32xf32> -> vector<2x32xf32>
    %c0_143 = arith.constant 0 : index
    %c0_144 = arith.constant 0 : index
    %433 = vector.load %arg19[%c0_143, %c0_144] : memref<2x32xf32, #tpu.memory_space<vmem>>, vector<2x32xf32>
    %c0_145 = arith.constant 0 : index
    %c0_146 = arith.constant 0 : index
    %434 = vector.load %arg18[%c0_145, %c0_146] : memref<32x32xf32, #tpu.memory_space<vmem>>, vector<32x32xf32>
    %cst_147 = arith.constant dense<0.000000e+00> : vector<2x32xf32>
    %435 = tpu.matmul %432, %434, %cst_147 {dimension_numbers = #tpu.dot_dimension_numbers<[1], [0], [0], [1], [0, 0, 1, 1], [], []>} : vector<2x32xf32>, vector<32x32xf32>, vector<2x32xf32> -> vector<2x32xf32>
    %436 = vector.extract_strided_slice %433 {offsets = [0, 0], sizes = [1, 32], strides = [1, 1]} : vector<2x32xf32> to vector<1x32xf32>
    %437 = vector.broadcast %436 : vector<1x32xf32> to vector<2x32xf32>
    %438 = arith.addf %435, %437 : vector<2x32xf32>
    %439 = math.tanh %438 : vector<2x32xf32>
    %440 = vector.extract_strided_slice %433 {offsets = [1, 0], sizes = [1, 32], strides = [1, 1]} : vector<2x32xf32> to vector<1x32xf32>
    %441 = vector.broadcast %440 : vector<1x32xf32> to vector<2x32xf32>
    %442 = arith.mulf %439, %441 : vector<2x32xf32>
    %cst_148 = arith.constant dense<0.000000e+00> : vector<2xf32>
    %443 = vector.multi_reduction <add>, %442, %cst_148 [1] : vector<2x32xf32> to vector<2xf32>
    %444 = vector.shape_cast %443 : vector<2xf32> to vector<2x1xf32>
    %c0_149 = arith.constant 0 : index
    %c0_150 = arith.constant 0 : index
    %445 = vector.load %arg20[%c0_149, %c0_150] : memref<1x1xf32, #tpu.memory_space<vmem>>, vector<1x1xf32>
    %446 = vector.broadcast %445 : vector<1x1xf32> to vector<2x1xf32>
    %447 = arith.addf %444, %446 : vector<2x1xf32>
    %448 = arith.negf %447 : vector<2x1xf32>
    %449 = math.exp %448 : vector<2x1xf32>
    %cst_151 = arith.constant 1.000000e+00 : f32
    %450 = vector.broadcast %cst_151 : f32 to vector<2x1xf32>
    %451 = arith.addf %450, %449 : vector<2x1xf32>
    %452 = arith.divf %450, %451 : vector<2x1xf32>
    %c0_152 = arith.constant 0 : index
    %c0_153 = arith.constant 0 : index
    %453 = vector.load %arg2[%c0_152, %c0_153] : memref<2x1xf32, #tpu.memory_space<vmem>>, vector<2x1xf32>
    %454 = math.log %452 : vector<2x1xf32>
    %cst_154 = arith.constant -1.000000e+02 : f32
    %455 = vector.broadcast %cst_154 : f32 to vector<2x1xf32>
    %456 = arith.maximumf %454, %455 : vector<2x1xf32>
    %cst_155 = arith.constant 1.000000e+00 : f32
    %457 = vector.broadcast %cst_155 : f32 to vector<2x1xf32>
    %458 = arith.subf %457, %452 : vector<2x1xf32>
    %459 = math.log %458 : vector<2x1xf32>
    %cst_156 = arith.constant -1.000000e+02 : f32
    %460 = vector.broadcast %cst_156 : f32 to vector<2x1xf32>
    %461 = arith.maximumf %459, %460 : vector<2x1xf32>
    %462 = arith.mulf %453, %456 : vector<2x1xf32>
    %cst_157 = arith.constant 1.000000e+00 : f32
    %463 = vector.broadcast %cst_157 : f32 to vector<2x1xf32>
    %464 = arith.subf %463, %453 : vector<2x1xf32>
    %465 = arith.mulf %464, %461 : vector<2x1xf32>
    %466 = arith.addf %462, %465 : vector<2x1xf32>
    %cst_158 = arith.constant 0.000000e+00 : f32
    %467 = vector.broadcast %cst_158 : f32 to vector<2x1xf32>
    %468 = arith.subf %467, %466 : vector<2x1xf32>
    %c0_159 = arith.constant 0 : index
    %c0_160 = arith.constant 0 : index
    %469 = vector.load %arg21[%c0_159, %c0_160] : memref<2x1xf32, #tpu.memory_space<vmem>>, vector<2x1xf32>
    tpu.vector_store %arg21[%c0_159, %c0_160], %468 {strides = array<i32>} : memref<2x1xf32, #tpu.memory_space<vmem>>, vector<2x1xf32>,
    return
  }
}

</mosaic_0001>

<llo_original>
// kernel: bert_binary_classification_loss.1
$region0: #{bert_binary_classification_loss.1}
  #allocation0 [shape = 'u32[]', space=smem, size = 0x4, offset = 0x4, fixed_abs, tag = 'smem constant byte address 0x4 - core index']
  #allocation1 [shape = 'u32[144,128]{1,0:T(1,128)}', space=vmem, size = 0x12000, scoped, tag = 'internal scratch']
  #allocation2 [shape = 'f32[1,1]{1,0:T(1,128)S(1)}', space=vmem, size = 0x200, scoped, tag = 'scoped memory for bert_binary_classification_loss.1']
  %s0 = inlined_call_operand.vmem [shape: f32[16,32], index: 0, kind: input, shape index: {}]
  %s1 = inlined_call_operand.vmem [shape: s32[2,8], index: 1, kind: input, shape index: {}]
  %s2 = inlined_call_operand.vmem [shape: f32[2,1], index: 2, kind: input, shape index: {}]
  %s3 = inlined_call_operand.vmem [shape: f32[2,32], index: 3, kind: input, shape index: {}]
  %s4 = inlined_call_operand.vmem [shape: f32[32,96], index: 4, kind: input, shape index: {}]
  %s5 = inlined_call_operand.vmem [shape: f32[32,32], index: 5, kind: input, shape index: {}]
  %s6 = inlined_call_operand.vmem [shape: f32[32,64], index: 6, kind: input, shape index: {}]
  %s7 = inlined_call_operand.vmem [shape: f32[64,32], index: 7, kind: input, shape index: {}]
  %s8 = inlined_call_operand.vmem [shape: f32[1,96], index: 8, kind: input, shape index: {}]
  %s9 = inlined_call_operand.vmem [shape: f32[1,64], index: 9, kind: input, shape index: {}]
  %s10 = inlined_call_operand.vmem [shape: f32[6,32], index: 10, kind: input, shape index: {}]
  %s11 = inlined_call_operand.vmem [shape: f32[32,96], index: 11, kind: input, shape index: {}]
  %s12 = inlined_call_operand.vmem [shape: f32[32,32], index: 12, kind: input, shape index: {}]
  %s13 = inlined_call_operand.vmem [shape: f32[32,64], index: 13, kind: input, shape index: {}]
  %s14 = inlined_call_operand.vmem [shape: f32[64,32], index: 14, kind: input, shape index: {}]
  %s15 = inlined_call_operand.vmem [shape: f32[1,96], index: 15, kind: input, shape index: {}]
  %s16 = inlined_call_operand.vmem [shape: f32[1,64], index: 16, kind: input, shape index: {}]
  %s17 = inlined_call_operand.vmem [shape: f32[6,32], index: 17, kind: input, shape index: {}]
  %s18 = inlined_call_operand.vmem [shape: f32[32,32], index: 18, kind: input, shape index: {}]
  %s19 = inlined_call_operand.vmem [shape: f32[2,32], index: 19, kind: input, shape index: {}]
  %s20 = inlined_call_operand.<no memory space> [shape: f32[1,1], index: 20, kind: input, shape index: {}]
  %s21 = inlined_call_operand.vmem [shape: f32[2,1], index: 21, kind: output, shape index: {}]
  %s22 = sld [smem:[#allocation0]]
  $region94: #{bert_binary_classification_loss.1} parent=0
    _
  %s24 = ssub.s32 1, %s22
  %s25 = scalar_select 0, %s24, %s22
  %v26 = vstv %s20
  %27 = vst [vmem:[#allocation2] sm:$0x1] %v26
  // Predicated region
  $region2: #{bert_binary_classification_loss.1} parent=0 // pred_check
    _
  $region3: #{bert_binary_classification_loss.1} parent=0 // pred_check_branch
    %29 = sbr.rel (0) target = $region5
  $region4: #{bert_binary_classification_loss.1} parent=0 // pred_region
    _
  $region5: #{bert_binary_classification_loss.1} parent=0 // pred_fallthru
    _
  // Predicated region
  $region6: #{bert_binary_classification_loss.1} parent=0 // pred_check
    _
  $region7: #{bert_binary_classification_loss.1} parent=0 // pred_check_branch
    %31 = sbr.rel (0) target = $region9
  $region8: #{bert_binary_classification_loss.1} parent=0 // pred_region
    _
  $region9: #{bert_binary_classification_loss.1} parent=0 // pred_fallthru
    _
  // Predicated region
  $region10: #{bert_binary_classification_loss.1} parent=0 // pred_check
    _
  $region11: #{bert_binary_classification_loss.1} parent=0 // pred_check_branch
    %33 = sbr.rel (0) target = $region13
  $region12: #{bert_binary_classification_loss.1} parent=0 // pred_region
    _
  $region13: #{bert_binary_classification_loss.1} parent=0 // pred_fallthru
    _
  // Predicated region
  $region14: #{bert_binary_classification_loss.1} parent=0 // pred_check
    _
  $region15: #{bert_binary_classification_loss.1} parent=0 // pred_check_branch
    %35 = sbr.rel (0) target = $region17
  $region16: #{bert_binary_classification_loss.1} parent=0 // pred_region
    _
  $region17: #{bert_binary_classification_loss.1} parent=0 // pred_fallthru
    _
  // Predicated region
  $region18: #{bert_binary_classification_loss.1} parent=0 // pred_check
    _
  $region19: #{bert_binary_classification_loss.1} parent=0 // pred_check_branch
    %37 = sbr.rel (0) target = $region21
  $region20: #{bert_binary_classification_loss.1} parent=0 // pred_region
    _
  $region21: #{bert_binary_classification_loss.1} parent=0 // pred_fallthru
    _
  // Predicated region
  $region22: #{bert_binary_classification_loss.1} parent=0 // pred_check
    _
  $region23: #{bert_binary_classification_loss.1} parent=0 // pred_check_branch
    %39 = sbr.rel (0) target = $region25
  $region24: #{bert_binary_classification_loss.1} parent=0 // pred_region
    _
  $region25: #{bert_binary_classification_loss.1} parent=0 // pred_fallthru
    _
  // Predicated region
  $region26: #{bert_binary_classification_loss.1} parent=0 // pred_check
    _
  $region27: #{bert_binary_classification_loss.1} parent=0 // pred_check_branch
    %41 = sbr.rel (0) target = $region29
  $region28: #{bert_binary_classification_loss.1} parent=0 // pred_region
    _
  $region29: #{bert_binary_classification_loss.1} parent=0 // pred_fallthru
    _
  // Predicated region
  $region30: #{bert_binary_classification_loss.1} parent=0 // pred_check
    _
  $region31: #{bert_binary_classification_loss.1} parent=0 // pred_check_branch
    %43 = sbr.rel (0) target = $region33
  $region32: #{bert_binary_classification_loss.1} parent=0 // pred_region
    _
  $region33: #{bert_binary_classification_loss.1} parent=0 // pred_fallthru
    _
  // Predicated region
  $region34: #{bert_binary_classification_loss.1} parent=0 // pred_check
    _
  $region35: #{bert_binary_classification_loss.1} parent=0 // pred_check_branch
    %45 = sbr.rel (0) target = $region37
  $region36: #{bert_binary_classification_loss.1} parent=0 // pred_region
    _
  $region37: #{bert_binary_classification_loss.1} parent=0 // pred_fallthru
    _
  // Predicated region
  $region38: #{bert_binary_classification_loss.1} parent=0 // pred_check
    _
  $region39: #{bert_binary_classification_loss.1} parent=0 // pred_check_branch
    %47 = sbr.rel (0) target = $region41
  $region40: #{bert_binary_classification_loss.1} parent=0 // pred_region
    _
  $region41: #{bert_binary_classification_loss.1} parent=0 // pred_fallthru
    _
  // Predicated region
  $region42: #{bert_binary_classification_loss.1} parent=0 // pred_check
    _
  $region43: #{bert_binary_classification_loss.1} parent=0 // pred_check_branch
    %49 = sbr.rel (0) target = $region45
  $region44: #{bert_binary_classification_loss.1} parent=0 // pred_region
    _
  $region45: #{bert_binary_classification_loss.1} parent=0 // pred_fallthru
    _
  // Predicated region
  $region46: #{bert_binary_classification_loss.1} parent=0 // pred_check
    _
  $region47: #{bert_binary_classification_loss.1} parent=0 // pred_check_branch
    %51 = sbr.rel (0) target = $region49
  $region48: #{bert_binary_classification_loss.1} parent=0 // pred_region
    _
  $region49: #{bert_binary_classification_loss.1} parent=0 // pred_fallthru
    _
  // Predicated region
  $region50: #{bert_binary_classification_loss.1} parent=0 // pred_check
    _
  $region51: #{bert_binary_classification_loss.1} parent=0 // pred_check_branch
    %53 = sbr.rel (0) target = $region53
  $region52: #{bert_binary_classification_loss.1} parent=0 // pred_region
    _
  $region53: #{bert_binary_classification_loss.1} parent=0 // pred_fallthru
    _
  // Predicated region
  $region54: #{bert_binary_classification_loss.1} parent=0 // pred_check
    _
  $region55: #{bert_binary_classification_loss.1} parent=0 // pred_check_branch
    %55 = sbr.rel (0) target = $region57
  $region56: #{bert_binary_classification_loss.1} parent=0 // pred_region
    _
  $region57: #{bert_binary_classification_loss.1} parent=0 // pred_fallthru
    _
  // Predicated region
  $region58: #{bert_binary_classification_loss.1} parent=0 // pred_check
    _
  $region59: #{bert_binary_classification_loss.1} parent=0 // pred_check_branch
    %57 = sbr.rel (0) target = $region61
  $region60: #{bert_binary_classification_loss.1} parent=0 // pred_region
    _
  $region61: #{bert_binary_classification_loss.1} parent=0 // pred_fallthru
    _
  // Predicated region
  $region62: #{bert_binary_classification_loss.1} parent=0 // pred_check
    _
  $region63: #{bert_binary_classification_loss.1} parent=0 // pred_check_branch
    %59 = sbr.rel (0) target = $region65
  $region64: #{bert_binary_classification_loss.1} parent=0 // pred_region
    _
  $region65: #{bert_binary_classification_loss.1} parent=0 // pred_fallthru
    _
  // Predicated region
  $region66: #{bert_binary_classification_loss.1} parent=0 // pred_check
    _
  $region67: #{bert_binary_classification_loss.1} parent=0 // pred_check_branch
    %61 = sbr.rel (0) target = $region69
  $region68: #{bert_binary_classification_loss.1} parent=0 // pred_region
    _
  $region69: #{bert_binary_classification_loss.1} parent=0 // pred_fallthru
    _
  // Predicated region
  $region70: #{bert_binary_classification_loss.1} parent=0 // pred_check
    _
  $region71: #{bert_binary_classification_loss.1} parent=0 // pred_check_branch
    %63 = sbr.rel (0) target = $region73
  $region72: #{bert_binary_classification_loss.1} parent=0 // pred_region
    _
  $region73: #{bert_binary_classification_loss.1} parent=0 // pred_fallthru
    _
  // Predicated region
  $region74: #{bert_binary_classification_loss.1} parent=0 // pred_check
    _
  $region75: #{bert_binary_classification_loss.1} parent=0 // pred_check_branch
    %65 = sbr.rel (0) target = $region77
  $region76: #{bert_binary_classification_loss.1} parent=0 // pred_region
    _
  $region77: #{bert_binary_classification_loss.1} parent=0 // pred_fallthru
    _
  // Predicated region
  $region78: #{bert_binary_classification_loss.1} parent=0 // pred_check
    _
  $region79: #{bert_binary_classification_loss.1} parent=0 // pred_check_branch
    %67 = sbr.rel (0) target = $region81
  $region80: #{bert_binary_classification_loss.1} parent=0 // pred_region
    _
  $region81: #{bert_binary_classification_loss.1} parent=0 // pred_fallthru
    _
  // Predicated region
  $region82: #{bert_binary_classification_loss.1} parent=0 // pred_check
    _
  $region83: #{bert_binary_classification_loss.1} parent=0 // pred_check_branch
    %69 = sbr.rel (0) target = $region85
  $region84: #{bert_binary_classification_loss.1} parent=0 // pred_region
    _
  $region85: #{bert_binary_classification_loss.1} parent=0 // pred_fallthru
    _
  %v70 = vld [vmem:[%s3] sm:$0x3]
  %v71 = vld [vmem:[%s0] sm:$0xff]
  %v72 = vld [vmem:[%s0 + $0x8] sm:$0xff]
  %vm73 = vcmask 261120
  %v74 = vsel %vm73, %v71, 0.0
  %75 = vadd.xlane.f32.xlu0 %v74
  %v76 = vpop.xlane.xlu0 %75
  %v77 = vsel %vm73, %v72, 0.0
  %78 = vadd.xlane.f32.xlu0 %v77
  %v79 = vpop.xlane.xlu0 %78
  %v80 = vrcp.pop 32.0
  %v81 = vmul.f32 %v76, %v80
  %v82 = vmul.f32 %v79, %v80
  %v83 = vsub.f32 %v71, %v81
  %v84 = vsub.f32 %v72, %v82
  %v85 = vmul.f32 %v83, %v83
  %v86 = vmul.f32 %v84, %v84
  %v87 = vsel %vm73, %v85, 0.0
  %88 = vadd.xlane.f32.xlu0 %v87
  %v89 = vpop.xlane.xlu0 %88
  %v90 = vsel %vm73, %v86, 0.0
  %91 = vadd.xlane.f32.xlu0 %v90
  %v92 = vpop.xlane.xlu0 %91
  %v93 = vmul.f32 %v89, %v80
  %v94 = vmul.f32 %v92, %v80
  %v95 = vadd.f32 %v93, 1e-12
  %v96 = vadd.f32 %v94, 1e-12
  %v97 = vrsqrt.pop %v95
  %v98 = vrsqrt.pop %v96
  %v99 = vmul.f32 %v83, %v97
  %v100 = vmul.f32 %v84, %v98
  %v101 = vlaneseq
  %v102 = vshrl.u32 %v101, 7
  %v103 = vsub.s32 0, %v102
  %v104 = vrot.slane %v70, %v103
  %v105 = vmul.f32 %v99, %v104
  %v106 = vmul.f32 %v100, %v104
  %v107 = vlaneseq
  %v108 = vshrl.u32 %v107, 7
  %v109 = vsub.s32 1, %v108
  %v110 = vrot.slane %v70, %v109
  %v111 = vadd.f32 %v105, %v110
  %v112 = vadd.f32 %v106, %v110
  %v113 = vld [vmem:[%s1] sm:$0x3]
  %v114 = vcvt.s32.f32 %v113
  %v115 = vsub.f32 1.0, %v114
  %v116 = vmul.f32 %v115, -10000.0
  %v117 = vld [vmem:[%s5] sm:$0xff]
  %v118 = vld [vmem:[%s5 + $0x8] sm:$0xff]
  %v119 = vld [vmem:[%s5 + $0x10] sm:$0xff]
  %v120 = vld [vmem:[%s5 + $0x18] sm:$0xff]
  %v121 = vld [vmem:[%s10] sm:$0x3f]
  %v122 = vld [vmem:[%s4] sm:$0xff]
  %v123 = vld [vmem:[%s4 + $0x8] sm:$0xff]
  %v124 = vld [vmem:[%s4 + $0x10] sm:$0xff]
  %v125 = vld [vmem:[%s4 + $0x18] sm:$0xff]
  %v126 = vld [vmem:[%s8] sm:$0x1]
  %v128 = vlaneseq
  %v129 = vshrl.u32 %v128, 7
  %v130 = vsub.s32 0, %v129
  %v131 = vrot.slane %v126, %v130
  %v134 = vsel %vm73, %v111, 0
  %v137 = vsel %vm73, %v112, 0
  %139 = vmatprep.subr.mxu0 0.0
  %140 = vmatpush1.msra.mxu0 %v122
  %141 = vmatprep.subr.mxu0 0.0
  %142 = vmatpush1.msra.mxu0 %v123
  %143 = vmatprep.subr.mxu0 0.0
  %144 = vmatpush1.msra.mxu0 %v124
  %145 = vmatprep.subr.mxu0 0.0
  %146 = vmatpush1.msra.mxu0 %v125
  %147 = vmatprep.subr.mxu0 0.0
  %148 = vmatpush1.msra.mxu0 0.0
  %149 = vmatprep.subr.mxu0 0.0
  %150 = vmatpush1.msra.mxu0 0.0
  %151 = vmatprep.subr.mxu0 0.0
  %152 = vmatpush1.msra.mxu0 0.0
  %153 = vmatprep.subr.mxu0 0.0
  %154 = vmatpush1.msra.mxu0 0.0
  %155 = vmatprep.subr.mxu0 0.0
  %156 = vmatpush1.msra.mxu0 0.0
  %157 = vmatprep.subr.mxu0 0.0
  %158 = vmatpush1.msra.mxu0 0.0
  %159 = vmatprep.subr.mxu0 0.0
  %160 = vmatpush1.msra.mxu0 0.0
  %161 = vmatprep.subr.mxu0 0.0
  %162 = vmatpush1.msra.mxu0 0.0
  %163 = vmatprep.subr.mxu0 0.0
  %164 = vmatpush1.msra.mxu0 0.0
  %165 = vmatprep.subr.mxu0 0.0
  %166 = vmatpush1.msra.mxu0 0.0
  %167 = vmatprep.subr.mxu0 0.0
  %168 = vmatpush1.msra.mxu0 0.0
  %169 = vmatprep.subr.mxu0 0.0
  %170 = vmatpush1.msra.mxu0 0.0
  %171 = vmatprep.subr.mxu0 0.0
  %172 = vmatpush1.msra.mxu0 0.0
  %173 = vmatprep.subr.mxu0 0.0
  %174 = vmatpush1.msra.mxu0 0.0
  %175 = vmatprep.subr.mxu0 0.0
  %176 = vmatpush1.msra.mxu0 0.0
  %177 = vmatprep.subr.mxu0 0.0
  %178 = vmatpush1.msra.mxu0 0.0
  %179 = vmatprep.subr.mxu0 0.0
  %180 = vmatpush1.msra.mxu0 0.0
  %181 = vmatprep.subr.mxu0 0.0
  %182 = vmatpush1.msra.mxu0 0.0
  %183 = vmatprep.subr.mxu0 0.0
  %184 = vmatpush1.msra.mxu0 0.0
  %185 = vmatprep.subr.mxu0 0.0
  %186 = vmatpush1.msra.mxu0 0.0
  %187 = vmatprep.subr.mxu0 0.0
  %188 = vmatpush1.msra.mxu0 0.0
  %189 = vmatprep.subr.mxu0 0.0
  %190 = vmatpush1.msra.mxu0 0.0
  %191 = vmatprep.subr.mxu0 0.0
  %192 = vmatpush1.msra.mxu0 0.0
  %193 = vmatprep.subr.mxu0 0.0
  %194 = vmatpush1.msra.mxu0 0.0
  %195 = vmatprep.subr.mxu0 0.0
  %196 = vmatpush1.msra.mxu0 0.0
  %197 = vmatprep.subr.mxu0 0.0
  %198 = vmatpush1.msra.mxu0 0.0
  %199 = vmatprep.subr.mxu0 0.0
  %200 = vmatpush1.msra.mxu0 0.0
  %201 = vmatprep.subr.mxu0 0.0
  %202 = vmatpush1.msra.mxu0 0.0
  %203 = vmatprep.mubr.f32.mxu0 0.0
  %204 = vmatmul.mubr.f32.gmra.mrb[0].mxu0 %v134
  %v205 = vpop.f32.mrb[0].mxu0
  %v206 = vadd.f32 %v131, %v205
  %v207 = vpop.f32.mrb[0].mxu0
  %208 = vmatprep.mubr.f32.mxu0 0.0
  %209 = vmatmul.mubr.f32.gmra.mrb[0].mxu0 %v137
  %v210 = vpop.f32.mrb[0].mxu0
  %v211 = vadd.f32 %v131, %v210
  %v212 = vpop.f32.mrb[0].mxu0
  %213 = vdwg.mxu0
  %215 = vrot.lane.b32.xlu0 %v206, 96
  %v216 = vpop.permute.xlu0 %215
  %vm217 = vcmask 130048
  %v218 = vsel %vm217, %v206, 0
  %v220 = vsel %vm217, %v216, 0
  %222 = vmatprep.subr.mxu0 0.0
  %223 = vmatpush1.xpose.msra.mxu0 %v220
  %224 = vmatprep.subr.mxu0 0.0
  %225 = vmatpush1.xpose.msra.mxu0 0.0
  %226 = vmatprep.subr.mxu0 0.0
  %227 = vmatpush1.xpose.msra.mxu0 0.0
  %228 = vmatprep.subr.mxu0 0.0
  %229 = vmatpush1.xpose.msra.mxu0 0.0
  %230 = vmatprep.subr.mxu0 0.0
  %231 = vmatpush1.xpose.msra.mxu0 0.0
  %232 = vmatprep.subr.mxu0 0.0
  %233 = vmatpush1.xpose.msra.mxu0 0.0
  %234 = vmatprep.subr.mxu0 0.0
  %235 = vmatpush1.xpose.msra.mxu0 0.0
  %236 = vmatprep.subr.mxu0 0.0
  %237 = vmatpush1.xpose.msra.mxu0 0.0
  %238 = vmatprep.subr.mxu0 0.0
  %239 = vmatpush1.xpose.msra.mxu0 0.0
  %240 = vmatprep.subr.mxu0 0.0
  %241 = vmatpush1.xpose.msra.mxu0 0.0
  %242 = vmatprep.subr.mxu0 0.0
  %243 = vmatpush1.xpose.msra.mxu0 0.0
  %244 = vmatprep.subr.mxu0 0.0
  %245 = vmatpush1.xpose.msra.mxu0 0.0
  %246 = vmatprep.subr.mxu0 0.0
  %247 = vmatpush1.xpose.msra.mxu0 0.0
  %248 = vmatprep.subr.mxu0 0.0
  %249 = vmatpush1.xpose.msra.mxu0 0.0
  %250 = vmatprep.subr.mxu0 0.0
  %251 = vmatpush1.xpose.msra.mxu0 0.0
  %252 = vmatprep.subr.mxu0 0.0
  %253 = vmatpush1.xpose.msra.mxu0 0.0
  %254 = vmatprep.subr.mxu0 0.0
  %255 = vmatpush1.xpose.msra.mxu0 0.0
  %256 = vmatprep.subr.mxu0 0.0
  %257 = vmatpush1.xpose.msra.mxu0 0.0
  %258 = vmatprep.subr.mxu0 0.0
  %259 = vmatpush1.xpose.msra.mxu0 0.0
  %260 = vmatprep.subr.mxu0 0.0
  %261 = vmatpush1.xpose.msra.mxu0 0.0
  %262 = vmatprep.subr.mxu0 0.0
  %263 = vmatpush1.xpose.msra.mxu0 0.0
  %264 = vmatprep.subr.mxu0 0.0
  %265 = vmatpush1.xpose.msra.mxu0 0.0
  %266 = vmatprep.subr.mxu0 0.0
  %267 = vmatpush1.xpose.msra.mxu0 0.0
  %268 = vmatprep.subr.mxu0 0.0
  %269 = vmatpush1.xpose.msra.mxu0 0.0
  %270 = vmatprep.subr.mxu0 0.0
  %271 = vmatpush1.xpose.msra.mxu0 0.0
  %272 = vmatprep.subr.mxu0 0.0
  %273 = vmatpush1.xpose.msra.mxu0 0.0
  %274 = vmatprep.subr.mxu0 0.0
  %275 = vmatpush1.xpose.msra.mxu0 0.0
  %276 = vmatprep.subr.mxu0 0.0
  %277 = vmatpush1.xpose.msra.mxu0 0.0
  %278 = vmatprep.subr.mxu0 0.0
  %279 = vmatpush1.xpose.msra.mxu0 0.0
  %280 = vmatprep.subr.mxu0 0.0
  %281 = vmatpush1.xpose.msra.mxu0 0.0
  %282 = vmatprep.subr.mxu0 0.0
  %283 = vmatpush1.xpose.msra.mxu0 0.0
  %284 = vmatprep.subr.mxu0 0.0
  %285 = vmatpush1.xpose.msra.mxu0 0.0
  %286 = vmatprep.mubr.f32.mxu0 0.0
  %287 = vmatmul.mubr.f32.gmra.mrb[0].mxu0 %v218
  %v288 = vpop.f32.mrb[0].mxu0
  %v289 = vadd.f32 0.0, %v288
  %v290 = vpop.f32.mrb[0].mxu0
  %291 = vdwg.mxu0
  %v292 = vmul.f32 %v289, 0.25
  %v293 = vlaneseq
  %v294 = vshrl.u32 %v293, 7
  %v295 = vsub.s32 0, %v294
  %v296 = vrot.slane %v116, %v295
  %v297 = vadd.f32 %v292, %v296
  %vm298 = vcmask 64512
  %v299 = vsel %vm298, %v297, -inf
  %300 = vmax.xlane.f32.xlu0 %v299
  %v301 = vpop.xlane.xlu0 %300
  %v302 = vsub.f32 %v297, %v301
  %v303 = vmul.f32 %v302, 1.442695
  %v304 = vpow.pop %v303
  %v305 = vsel %vm298, %v304, 0.0
  %306 = vadd.xlane.f32.xlu0 %v305
  %v307 = vpop.xlane.xlu0 %306
  %v308 = vrcp.pop %v307
  %v309 = vmul.f32 %v304, %v308
  %310 = vrot.lane.b32.xlu0 %v206, 64
  %v311 = vpop.permute.xlu0 %310
  %v314 = vsel %vm298, %v309, 0
  %316 = vmatprep.subr.mxu0 0.0
  %317 = vmatpush1.msra.mxu0 %v311
  %318 = vmatprep.subr.mxu0 0.0
  %319 = vmatpush1.msra.mxu0 0.0
  %320 = vmatprep.subr.mxu0 0.0
  %321 = vmatpush1.msra.mxu0 0.0
  %322 = vmatprep.subr.mxu0 0.0
  %323 = vmatpush1.msra.mxu0 0.0
  %324 = vmatprep.subr.mxu0 0.0
  %325 = vmatpush1.msra.mxu0 0.0
  %326 = vmatprep.subr.mxu0 0.0
  %327 = vmatpush1.msra.mxu0 0.0
  %328 = vmatprep.subr.mxu0 0.0
  %329 = vmatpush1.msra.mxu0 0.0
  %330 = vmatprep.subr.mxu0 0.0
  %331 = vmatpush1.msra.mxu0 0.0
  %332 = vmatprep.subr.mxu0 0.0
  %333 = vmatpush1.msra.mxu0 0.0
  %334 = vmatprep.subr.mxu0 0.0
  %335 = vmatpush1.msra.mxu0 0.0
  %336 = vmatprep.subr.mxu0 0.0
  %337 = vmatpush1.msra.mxu0 0.0
  %338 = vmatprep.subr.mxu0 0.0
  %339 = vmatpush1.msra.mxu0 0.0
  %340 = vmatprep.subr.mxu0 0.0
  %341 = vmatpush1.msra.mxu0 0.0
  %342 = vmatprep.subr.mxu0 0.0
  %343 = vmatpush1.msra.mxu0 0.0
  %344 = vmatprep.subr.mxu0 0.0
  %345 = vmatpush1.msra.mxu0 0.0
  %346 = vmatprep.subr.mxu0 0.0
  %347 = vmatpush1.msra.mxu0 0.0
  %348 = vmatprep.subr.mxu0 0.0
  %349 = vmatpush1.msra.mxu0 0.0
  %350 = vmatprep.subr.mxu0 0.0
  %351 = vmatpush1.msra.mxu0 0.0
  %352 = vmatprep.subr.mxu0 0.0
  %353 = vmatpush1.msra.mxu0 0.0
  %354 = vmatprep.subr.mxu0 0.0
  %355 = vmatpush1.msra.mxu0 0.0
  %356 = vmatprep.subr.mxu0 0.0
  %357 = vmatpush1.msra.mxu0 0.0
  %358 = vmatprep.subr.mxu0 0.0
  %359 = vmatpush1.msra.mxu0 0.0
  %360 = vmatprep.subr.mxu0 0.0
  %361 = vmatpush1.msra.mxu0 0.0
  %362 = vmatprep.subr.mxu0 0.0
  %363 = vmatpush1.msra.mxu0 0.0
  %364 = vmatprep.subr.mxu0 0.0
  %365 = vmatpush1.msra.mxu0 0.0
  %366 = vmatprep.subr.mxu0 0.0
  %367 = vmatpush1.msra.mxu0 0.0
  %368 = vmatprep.subr.mxu0 0.0
  %369 = vmatpush1.msra.mxu0 0.0
  %370 = vmatprep.subr.mxu0 0.0
  %371 = vmatpush1.msra.mxu0 0.0
  %372 = vmatprep.subr.mxu0 0.0
  %373 = vmatpush1.msra.mxu0 0.0
  %374 = vmatprep.subr.mxu0 0.0
  %375 = vmatpush1.msra.mxu0 0.0
  %376 = vmatprep.subr.mxu0 0.0
  %377 = vmatpush1.msra.mxu0 0.0
  %378 = vmatprep.subr.mxu0 0.0
  %379 = vmatpush1.msra.mxu0 0.0
  %380 = vmatprep.mubr.f32.mxu0 0.0
  %381 = vmatmul.mubr.f32.gmra.mrb[0].mxu0 %v314
  %v382 = vpop.f32.mrb[0].mxu0
  %v383 = vadd.f32 0.0, %v382
  %v384 = vpop.f32.mrb[0].mxu0
  %385 = vdwg.mxu0
  %386 = vrot.lane.b32.xlu0 %v206, 112
  %v387 = vpop.permute.xlu0 %386
  %388 = vrot.lane.b32.xlu0 %v206, 80
  %v389 = vpop.permute.xlu0 %388
  %v390 = vsel %vm217, %v387, 0
  %v392 = vsel %vm217, %v389, 0
  %394 = vmatprep.subr.mxu0 0.0
  %395 = vmatpush1.xpose.msra.mxu0 %v392
  %396 = vmatprep.subr.mxu0 0.0
  %397 = vmatpush1.xpose.msra.mxu0 0.0
  %398 = vmatprep.subr.mxu0 0.0
  %399 = vmatpush1.xpose.msra.mxu0 0.0
  %400 = vmatprep.subr.mxu0 0.0
  %401 = vmatpush1.xpose.msra.mxu0 0.0
  %402 = vmatprep.subr.mxu0 0.0
  %403 = vmatpush1.xpose.msra.mxu0 0.0
  %404 = vmatprep.subr.mxu0 0.0
  %405 = vmatpush1.xpose.msra.mxu0 0.0
  %406 = vmatprep.subr.mxu0 0.0
  %407 = vmatpush1.xpose.msra.mxu0 0.0
  %408 = vmatprep.subr.mxu0 0.0
  %409 = vmatpush1.xpose.msra.mxu0 0.0
  %410 = vmatprep.subr.mxu0 0.0
  %411 = vmatpush1.xpose.msra.mxu0 0.0
  %412 = vmatprep.subr.mxu0 0.0
  %413 = vmatpush1.xpose.msra.mxu0 0.0
  %414 = vmatprep.subr.mxu0 0.0
  %415 = vmatpush1.xpose.msra.mxu0 0.0
  %416 = vmatprep.subr.mxu0 0.0
  %417 = vmatpush1.xpose.msra.mxu0 0.0
  %418 = vmatprep.subr.mxu0 0.0
  %419 = vmatpush1.xpose.msra.mxu0 0.0
  %420 = vmatprep.subr.mxu0 0.0
  %421 = vmatpush1.xpose.msra.mxu0 0.0
  %422 = vmatprep.subr.mxu0 0.0
  %423 = vmatpush1.xpose.msra.mxu0 0.0
  %424 = vmatprep.subr.mxu0 0.0
  %425 = vmatpush1.xpose.msra.mxu0 0.0
  %426 = vmatprep.subr.mxu0 0.0
  %427 = vmatpush1.xpose.msra.mxu0 0.0
  %428 = vmatprep.subr.mxu0 0.0
  %429 = vmatpush1.xpose.msra.mxu0 0.0
  %430 = vmatprep.subr.mxu0 0.0
  %431 = vmatpush1.xpose.msra.mxu0 0.0
  %432 = vmatprep.subr.mxu0 0.0
  %433 = vmatpush1.xpose.msra.mxu0 0.0
  %434 = vmatprep.subr.mxu0 0.0
  %435 = vmatpush1.xpose.msra.mxu0 0.0
  %436 = vmatprep.subr.mxu0 0.0
  %437 = vmatpush1.xpose.msra.mxu0 0.0
  %438 = vmatprep.subr.mxu0 0.0
  %439 = vmatpush1.xpose.msra.mxu0 0.0
  %440 = vmatprep.subr.mxu0 0.0
  %441 = vmatpush1.xpose.msra.mxu0 0.0
  %442 = vmatprep.subr.mxu0 0.0
  %443 = vmatpush1.xpose.msra.mxu0 0.0
  %444 = vmatprep.subr.mxu0 0.0
  %445 = vmatpush1.xpose.msra.mxu0 0.0
  %446 = vmatprep.subr.mxu0 0.0
  %447 = vmatpush1.xpose.msra.mxu0 0.0
  %448 = vmatprep.subr.mxu0 0.0
  %449 = vmatpush1.xpose.msra.mxu0 0.0
  %450 = vmatprep.subr.mxu0 0.0
  %451 = vmatpush1.xpose.msra.mxu0 0.0
  %452 = vmatprep.subr.mxu0 0.0
  %453 = vmatpush1.xpose.msra.mxu0 0.0
  %454 = vmatprep.subr.mxu0 0.0
  %455 = vmatpush1.xpose.msra.mxu0 0.0
  %456 = vmatprep.subr.mxu0 0.0
  %457 = vmatpush1.xpose.msra.mxu0 0.0
  %458 = vmatprep.mubr.f32.mxu0 0.0
  %459 = vmatmul.mubr.f32.gmra.mrb[0].mxu0 %v390
  %v460 = vpop.f32.mrb[0].mxu0
  %v461 = vadd.f32 0.0, %v460
  %v462 = vpop.f32.mrb[0].mxu0
  %463 = vdwg.mxu0
  %v464 = vmul.f32 %v461, 0.25
  %v465 = vadd.f32 %v464, %v296
  %v466 = vsel %vm298, %v465, -inf
  %467 = vmax.xlane.f32.xlu0 %v466
  %v468 = vpop.xlane.xlu0 %467
  %v469 = vsub.f32 %v465, %v468
  %v470 = vmul.f32 %v469, 1.442695
  %v471 = vpow.pop %v470
  %v472 = vsel %vm298, %v471, 0.0
  %473 = vadd.xlane.f32.xlu0 %v472
  %v474 = vpop.xlane.xlu0 %473
  %v475 = vrcp.pop %v474
  %v476 = vmul.f32 %v471, %v475
  %477 = vrot.lane.b32.xlu0 %v206, 48
  %v478 = vpop.permute.xlu0 %477
  %v481 = vsel %vm298, %v476, 0
  %483 = vmatprep.subr.mxu0 0.0
  %484 = vmatpush1.msra.mxu0 %v478
  %485 = vmatprep.subr.mxu0 0.0
  %486 = vmatpush1.msra.mxu0 0.0
  %487 = vmatprep.subr.mxu0 0.0
  %488 = vmatpush1.msra.mxu0 0.0
  %489 = vmatprep.subr.mxu0 0.0
  %490 = vmatpush1.msra.mxu0 0.0
  %491 = vmatprep.subr.mxu0 0.0
  %492 = vmatpush1.msra.mxu0 0.0
  %493 = vmatprep.subr.mxu0 0.0
  %494 = vmatpush1.msra.mxu0 0.0
  %495 = vmatprep.subr.mxu0 0.0
  %496 = vmatpush1.msra.mxu0 0.0
  %497 = vmatprep.subr.mxu0 0.0
  %498 = vmatpush1.msra.mxu0 0.0
  %499 = vmatprep.subr.mxu0 0.0
  %500 = vmatpush1.msra.mxu0 0.0
  %501 = vmatprep.subr.mxu0 0.0
  %502 = vmatpush1.msra.mxu0 0.0
  %503 = vmatprep.subr.mxu0 0.0
  %504 = vmatpush1.msra.mxu0 0.0
  %505 = vmatprep.subr.mxu0 0.0
  %506 = vmatpush1.msra.mxu0 0.0
  %507 = vmatprep.subr.mxu0 0.0
  %508 = vmatpush1.msra.mxu0 0.0
  %509 = vmatprep.subr.mxu0 0.0
  %510 = vmatpush1.msra.mxu0 0.0
  %511 = vmatprep.subr.mxu0 0.0
  %512 = vmatpush1.msra.mxu0 0.0
  %513 = vmatprep.subr.mxu0 0.0
  %514 = vmatpush1.msra.mxu0 0.0
  %515 = vmatprep.subr.mxu0 0.0
  %516 = vmatpush1.msra.mxu0 0.0
  %517 = vmatprep.subr.mxu0 0.0
  %518 = vmatpush1.msra.mxu0 0.0
  %519 = vmatprep.subr.mxu0 0.0
  %520 = vmatpush1.msra.mxu0 0.0
  %521 = vmatprep.subr.mxu0 0.0
  %522 = vmatpush1.msra.mxu0 0.0
  %523 = vmatprep.subr.mxu0 0.0
  %524 = vmatpush1.msra.mxu0 0.0
  %525 = vmatprep.subr.mxu0 0.0
  %526 = vmatpush1.msra.mxu0 0.0
  %527 = vmatprep.subr.mxu0 0.0
  %528 = vmatpush1.msra.mxu0 0.0
  %529 = vmatprep.subr.mxu0 0.0
  %530 = vmatpush1.msra.mxu0 0.0
  %531 = vmatprep.subr.mxu0 0.0
  %532 = vmatpush1.msra.mxu0 0.0
  %533 = vmatprep.subr.mxu0 0.0
  %534 = vmatpush1.msra.mxu0 0.0
  %535 = vmatprep.subr.mxu0 0.0
  %536 = vmatpush1.msra.mxu0 0.0
  %537 = vmatprep.subr.mxu0 0.0
  %538 = vmatpush1.msra.mxu0 0.0
  %539 = vmatprep.subr.mxu0 0.0
  %540 = vmatpush1.msra.mxu0 0.0
  %541 = vmatprep.subr.mxu0 0.0
  %542 = vmatpush1.msra.mxu0 0.0
  %543 = vmatprep.subr.mxu0 0.0
  %544 = vmatpush1.msra.mxu0 0.0
  %545 = vmatprep.subr.mxu0 0.0
  %546 = vmatpush1.msra.mxu0 0.0
  %547 = vmatprep.mubr.f32.mxu0 0.0
  %548 = vmatmul.mubr.f32.gmra.mrb[0].mxu0 %v481
  %v549 = vpop.f32.mrb[0].mxu0
  %v550 = vadd.f32 0.0, %v549
  %v551 = vpop.f32.mrb[0].mxu0
  %552 = vdwg.mxu0
  %v554 = vsel %vm217, %v550, 0
  %556 = vmatprep.subr.mxu0 0.0
  %557 = vmatpush1.msra.mxu0 %v119
  %558 = vmatprep.subr.mxu0 0.0
  %559 = vmatpush1.msra.mxu0 %v120
  %560 = vmatprep.subr.mxu0 0.0
  %561 = vmatpush1.msra.mxu0 0.0
  %562 = vmatprep.subr.mxu0 0.0
  %563 = vmatpush1.msra.mxu0 0.0
  %564 = vmatprep.subr.mxu0 0.0
  %565 = vmatpush1.msra.mxu0 0.0
  %566 = vmatprep.subr.mxu0 0.0
  %567 = vmatpush1.msra.mxu0 0.0
  %568 = vmatprep.subr.mxu0 0.0
  %569 = vmatpush1.msra.mxu0 0.0
  %570 = vmatprep.subr.mxu0 0.0
  %571 = vmatpush1.msra.mxu0 0.0
  %572 = vmatprep.subr.mxu0 0.0
  %573 = vmatpush1.msra.mxu0 0.0
  %574 = vmatprep.subr.mxu0 0.0
  %575 = vmatpush1.msra.mxu0 0.0
  %576 = vmatprep.subr.mxu0 0.0
  %577 = vmatpush1.msra.mxu0 0.0
  %578 = vmatprep.subr.mxu0 0.0
  %579 = vmatpush1.msra.mxu0 0.0
  %580 = vmatprep.subr.mxu0 0.0
  %581 = vmatpush1.msra.mxu0 0.0
  %582 = vmatprep.subr.mxu0 0.0
  %583 = vmatpush1.msra.mxu0 0.0
  %584 = vmatprep.subr.mxu0 0.0
  %585 = vmatpush1.msra.mxu0 0.0
  %586 = vmatprep.subr.mxu0 0.0
  %587 = vmatpush1.msra.mxu0 0.0
  %588 = vmatprep.subr.mxu0 0.0
  %589 = vmatpush1.msra.mxu0 0.0
  %590 = vmatprep.subr.mxu0 0.0
  %591 = vmatpush1.msra.mxu0 0.0
  %592 = vmatprep.subr.mxu0 0.0
  %593 = vmatpush1.msra.mxu0 0.0
  %594 = vmatprep.subr.mxu0 0.0
  %595 = vmatpush1.msra.mxu0 0.0
  %596 = vmatprep.subr.mxu0 0.0
  %597 = vmatpush1.msra.mxu0 0.0
  %598 = vmatprep.subr.mxu0 0.0
  %599 = vmatpush1.msra.mxu0 0.0
  %600 = vmatprep.subr.mxu0 0.0
  %601 = vmatpush1.msra.mxu0 0.0
  %602 = vmatprep.subr.mxu0 0.0
  %603 = vmatpush1.msra.mxu0 0.0
  %604 = vmatprep.subr.mxu0 0.0
  %605 = vmatpush1.msra.mxu0 0.0
  %606 = vmatprep.subr.mxu0 0.0
  %607 = vmatpush1.msra.mxu0 0.0
  %608 = vmatprep.subr.mxu0 0.0
  %609 = vmatpush1.msra.mxu0 0.0
  %610 = vmatprep.subr.mxu0 0.0
  %611 = vmatpush1.msra.mxu0 0.0
  %612 = vmatprep.subr.mxu0 0.0
  %613 = vmatpush1.msra.mxu0 0.0
  %614 = vmatprep.subr.mxu0 0.0
  %615 = vmatpush1.msra.mxu0 0.0
  %616 = vmatprep.subr.mxu0 0.0
  %617 = vmatpush1.msra.mxu0 0.0
  %618 = vmatprep.subr.mxu0 0.0
  %619 = vmatpush1.msra.mxu0 0.0
  %620 = vmatprep.mubr.f32.mxu0 0.0
  %621 = vmatmul.mubr.f32.gmra.mrb[0].mxu0 %v554
  %v622 = vpop.f32.mrb[0].mxu0
  %v623 = vadd.f32 0.0, %v622
  %v624 = vpop.f32.mrb[0].mxu0
  %625 = vdwg.mxu0
  %v627 = vsel %vm217, %v383, 0
  %629 = vmatprep.subr.mxu0 0.0
  %630 = vmatpush1.msra.mxu0 %v117
  %631 = vmatprep.subr.mxu0 0.0
  %632 = vmatpush1.msra.mxu0 %v118
  %633 = vmatprep.subr.mxu0 0.0
  %634 = vmatpush1.msra.mxu0 0.0
  %635 = vmatprep.subr.mxu0 0.0
  %636 = vmatpush1.msra.mxu0 0.0
  %637 = vmatprep.subr.mxu0 0.0
  %638 = vmatpush1.msra.mxu0 0.0
  %639 = vmatprep.subr.mxu0 0.0
  %640 = vmatpush1.msra.mxu0 0.0
  %641 = vmatprep.subr.mxu0 0.0
  %642 = vmatpush1.msra.mxu0 0.0
  %643 = vmatprep.subr.mxu0 0.0
  %644 = vmatpush1.msra.mxu0 0.0
  %645 = vmatprep.subr.mxu0 0.0
  %646 = vmatpush1.msra.mxu0 0.0
  %647 = vmatprep.subr.mxu0 0.0
  %648 = vmatpush1.msra.mxu0 0.0
  %649 = vmatprep.subr.mxu0 0.0
  %650 = vmatpush1.msra.mxu0 0.0
  %651 = vmatprep.subr.mxu0 0.0
  %652 = vmatpush1.msra.mxu0 0.0
  %653 = vmatprep.subr.mxu0 0.0
  %654 = vmatpush1.msra.mxu0 0.0
  %655 = vmatprep.subr.mxu0 0.0
  %656 = vmatpush1.msra.mxu0 0.0
  %657 = vmatprep.subr.mxu0 0.0
  %658 = vmatpush1.msra.mxu0 0.0
  %659 = vmatprep.subr.mxu0 0.0
  %660 = vmatpush1.msra.mxu0 0.0
  %661 = vmatprep.subr.mxu0 0.0
  %662 = vmatpush1.msra.mxu0 0.0
  %663 = vmatprep.subr.mxu0 0.0
  %664 = vmatpush1.msra.mxu0 0.0
  %665 = vmatprep.subr.mxu0 0.0
  %666 = vmatpush1.msra.mxu0 0.0
  %667 = vmatprep.subr.mxu0 0.0
  %668 = vmatpush1.msra.mxu0 0.0
  %669 = vmatprep.subr.mxu0 0.0
  %670 = vmatpush1.msra.mxu0 0.0
  %671 = vmatprep.subr.mxu0 0.0
  %672 = vmatpush1.msra.mxu0 0.0
  %673 = vmatprep.subr.mxu0 0.0
  %674 = vmatpush1.msra.mxu0 0.0
  %675 = vmatprep.subr.mxu0 0.0
  %676 = vmatpush1.msra.mxu0 0.0
  %677 = vmatprep.subr.mxu0 0.0
  %678 = vmatpush1.msra.mxu0 0.0
  %679 = vmatprep.subr.mxu0 0.0
  %680 = vmatpush1.msra.mxu0 0.0
  %681 = vmatprep.subr.mxu0 0.0
  %682 = vmatpush1.msra.mxu0 0.0
  %683 = vmatprep.subr.mxu0 0.0
  %684 = vmatpush1.msra.mxu0 0.0
  %685 = vmatprep.subr.mxu0 0.0
  %686 = vmatpush1.msra.mxu0 0.0
  %687 = vmatprep.subr.mxu0 0.0
  %688 = vmatpush1.msra.mxu0 0.0
  %689 = vmatprep.subr.mxu0 0.0
  %690 = vmatpush1.msra.mxu0 0.0
  %691 = vmatprep.subr.mxu0 0.0
  %692 = vmatpush1.msra.mxu0 0.0
  %693 = vmatprep.mubr.f32.mxu0 0.0
  %694 = vmatmul.mubr.f32.gmra.mrb[0].mxu0 %v627
  %v695 = vpop.f32.mrb[0].mxu0
  %v696 = vadd.f32 %v623, %v695
  %v697 = vpop.f32.mrb[0].mxu0
  %698 = vdwg.mxu0
  %700 = vrot.lane.b32.xlu0 %v211, 96
  %v701 = vpop.permute.xlu0 %700
  %v702 = vsel %vm217, %v211, 0
  %v704 = vsel %vm217, %v701, 0
  %706 = vmatprep.subr.mxu0 0.0
  %707 = vmatpush1.xpose.msra.mxu0 %v704
  %708 = vmatprep.subr.mxu0 0.0
  %709 = vmatpush1.xpose.msra.mxu0 0.0
  %710 = vmatprep.subr.mxu0 0.0
  %711 = vmatpush1.xpose.msra.mxu0 0.0
  %712 = vmatprep.subr.mxu0 0.0
  %713 = vmatpush1.xpose.msra.mxu0 0.0
  %714 = vmatprep.subr.mxu0 0.0
  %715 = vmatpush1.xpose.msra.mxu0 0.0
  %716 = vmatprep.subr.mxu0 0.0
  %717 = vmatpush1.xpose.msra.mxu0 0.0
  %718 = vmatprep.subr.mxu0 0.0
  %719 = vmatpush1.xpose.msra.mxu0 0.0
  %720 = vmatprep.subr.mxu0 0.0
  %721 = vmatpush1.xpose.msra.mxu0 0.0
  %722 = vmatprep.subr.mxu0 0.0
  %723 = vmatpush1.xpose.msra.mxu0 0.0
  %724 = vmatprep.subr.mxu0 0.0
  %725 = vmatpush1.xpose.msra.mxu0 0.0
  %726 = vmatprep.subr.mxu0 0.0
  %727 = vmatpush1.xpose.msra.mxu0 0.0
  %728 = vmatprep.subr.mxu0 0.0
  %729 = vmatpush1.xpose.msra.mxu0 0.0
  %730 = vmatprep.subr.mxu0 0.0
  %731 = vmatpush1.xpose.msra.mxu0 0.0
  %732 = vmatprep.subr.mxu0 0.0
  %733 = vmatpush1.xpose.msra.mxu0 0.0
  %734 = vmatprep.subr.mxu0 0.0
  %735 = vmatpush1.xpose.msra.mxu0 0.0
  %736 = vmatprep.subr.mxu0 0.0
  %737 = vmatpush1.xpose.msra.mxu0 0.0
  %738 = vmatprep.subr.mxu0 0.0
  %739 = vmatpush1.xpose.msra.mxu0 0.0
  %740 = vmatprep.subr.mxu0 0.0
  %741 = vmatpush1.xpose.msra.mxu0 0.0
  %742 = vmatprep.subr.mxu0 0.0
  %743 = vmatpush1.xpose.msra.mxu0 0.0
  %744 = vmatprep.subr.mxu0 0.0
  %745 = vmatpush1.xpose.msra.mxu0 0.0
  %746 = vmatprep.subr.mxu0 0.0
  %747 = vmatpush1.xpose.msra.mxu0 0.0
  %748 = vmatprep.subr.mxu0 0.0
  %749 = vmatpush1.xpose.msra.mxu0 0.0
  %750 = vmatprep.subr.mxu0 0.0
  %751 = vmatpush1.xpose.msra.mxu0 0.0
  %752 = vmatprep.subr.mxu0 0.0
  %753 = vmatpush1.xpose.msra.mxu0 0.0
  %754 = vmatprep.subr.mxu0 0.0
  %755 = vmatpush1.xpose.msra.mxu0 0.0
  %756 = vmatprep.subr.mxu0 0.0
  %757 = vmatpush1.xpose.msra.mxu0 0.0
  %758 = vmatprep.subr.mxu0 0.0
  %759 = vmatpush1.xpose.msra.mxu0 0.0
  %760 = vmatprep.subr.mxu0 0.0
  %761 = vmatpush1.xpose.msra.mxu0 0.0
  %762 = vmatprep.subr.mxu0 0.0
  %763 = vmatpush1.xpose.msra.mxu0 0.0
  %764 = vmatprep.subr.mxu0 0.0
  %765 = vmatpush1.xpose.msra.mxu0 0.0
  %766 = vmatprep.subr.mxu0 0.0
  %767 = vmatpush1.xpose.msra.mxu0 0.0
  %768 = vmatprep.subr.mxu0 0.0
  %769 = vmatpush1.xpose.msra.mxu0 0.0
  %770 = vmatprep.mubr.f32.mxu0 0.0
  %771 = vmatmul.mubr.f32.gmra.mrb[0].mxu0 %v702
  %v772 = vpop.f32.mrb[0].mxu0
  %v773 = vadd.f32 0.0, %v772
  %v774 = vpop.f32.mrb[0].mxu0
  %775 = vdwg.mxu0
  %v776 = vmul.f32 %v773, 0.25
  %v777 = vlaneseq
  %v778 = vshrl.u32 %v777, 7
  %v779 = vsub.s32 1, %v778
  %v780 = vrot.slane %v116, %v779
  %v781 = vadd.f32 %v776, %v780
  %v782 = vsel %vm298, %v781, -inf
  %783 = vmax.xlane.f32.xlu0 %v782
  %v784 = vpop.xlane.xlu0 %783
  %v785 = vsub.f32 %v781, %v784
  %v786 = vmul.f32 %v785, 1.442695
  %v787 = vpow.pop %v786
  %v788 = vsel %vm298, %v787, 0.0
  %789 = vadd.xlane.f32.xlu0 %v788
  %v790 = vpop.xlane.xlu0 %789
  %v791 = vrcp.pop %v790
  %v792 = vmul.f32 %v787, %v791
  %793 = vrot.lane.b32.xlu0 %v211, 64
  %v794 = vpop.permute.xlu0 %793
  %v797 = vsel %vm298, %v792, 0
  %799 = vmatprep.subr.mxu0 0.0
  %800 = vmatpush1.msra.mxu0 %v794
  %801 = vmatprep.subr.mxu0 0.0
  %802 = vmatpush1.msra.mxu0 0.0
  %803 = vmatprep.subr.mxu0 0.0
  %804 = vmatpush1.msra.mxu0 0.0
  %805 = vmatprep.subr.mxu0 0.0
  %806 = vmatpush1.msra.mxu0 0.0
  %807 = vmatprep.subr.mxu0 0.0
  %808 = vmatpush1.msra.mxu0 0.0
  %809 = vmatprep.subr.mxu0 0.0
  %810 = vmatpush1.msra.mxu0 0.0
  %811 = vmatprep.subr.mxu0 0.0
  %812 = vmatpush1.msra.mxu0 0.0
  %813 = vmatprep.subr.mxu0 0.0
  %814 = vmatpush1.msra.mxu0 0.0
  %815 = vmatprep.subr.mxu0 0.0
  %816 = vmatpush1.msra.mxu0 0.0
  %817 = vmatprep.subr.mxu0 0.0
  %818 = vmatpush1.msra.mxu0 0.0
  %819 = vmatprep.subr.mxu0 0.0
  %820 = vmatpush1.msra.mxu0 0.0
  %821 = vmatprep.subr.mxu0 0.0
  %822 = vmatpush1.msra.mxu0 0.0
  %823 = vmatprep.subr.mxu0 0.0
  %824 = vmatpush1.msra.mxu0 0.0
  %825 = vmatprep.subr.mxu0 0.0
  %826 = vmatpush1.msra.mxu0 0.0
  %827 = vmatprep.subr.mxu0 0.0
  %828 = vmatpush1.msra.mxu0 0.0
  %829 = vmatprep.subr.mxu0 0.0
  %830 = vmatpush1.msra.mxu0 0.0
  %831 = vmatprep.subr.mxu0 0.0
  %832 = vmatpush1.msra.mxu0 0.0
  %833 = vmatprep.subr.mxu0 0.0
  %834 = vmatpush1.msra.mxu0 0.0
  %835 = vmatprep.subr.mxu0 0.0
  %836 = vmatpush1.msra.mxu0 0.0
  %837 = vmatprep.subr.mxu0 0.0
  %838 = vmatpush1.msra.mxu0 0.0
  %839 = vmatprep.subr.mxu0 0.0
  %840 = vmatpush1.msra.mxu0 0.0
  %841 = vmatprep.subr.mxu0 0.0
  %842 = vmatpush1.msra.mxu0 0.0
  %843 = vmatprep.subr.mxu0 0.0
  %844 = vmatpush1.msra.mxu0 0.0
  %845 = vmatprep.subr.mxu0 0.0
  %846 = vmatpush1.msra.mxu0 0.0
  %847 = vmatprep.subr.mxu0 0.0
  %848 = vmatpush1.msra.mxu0 0.0
  %849 = vmatprep.subr.mxu0 0.0
  %850 = vmatpush1.msra.mxu0 0.0
  %851 = vmatprep.subr.mxu0 0.0
  %852 = vmatpush1.msra.mxu0 0.0
  %853 = vmatprep.subr.mxu0 0.0
  %854 = vmatpush1.msra.mxu0 0.0
  %855 = vmatprep.subr.mxu0 0.0
  %856 = vmatpush1.msra.mxu0 0.0
  %857 = vmatprep.subr.mxu0 0.0
  %858 = vmatpush1.msra.mxu0 0.0
  %859 = vmatprep.subr.mxu0 0.0
  %860 = vmatpush1.msra.mxu0 0.0
  %861 = vmatprep.subr.mxu0 0.0
  %862 = vmatpush1.msra.mxu0 0.0
  %863 = vmatprep.mubr.f32.mxu0 0.0
  %864 = vmatmul.mubr.f32.gmra.mrb[0].mxu0 %v797
  %v865 = vpop.f32.mrb[0].mxu0
  %v866 = vadd.f32 0.0, %v865
  %v867 = vpop.f32.mrb[0].mxu0
  %868 = vdwg.mxu0
  %869 = vrot.lane.b32.xlu0 %v211, 112
  %v870 = vpop.permute.xlu0 %869
  %871 = vrot.lane.b32.xlu0 %v211, 80
  %v872 = vpop.permute.xlu0 %871
  %v873 = vsel %vm217, %v870, 0
  %v875 = vsel %vm217, %v872, 0
  %877 = vmatprep.subr.mxu0 0.0
  %878 = vmatpush1.xpose.msra.mxu0 %v875
  %879 = vmatprep.subr.mxu0 0.0
  %880 = vmatpush1.xpose.msra.mxu0 0.0
  %881 = vmatprep.subr.mxu0 0.0
  %882 = vmatpush1.xpose.msra.mxu0 0.0
  %883 = vmatprep.subr.mxu0 0.0
  %884 = vmatpush1.xpose.msra.mxu0 0.0
  %885 = vmatprep.subr.mxu0 0.0
  %886 = vmatpush1.xpose.msra.mxu0 0.0
  %887 = vmatprep.subr.mxu0 0.0
  %888 = vmatpush1.xpose.msra.mxu0 0.0
  %889 = vmatprep.subr.mxu0 0.0
  %890 = vmatpush1.xpose.msra.mxu0 0.0
  %891 = vmatprep.subr.mxu0 0.0
  %892 = vmatpush1.xpose.msra.mxu0 0.0
  %893 = vmatprep.subr.mxu0 0.0
  %894 = vmatpush1.xpose.msra.mxu0 0.0
  %895 = vmatprep.subr.mxu0 0.0
  %896 = vmatpush1.xpose.msra.mxu0 0.0
  %897 = vmatprep.subr.mxu0 0.0
  %898 = vmatpush1.xpose.msra.mxu0 0.0
  %899 = vmatprep.subr.mxu0 0.0
  %900 = vmatpush1.xpose.msra.mxu0 0.0
  %901 = vmatprep.subr.mxu0 0.0
  %902 = vmatpush1.xpose.msra.mxu0 0.0
  %903 = vmatprep.subr.mxu0 0.0
  %904 = vmatpush1.xpose.msra.mxu0 0.0
  %905 = vmatprep.subr.mxu0 0.0
  %906 = vmatpush1.xpose.msra.mxu0 0.0
  %907 = vmatprep.subr.mxu0 0.0
  %908 = vmatpush1.xpose.msra.mxu0 0.0
  %909 = vmatprep.subr.mxu0 0.0
  %910 = vmatpush1.xpose.msra.mxu0 0.0
  %911 = vmatprep.subr.mxu0 0.0
  %912 = vmatpush1.xpose.msra.mxu0 0.0
  %913 = vmatprep.subr.mxu0 0.0
  %914 = vmatpush1.xpose.msra.mxu0 0.0
  %915 = vmatprep.subr.mxu0 0.0
  %916 = vmatpush1.xpose.msra.mxu0 0.0
  %917 = vmatprep.subr.mxu0 0.0
  %918 = vmatpush1.xpose.msra.mxu0 0.0
  %919 = vmatprep.subr.mxu0 0.0
  %920 = vmatpush1.xpose.msra.mxu0 0.0
  %921 = vmatprep.subr.mxu0 0.0
  %922 = vmatpush1.xpose.msra.mxu0 0.0
  %923 = vmatprep.subr.mxu0 0.0
  %924 = vmatpush1.xpose.msra.mxu0 0.0
  %925 = vmatprep.subr.mxu0 0.0
  %926 = vmatpush1.xpose.msra.mxu0 0.0
  %927 = vmatprep.subr.mxu0 0.0
  %928 = vmatpush1.xpose.msra.mxu0 0.0
  %929 = vmatprep.subr.mxu0 0.0
  %930 = vmatpush1.xpose.msra.mxu0 0.0
  %931 = vmatprep.subr.mxu0 0.0
  %932 = vmatpush1.xpose.msra.mxu0 0.0
  %933 = vmatprep.subr.mxu0 0.0
  %934 = vmatpush1.xpose.msra.mxu0 0.0
  %935 = vmatprep.subr.mxu0 0.0
  %936 = vmatpush1.xpose.msra.mxu0 0.0
  %937 = vmatprep.subr.mxu0 0.0
  %938 = vmatpush1.xpose.msra.mxu0 0.0
  %939 = vmatprep.subr.mxu0 0.0
  %940 = vmatpush1.xpose.msra.mxu0 0.0
  %941 = vmatprep.mubr.f32.mxu0 0.0
  %942 = vmatmul.mubr.f32.gmra.mrb[0].mxu0 %v873
  %v943 = vpop.f32.mrb[0].mxu0
  %v944 = vadd.f32 0.0, %v943
  %v945 = vpop.f32.mrb[0].mxu0
  %946 = vdwg.mxu0
  %v947 = vmul.f32 %v944, 0.25
  %v948 = vadd.f32 %v947, %v780
  %v949 = vsel %vm298, %v948, -inf
  %950 = vmax.xlane.f32.xlu0 %v949
  %v951 = vpop.xlane.xlu0 %950
  %v952 = vsub.f32 %v948, %v951
  %v953 = vmul.f32 %v952, 1.442695
  %v954 = vpow.pop %v953
  %v955 = vsel %vm298, %v954, 0.0
  %956 = vadd.xlane.f32.xlu0 %v955
  %v957 = vpop.xlane.xlu0 %956
  %v958 = vrcp.pop %v957
  %v959 = vmul.f32 %v954, %v958
  %960 = vrot.lane.b32.xlu0 %v211, 48
  %v961 = vpop.permute.xlu0 %960
  %v964 = vsel %vm298, %v959, 0
  %966 = vmatprep.subr.mxu0 0.0
  %967 = vmatpush1.msra.mxu0 %v961
  %968 = vmatprep.subr.mxu0 0.0
  %969 = vmatpush1.msra.mxu0 0.0
  %970 = vmatprep.subr.mxu0 0.0
  %971 = vmatpush1.msra.mxu0 0.0
  %972 = vmatprep.subr.mxu0 0.0
  %973 = vmatpush1.msra.mxu0 0.0
  %974 = vmatprep.subr.mxu0 0.0
  %975 = vmatpush1.msra.mxu0 0.0
  %976 = vmatprep.subr.mxu0 0.0
  %977 = vmatpush1.msra.mxu0 0.0
  %978 = vmatprep.subr.mxu0 0.0
  %979 = vmatpush1.msra.mxu0 0.0
  %980 = vmatprep.subr.mxu0 0.0
  %981 = vmatpush1.msra.mxu0 0.0
  %982 = vmatprep.subr.mxu0 0.0
  %983 = vmatpush1.msra.mxu0 0.0
  %984 = vmatprep.subr.mxu0 0.0
  %985 = vmatpush1.msra.mxu0 0.0
  %986 = vmatprep.subr.mxu0 0.0
  %987 = vmatpush1.msra.mxu0 0.0
  %988 = vmatprep.subr.mxu0 0.0
  %989 = vmatpush1.msra.mxu0 0.0
  %990 = vmatprep.subr.mxu0 0.0
  %991 = vmatpush1.msra.mxu0 0.0
  %992 = vmatprep.subr.mxu0 0.0
  %993 = vmatpush1.msra.mxu0 0.0
  %994 = vmatprep.subr.mxu0 0.0
  %995 = vmatpush1.msra.mxu0 0.0
  %996 = vmatprep.subr.mxu0 0.0
  %997 = vmatpush1.msra.mxu0 0.0
  %998 = vmatprep.subr.mxu0 0.0
  %999 = vmatpush1.msra.mxu0 0.0
  %1000 = vmatprep.subr.mxu0 0.0
  %1001 = vmatpush1.msra.mxu0 0.0
  %1002 = vmatprep.subr.mxu0 0.0
  %1003 = vmatpush1.msra.mxu0 0.0
  %1004 = vmatprep.subr.mxu0 0.0
  %1005 = vmatpush1.msra.mxu0 0.0
  %1006 = vmatprep.subr.mxu0 0.0
  %1007 = vmatpush1.msra.mxu0 0.0
  %1008 = vmatprep.subr.mxu0 0.0
  %1009 = vmatpush1.msra.mxu0 0.0
  %1010 = vmatprep.subr.mxu0 0.0
  %1011 = vmatpush1.msra.mxu0 0.0
  %1012 = vmatprep.subr.mxu0 0.0
  %1013 = vmatpush1.msra.mxu0 0.0
  %1014 = vmatprep.subr.mxu0 0.0
  %1015 = vmatpush1.msra.mxu0 0.0
  %1016 = vmatprep.subr.mxu0 0.0
  %1017 = vmatpush1.msra.mxu0 0.0
  %1018 = vmatprep.subr.mxu0 0.0
  %1019 = vmatpush1.msra.mxu0 0.0
  %1020 = vmatprep.subr.mxu0 0.0
  %1021 = vmatpush1.msra.mxu0 0.0
  %1022 = vmatprep.subr.mxu0 0.0
  %1023 = vmatpush1.msra.mxu0 0.0
  %1024 = vmatprep.subr.mxu0 0.0
  %1025 = vmatpush1.msra.mxu0 0.0
  %1026 = vmatprep.subr.mxu0 0.0
  %1027 = vmatpush1.msra.mxu0 0.0
  %1028 = vmatprep.subr.mxu0 0.0
  %1029 = vmatpush1.msra.mxu0 0.0
  %1030 = vmatprep.mubr.f32.mxu0 0.0
  %1031 = vmatmul.mubr.f32.gmra.mrb[0].mxu0 %v964
  %v1032 = vpop.f32.mrb[0].mxu0
  %v1033 = vadd.f32 0.0, %v1032
  %v1034 = vpop.f32.mrb[0].mxu0
  %1035 = vdwg.mxu0
  %v1037 = vsel %vm217, %v1033, 0
  %1039 = vmatprep.subr.mxu0 0.0
  %1040 = vmatpush1.msra.mxu0 %v119
  %1041 = vmatprep.subr.mxu0 0.0
  %1042 = vmatpush1.msra.mxu0 %v120
  %1043 = vmatprep.subr.mxu0 0.0
  %1044 = vmatpush1.msra.mxu0 0.0
  %1045 = vmatprep.subr.mxu0 0.0
  %1046 = vmatpush1.msra.mxu0 0.0
  %1047 = vmatprep.subr.mxu0 0.0
  %1048 = vmatpush1.msra.mxu0 0.0
  %1049 = vmatprep.subr.mxu0 0.0
  %1050 = vmatpush1.msra.mxu0 0.0
  %1051 = vmatprep.subr.mxu0 0.0
  %1052 = vmatpush1.msra.mxu0 0.0
  %1053 = vmatprep.subr.mxu0 0.0
  %1054 = vmatpush1.msra.mxu0 0.0
  %1055 = vmatprep.subr.mxu0 0.0
  %1056 = vmatpush1.msra.mxu0 0.0
  %1057 = vmatprep.subr.mxu0 0.0
  %1058 = vmatpush1.msra.mxu0 0.0
  %1059 = vmatprep.subr.mxu0 0.0
  %1060 = vmatpush1.msra.mxu0 0.0
  %1061 = vmatprep.subr.mxu0 0.0
  %1062 = vmatpush1.msra.mxu0 0.0
  %1063 = vmatprep.subr.mxu0 0.0
  %1064 = vmatpush1.msra.mxu0 0.0
  %1065 = vmatprep.subr.mxu0 0.0
  %1066 = vmatpush1.msra.mxu0 0.0
  %1067 = vmatprep.subr.mxu0 0.0
  %1068 = vmatpush1.msra.mxu0 0.0
  %1069 = vmatprep.subr.mxu0 0.0
  %1070 = vmatpush1.msra.mxu0 0.0
  %1071 = vmatprep.subr.mxu0 0.0
  %1072 = vmatpush1.msra.mxu0 0.0
  %1073 = vmatprep.subr.mxu0 0.0
  %1074 = vmatpush1.msra.mxu0 0.0
  %1075 = vmatprep.subr.mxu0 0.0
  %1076 = vmatpush1.msra.mxu0 0.0
  %1077 = vmatprep.subr.mxu0 0.0
  %1078 = vmatpush1.msra.mxu0 0.0
  %1079 = vmatprep.subr.mxu0 0.0
  %1080 = vmatpush1.msra.mxu0 0.0
  %1081 = vmatprep.subr.mxu0 0.0
  %1082 = vmatpush1.msra.mxu0 0.0
  %1083 = vmatprep.subr.mxu0 0.0
  %1084 = vmatpush1.msra.mxu0 0.0
  %1085 = vmatprep.subr.mxu0 0.0
  %1086 = vmatpush1.msra.mxu0 0.0
  %1087 = vmatprep.subr.mxu0 0.0
  %1088 = vmatpush1.msra.mxu0 0.0
  %1089 = vmatprep.subr.mxu0 0.0
  %1090 = vmatpush1.msra.mxu0 0.0
  %1091 = vmatprep.subr.mxu0 0.0
  %1092 = vmatpush1.msra.mxu0 0.0
  %1093 = vmatprep.subr.mxu0 0.0
  %1094 = vmatpush1.msra.mxu0 0.0
  %1095 = vmatprep.subr.mxu0 0.0
  %1096 = vmatpush1.msra.mxu0 0.0
  %1097 = vmatprep.subr.mxu0 0.0
  %1098 = vmatpush1.msra.mxu0 0.0
  %1099 = vmatprep.subr.mxu0 0.0
  %1100 = vmatpush1.msra.mxu0 0.0
  %1101 = vmatprep.subr.mxu0 0.0
  %1102 = vmatpush1.msra.mxu0 0.0
  %1103 = vmatprep.mubr.f32.mxu0 0.0
  %1104 = vmatmul.mubr.f32.gmra.mrb[0].mxu0 %v1037
  %v1105 = vpop.f32.mrb[0].mxu0
  %v1106 = vadd.f32 0.0, %v1105
  %v1107 = vpop.f32.mrb[0].mxu0
  %1108 = vdwg.mxu0
  %v1110 = vsel %vm217, %v866, 0
  %1112 = vmatprep.subr.mxu0 0.0
  %1113 = vmatpush1.msra.mxu0 %v117
  %1114 = vmatprep.subr.mxu0 0.0
  %1115 = vmatpush1.msra.mxu0 %v118
  %1116 = vmatprep.subr.mxu0 0.0
  %1117 = vmatpush1.msra.mxu0 0.0
  %1118 = vmatprep.subr.mxu0 0.0
  %1119 = vmatpush1.msra.mxu0 0.0
  %1120 = vmatprep.subr.mxu0 0.0
  %1121 = vmatpush1.msra.mxu0 0.0
  %1122 = vmatprep.subr.mxu0 0.0
  %1123 = vmatpush1.msra.mxu0 0.0
  %1124 = vmatprep.subr.mxu0 0.0
  %1125 = vmatpush1.msra.mxu0 0.0
  %1126 = vmatprep.subr.mxu0 0.0
  %1127 = vmatpush1.msra.mxu0 0.0
  %1128 = vmatprep.subr.mxu0 0.0
  %1129 = vmatpush1.msra.mxu0 0.0
  %1130 = vmatprep.subr.mxu0 0.0
  %1131 = vmatpush1.msra.mxu0 0.0
  %1132 = vmatprep.subr.mxu0 0.0
  %1133 = vmatpush1.msra.mxu0 0.0
  %1134 = vmatprep.subr.mxu0 0.0
  %1135 = vmatpush1.msra.mxu0 0.0
  %1136 = vmatprep.subr.mxu0 0.0
  %1137 = vmatpush1.msra.mxu0 0.0
  %1138 = vmatprep.subr.mxu0 0.0
  %1139 = vmatpush1.msra.mxu0 0.0
  %1140 = vmatprep.subr.mxu0 0.0
  %1141 = vmatpush1.msra.mxu0 0.0
  %1142 = vmatprep.subr.mxu0 0.0
  %1143 = vmatpush1.msra.mxu0 0.0
  %1144 = vmatprep.subr.mxu0 0.0
  %1145 = vmatpush1.msra.mxu0 0.0
  %1146 = vmatprep.subr.mxu0 0.0
  %1147 = vmatpush1.msra.mxu0 0.0
  %1148 = vmatprep.subr.mxu0 0.0
  %1149 = vmatpush1.msra.mxu0 0.0
  %1150 = vmatprep.subr.mxu0 0.0
  %1151 = vmatpush1.msra.mxu0 0.0
  %1152 = vmatprep.subr.mxu0 0.0
  %1153 = vmatpush1.msra.mxu0 0.0
  %1154 = vmatprep.subr.mxu0 0.0
  %1155 = vmatpush1.msra.mxu0 0.0
  %1156 = vmatprep.subr.mxu0 0.0
  %1157 = vmatpush1.msra.mxu0 0.0
  %1158 = vmatprep.subr.mxu0 0.0
  %1159 = vmatpush1.msra.mxu0 0.0
  %1160 = vmatprep.subr.mxu0 0.0
  %1161 = vmatpush1.msra.mxu0 0.0
  %1162 = vmatprep.subr.mxu0 0.0
  %1163 = vmatpush1.msra.mxu0 0.0
  %1164 = vmatprep.subr.mxu0 0.0
  %1165 = vmatpush1.msra.mxu0 0.0
  %1166 = vmatprep.subr.mxu0 0.0
  %1167 = vmatpush1.msra.mxu0 0.0
  %1168 = vmatprep.subr.mxu0 0.0
  %1169 = vmatpush1.msra.mxu0 0.0
  %1170 = vmatprep.subr.mxu0 0.0
  %1171 = vmatpush1.msra.mxu0 0.0
  %1172 = vmatprep.subr.mxu0 0.0
  %1173 = vmatpush1.msra.mxu0 0.0
  %1174 = vmatprep.subr.mxu0 0.0
  %1175 = vmatpush1.msra.mxu0 0.0
  %1176 = vmatprep.mubr.f32.mxu0 0.0
  %1177 = vmatmul.mubr.f32.gmra.mrb[0].mxu0 %v1110
  %v1178 = vpop.f32.mrb[0].mxu0
  %v1179 = vadd.f32 %v1106, %v1178
  %v1180 = vpop.f32.mrb[0].mxu0
  %1181 = vdwg.mxu0
  %v1182 = vlaneseq
  %v1183 = vshrl.u32 %v1182, 7
  %v1184 = vsub.s32 0, %v1183
  %v1185 = vrot.slane %v121, %v1184
  %v1186 = vadd.f32 %v696, %v1185
  %v1187 = vadd.f32 %v1179, %v1185
  %v1188 = vadd.f32 %v111, %v1186
  %v1189 = vadd.f32 %v112, %v1187
  %v1190 = vsel %vm73, %v1188, 0.0
  %1191 = vadd.xlane.f32.xlu0 %v1190
  %v1192 = vpop.xlane.xlu0 %1191
  %v1193 = vsel %vm73, %v1189, 0.0
  %1194 = vadd.xlane.f32.xlu0 %v1193
  %v1195 = vpop.xlane.xlu0 %1194
  %v1196 = vmul.f32 %v1192, %v80
  %v1197 = vmul.f32 %v1195, %v80
  %v1198 = vsub.f32 %v1188, %v1196
  %v1199 = vsub.f32 %v1189, %v1197
  %v1200 = vmul.f32 %v1198, %v1198
  %v1201 = vmul.f32 %v1199, %v1199
  %v1202 = vsel %vm73, %v1200, 0.0
  %1203 = vadd.xlane.f32.xlu0 %v1202
  %v1204 = vpop.xlane.xlu0 %1203
  %v1205 = vsel %vm73, %v1201, 0.0
  %1206 = vadd.xlane.f32.xlu0 %v1205
  %v1207 = vpop.xlane.xlu0 %1206
  %v1208 = vmul.f32 %v1204, %v80
  %v1209 = vmul.f32 %v1207, %v80
  %v1210 = vadd.f32 %v1208, 1e-12
  %v1211 = vadd.f32 %v1209, 1e-12
  %v1212 = vrsqrt.pop %v1210
  %v1213 = vrsqrt.pop %v1211
  %v1214 = vmul.f32 %v1198, %v1212
  %v1215 = vmul.f32 %v1199, %v1213
  %v1216 = vlaneseq
  %v1217 = vshrl.u32 %v1216, 7
  %v1218 = vsub.s32 1, %v1217
  %v1219 = vrot.slane %v121, %v1218
  %v1220 = vmul.f32 %v1214, %v1219
  %v1221 = vmul.f32 %v1215, %v1219
  %v1222 = vlaneseq
  %v1223 = vshrl.u32 %v1222, 7
  %v1224 = vsub.s32 2, %v1223
  %v1225 = vrot.slane %v121, %v1224
  %v1226 = vadd.f32 %v1220, %v1225
  %v1227 = vadd.f32 %v1221, %v1225
  %v1228 = vld [vmem:[%s6] sm:$0xff]
  %v1229 = vld [vmem:[%s6 + $0x8] sm:$0xff]
  %v1230 = vld [vmem:[%s6 + $0x10] sm:$0xff]
  %v1231 = vld [vmem:[%s6 + $0x18] sm:$0xff]
  %v1232 = vld [vmem:[%s9] sm:$0x1]
  %v1234 = vlaneseq
  %v1235 = vshrl.u32 %v1234, 7
  %v1236 = vsub.s32 0, %v1235
  %v1237 = vrot.slane %v1232, %v1236
  %v1240 = vsel %vm73, %v1226, 0
  %v1243 = vsel %vm73, %v1227, 0
  %1245 = vmatprep.subr.mxu0 0.0
  %1246 = vmatpush1.msra.mxu0 %v1228
  %1247 = vmatprep.subr.mxu0 0.0
  %1248 = vmatpush1.msra.mxu0 %v1229
  %1249 = vmatprep.subr.mxu0 0.0
  %1250 = vmatpush1.msra.mxu0 %v1230
  %1251 = vmatprep.subr.mxu0 0.0
  %1252 = vmatpush1.msra.mxu0 %v1231
  %1253 = vmatprep.subr.mxu0 0.0
  %1254 = vmatpush1.msra.mxu0 0.0
  %1255 = vmatprep.subr.mxu0 0.0
  %1256 = vmatpush1.msra.mxu0 0.0
  %1257 = vmatprep.subr.mxu0 0.0
  %1258 = vmatpush1.msra.mxu0 0.0
  %1259 = vmatprep.subr.mxu0 0.0
  %1260 = vmatpush1.msra.mxu0 0.0
  %1261 = vmatprep.subr.mxu0 0.0
  %1262 = vmatpush1.msra.mxu0 0.0
  %1263 = vmatprep.subr.mxu0 0.0
  %1264 = vmatpush1.msra.mxu0 0.0
  %1265 = vmatprep.subr.mxu0 0.0
  %1266 = vmatpush1.msra.mxu0 0.0
  %1267 = vmatprep.subr.mxu0 0.0
  %1268 = vmatpush1.msra.mxu0 0.0
  %1269 = vmatprep.subr.mxu0 0.0
  %1270 = vmatpush1.msra.mxu0 0.0
  %1271 = vmatprep.subr.mxu0 0.0
  %1272 = vmatpush1.msra.mxu0 0.0
  %1273 = vmatprep.subr.mxu0 0.0
  %1274 = vmatpush1.msra.mxu0 0.0
  %1275 = vmatprep.subr.mxu0 0.0
  %1276 = vmatpush1.msra.mxu0 0.0
  %1277 = vmatprep.subr.mxu0 0.0
  %1278 = vmatpush1.msra.mxu0 0.0
  %1279 = vmatprep.subr.mxu0 0.0
  %1280 = vmatpush1.msra.mxu0 0.0
  %1281 = vmatprep.subr.mxu0 0.0
  %1282 = vmatpush1.msra.mxu0 0.0
  %1283 = vmatprep.subr.mxu0 0.0
  %1284 = vmatpush1.msra.mxu0 0.0
  %1285 = vmatprep.subr.mxu0 0.0
  %1286 = vmatpush1.msra.mxu0 0.0
  %1287 = vmatprep.subr.mxu0 0.0
  %1288 = vmatpush1.msra.mxu0 0.0
  %1289 = vmatprep.subr.mxu0 0.0
  %1290 = vmatpush1.msra.mxu0 0.0
  %1291 = vmatprep.subr.mxu0 0.0
  %1292 = vmatpush1.msra.mxu0 0.0
  %1293 = vmatprep.subr.mxu0 0.0
  %1294 = vmatpush1.msra.mxu0 0.0
  %1295 = vmatprep.subr.mxu0 0.0
  %1296 = vmatpush1.msra.mxu0 0.0
  %1297 = vmatprep.subr.mxu0 0.0
  %1298 = vmatpush1.msra.mxu0 0.0
  %1299 = vmatprep.subr.mxu0 0.0
  %1300 = vmatpush1.msra.mxu0 0.0
  %1301 = vmatprep.subr.mxu0 0.0
  %1302 = vmatpush1.msra.mxu0 0.0
  %1303 = vmatprep.subr.mxu0 0.0
  %1304 = vmatpush1.msra.mxu0 0.0
  %1305 = vmatprep.subr.mxu0 0.0
  %1306 = vmatpush1.msra.mxu0 0.0
  %1307 = vmatprep.subr.mxu0 0.0
  %1308 = vmatpush1.msra.mxu0 0.0
  %1309 = vmatprep.mubr.f32.mxu0 0.0
  %1310 = vmatmul.mubr.f32.gmra.mrb[0].mxu0 %v1240
  %v1311 = vpop.f32.mrb[0].mxu0
  %v1312 = vadd.f32 %v1237, %v1311
  %v1313 = vpop.f32.mrb[0].mxu0
  %1314 = vmatprep.mubr.f32.mxu0 0.0
  %1315 = vmatmul.mubr.f32.gmra.mrb[0].mxu0 %v1243
  %v1316 = vpop.f32.mrb[0].mxu0
  %v1317 = vadd.f32 %v1237, %v1316
  %v1318 = vpop.f32.mrb[0].mxu0
  %1319 = vdwg.mxu0
  %v1320 = vmul.f32 %v1312, 0.5
  %v1321 = vmul.f32 %v1317, 0.5
  %v1322 = vmul.f32 %v1312, 0.70710677
  %v1323 = vmul.f32 %v1317, 0.70710677
  %v1324 = vand.u32 2147483647, %v1322
  %v1325 = vand.u32 2147483647, %v1323
  %v1326 = vmul.f32 %v1324, 0.3275911
  %v1327 = vmul.f32 %v1325, 0.3275911
  %v1328 = vadd.f32 %v1326, 1.0
  %v1329 = vadd.f32 %v1327, 1.0
  %v1330 = vrcp.pop %v1328
  %v1331 = vmul.f32 1.0, %v1330
  %v1332 = vrcp.pop %v1329
  %v1333 = vmul.f32 1.0, %v1332
  %v1334 = vmul.f32 %v1331, 1.0614054
  %v1335 = vmul.f32 %v1333, 1.0614054
  %v1336 = vadd.f32 %v1334, -1.4531521
  %v1337 = vadd.f32 %v1335, -1.4531521
  %v1338 = vmul.f32 %v1336, %v1331
  %v1339 = vmul.f32 %v1337, %v1333
  %v1340 = vadd.f32 %v1338, 1.4214138
  %v1341 = vadd.f32 %v1339, 1.4214138
  %v1342 = vmul.f32 %v1340, %v1331
  %v1343 = vmul.f32 %v1341, %v1333
  %v1344 = vadd.f32 %v1342, -0.28449672
  %v1345 = vadd.f32 %v1343, -0.28449672
  %v1346 = vmul.f32 %v1344, %v1331
  %v1347 = vmul.f32 %v1345, %v1333
  %v1348 = vadd.f32 %v1346, 0.2548296
  %v1349 = vadd.f32 %v1347, 0.2548296
  %v1350 = vmul.f32 %v1348, %v1331
  %v1351 = vmul.f32 %v1349, %v1333
  %v1352 = vsub.f32 0.0, %v1324
  %v1353 = vsub.f32 0.0, %v1325
  %v1354 = vmul.f32 %v1352, %v1324
  %v1355 = vmul.f32 %v1353, %v1325
  %v1356 = vmul.f32 %v1354, 1.442695
  %v1357 = vpow.pop %v1356
  %v1358 = vmul.f32 %v1355, 1.442695
  %v1359 = vpow.pop %v1358
  %v1360 = vmul.f32 %v1350, %v1357
  %v1361 = vmul.f32 %v1351, %v1359
  %v1362 = vsub.f32 1.0, %v1360
  %v1363 = vsub.f32 1.0, %v1361
  %vm1364 = vcmp.ge.f32.partialorder %v1322, 0.0
  %vm1365 = vcmp.ge.f32.partialorder %v1323, 0.0
  %v1366 = vsub.f32 0.0, %v1362
  %v1367 = vsub.f32 0.0, %v1363
  %v1368 = vsel %vm1364, %v1362, %v1366
  %v1369 = vsel %vm1365, %v1363, %v1367
  %v1370 = vadd.f32 %v1368, 1.0
  %v1371 = vadd.f32 %v1369, 1.0
  %v1372 = vmul.f32 %v1320, %v1370
  %v1373 = vmul.f32 %v1321, %v1371
  %v1374 = vld [vmem:[%s7] sm:$0xff]
  %v1375 = vld [vmem:[%s7 + $0x8] sm:$0xff]
  %v1376 = vld [vmem:[%s7 + $0x10] sm:$0xff]
  %v1377 = vld [vmem:[%s7 + $0x18] sm:$0xff]
  %v1378 = vld [vmem:[%s7 + $0x20] sm:$0xff]
  %v1379 = vld [vmem:[%s7 + $0x28] sm:$0xff]
  %v1380 = vld [vmem:[%s7 + $0x30] sm:$0xff]
  %v1381 = vld [vmem:[%s7 + $0x38] sm:$0xff]
  %v1382 = vlaneseq
  %v1383 = vshrl.u32 %v1382, 7
  %v1384 = vsub.s32 3, %v1383
  %v1385 = vrot.slane %v121, %v1384
  %vm1386 = vcmask 523264
  %v1388 = vsel %vm1386, %v1372, 0
  %v1391 = vsel %vm1386, %v1373, 0
  %1393 = vmatprep.subr.mxu0 0.0
  %1394 = vmatpush1.msra.mxu0 %v1374
  %1395 = vmatprep.subr.mxu0 0.0
  %1396 = vmatpush1.msra.mxu0 %v1375
  %1397 = vmatprep.subr.mxu0 0.0
  %1398 = vmatpush1.msra.mxu0 %v1376
  %1399 = vmatprep.subr.mxu0 0.0
  %1400 = vmatpush1.msra.mxu0 %v1377
  %1401 = vmatprep.subr.mxu0 0.0
  %1402 = vmatpush1.msra.mxu0 %v1378
  %1403 = vmatprep.subr.mxu0 0.0
  %1404 = vmatpush1.msra.mxu0 %v1379
  %1405 = vmatprep.subr.mxu0 0.0
  %1406 = vmatpush1.msra.mxu0 %v1380
  %1407 = vmatprep.subr.mxu0 0.0
  %1408 = vmatpush1.msra.mxu0 %v1381
  %1409 = vmatprep.subr.mxu0 0.0
  %1410 = vmatpush1.msra.mxu0 0.0
  %1411 = vmatprep.subr.mxu0 0.0
  %1412 = vmatpush1.msra.mxu0 0.0
  %1413 = vmatprep.subr.mxu0 0.0
  %1414 = vmatpush1.msra.mxu0 0.0
  %1415 = vmatprep.subr.mxu0 0.0
  %1416 = vmatpush1.msra.mxu0 0.0
  %1417 = vmatprep.subr.mxu0 0.0
  %1418 = vmatpush1.msra.mxu0 0.0
  %1419 = vmatprep.subr.mxu0 0.0
  %1420 = vmatpush1.msra.mxu0 0.0
  %1421 = vmatprep.subr.mxu0 0.0
  %1422 = vmatpush1.msra.mxu0 0.0
  %1423 = vmatprep.subr.mxu0 0.0
  %1424 = vmatpush1.msra.mxu0 0.0
  %1425 = vmatprep.subr.mxu0 0.0
  %1426 = vmatpush1.msra.mxu0 0.0
  %1427 = vmatprep.subr.mxu0 0.0
  %1428 = vmatpush1.msra.mxu0 0.0
  %1429 = vmatprep.subr.mxu0 0.0
  %1430 = vmatpush1.msra.mxu0 0.0
  %1431 = vmatprep.subr.mxu0 0.0
  %1432 = vmatpush1.msra.mxu0 0.0
  %1433 = vmatprep.subr.mxu0 0.0
  %1434 = vmatpush1.msra.mxu0 0.0
  %1435 = vmatprep.subr.mxu0 0.0
  %1436 = vmatpush1.msra.mxu0 0.0
  %1437 = vmatprep.subr.mxu0 0.0
  %1438 = vmatpush1.msra.mxu0 0.0
  %1439 = vmatprep.subr.mxu0 0.0
  %1440 = vmatpush1.msra.mxu0 0.0
  %1441 = vmatprep.subr.mxu0 0.0
  %1442 = vmatpush1.msra.mxu0 0.0
  %1443 = vmatprep.subr.mxu0 0.0
  %1444 = vmatpush1.msra.mxu0 0.0
  %1445 = vmatprep.subr.mxu0 0.0
  %1446 = vmatpush1.msra.mxu0 0.0
  %1447 = vmatprep.subr.mxu0 0.0
  %1448 = vmatpush1.msra.mxu0 0.0
  %1449 = vmatprep.subr.mxu0 0.0
  %1450 = vmatpush1.msra.mxu0 0.0
  %1451 = vmatprep.subr.mxu0 0.0
  %1452 = vmatpush1.msra.mxu0 0.0
  %1453 = vmatprep.subr.mxu0 0.0
  %1454 = vmatpush1.msra.mxu0 0.0
  %1455 = vmatprep.subr.mxu0 0.0
  %1456 = vmatpush1.msra.mxu0 0.0
  %1457 = vmatprep.mubr.f32.mxu0 0.0
  %1458 = vmatmul.mubr.f32.gmra.mrb[0].mxu0 %v1388
  %v1459 = vpop.f32.mrb[0].mxu0
  %v1460 = vadd.f32 %v1385, %v1459
  %v1461 = vpop.f32.mrb[0].mxu0
  %1462 = vmatprep.mubr.f32.mxu0 0.0
  %1463 = vmatmul.mubr.f32.gmra.mrb[0].mxu0 %v1391
  %v1464 = vpop.f32.mrb[0].mxu0
  %v1465 = vadd.f32 %v1385, %v1464
  %v1466 = vpop.f32.mrb[0].mxu0
  %1467 = vdwg.mxu0
  %v1468 = vadd.f32 %v1226, %v1460
  %v1469 = vadd.f32 %v1227, %v1465
  %v1470 = vsel %vm73, %v1468, 0.0
  %1471 = vadd.xlane.f32.xlu0 %v1470
  %v1472 = vpop.xlane.xlu0 %1471
  %v1473 = vsel %vm73, %v1469, 0.0
  %1474 = vadd.xlane.f32.xlu0 %v1473
  %v1475 = vpop.xlane.xlu0 %1474
  %v1476 = vmul.f32 %v1472, %v80
  %v1477 = vmul.f32 %v1475, %v80
  %v1478 = vsub.f32 %v1468, %v1476
  %v1479 = vsub.f32 %v1469, %v1477
  %v1480 = vmul.f32 %v1478, %v1478
  %v1481 = vmul.f32 %v1479, %v1479
  %v1482 = vsel %vm73, %v1480, 0.0
  %1483 = vadd.xlane.f32.xlu0 %v1482
  %v1484 = vpop.xlane.xlu0 %1483
  %v1485 = vsel %vm73, %v1481, 0.0
  %1486 = vadd.xlane.f32.xlu0 %v1485
  %v1487 = vpop.xlane.xlu0 %1486
  %v1488 = vmul.f32 %v1484, %v80
  %v1489 = vmul.f32 %v1487, %v80
  %v1490 = vadd.f32 %v1488, 1e-12
  %v1491 = vadd.f32 %v1489, 1e-12
  %v1492 = vrsqrt.pop %v1490
  %v1493 = vrsqrt.pop %v1491
  %v1494 = vmul.f32 %v1478, %v1492
  %v1495 = vmul.f32 %v1479, %v1493
  %v1496 = vlaneseq
  %v1497 = vshrl.u32 %v1496, 7
  %v1498 = vsub.s32 4, %v1497
  %v1499 = vrot.slane %v121, %v1498
  %v1500 = vmul.f32 %v1494, %v1499
  %v1501 = vmul.f32 %v1495, %v1499
  %v1502 = vlaneseq
  %v1503 = vshrl.u32 %v1502, 7
  %v1504 = vsub.s32 5, %v1503
  %v1505 = vrot.slane %v121, %v1504
  %v1506 = vadd.f32 %v1500, %v1505
  %v1507 = vadd.f32 %v1501, %v1505
  %v1508 = vld [vmem:[%s12] sm:$0xff]
  %v1509 = vld [vmem:[%s12 + $0x8] sm:$0xff]
  %v1510 = vld [vmem:[%s12 + $0x10] sm:$0xff]
  %v1511 = vld [vmem:[%s12 + $0x18] sm:$0xff]
  %v1512 = vld [vmem:[%s17] sm:$0x3f]
  %v1513 = vld [vmem:[%s11] sm:$0xff]
  %v1514 = vld [vmem:[%s11 + $0x8] sm:$0xff]
  %v1515 = vld [vmem:[%s11 + $0x10] sm:$0xff]
  %v1516 = vld [vmem:[%s11 + $0x18] sm:$0xff]
  %v1517 = vld [vmem:[%s15] sm:$0x1]
  %v1519 = vlaneseq
  %v1520 = vshrl.u32 %v1519, 7
  %v1521 = vsub.s32 0, %v1520
  %v1522 = vrot.slane %v1517, %v1521
  %v1525 = vsel %vm73, %v1506, 0
  %v1528 = vsel %vm73, %v1507, 0
  %1530 = vmatprep.subr.mxu0 0.0
  %1531 = vmatpush1.msra.mxu0 %v1513
  %1532 = vmatprep.subr.mxu0 0.0
  %1533 = vmatpush1.msra.mxu0 %v1514
  %1534 = vmatprep.subr.mxu0 0.0
  %1535 = vmatpush1.msra.mxu0 %v1515
  %1536 = vmatprep.subr.mxu0 0.0
  %1537 = vmatpush1.msra.mxu0 %v1516
  %1538 = vmatprep.subr.mxu0 0.0
  %1539 = vmatpush1.msra.mxu0 0.0
  %1540 = vmatprep.subr.mxu0 0.0
  %1541 = vmatpush1.msra.mxu0 0.0
  %1542 = vmatprep.subr.mxu0 0.0
  %1543 = vmatpush1.msra.mxu0 0.0
  %1544 = vmatprep.subr.mxu0 0.0
  %1545 = vmatpush1.msra.mxu0 0.0
  %1546 = vmatprep.subr.mxu0 0.0
  %1547 = vmatpush1.msra.mxu0 0.0
  %1548 = vmatprep.subr.mxu0 0.0
  %1549 = vmatpush1.msra.mxu0 0.0
  %1550 = vmatprep.subr.mxu0 0.0
  %1551 = vmatpush1.msra.mxu0 0.0
  %1552 = vmatprep.subr.mxu0 0.0
  %1553 = vmatpush1.msra.mxu0 0.0
  %1554 = vmatprep.subr.mxu0 0.0
  %1555 = vmatpush1.msra.mxu0 0.0
  %1556 = vmatprep.subr.mxu0 0.0
  %1557 = vmatpush1.msra.mxu0 0.0
  %1558 = vmatprep.subr.mxu0 0.0
  %1559 = vmatpush1.msra.mxu0 0.0
  %1560 = vmatprep.subr.mxu0 0.0
  %1561 = vmatpush1.msra.mxu0 0.0
  %1562 = vmatprep.subr.mxu0 0.0
  %1563 = vmatpush1.msra.mxu0 0.0
  %1564 = vmatprep.subr.mxu0 0.0
  %1565 = vmatpush1.msra.mxu0 0.0
  %1566 = vmatprep.subr.mxu0 0.0
  %1567 = vmatpush1.msra.mxu0 0.0
  %1568 = vmatprep.subr.mxu0 0.0
  %1569 = vmatpush1.msra.mxu0 0.0
  %1570 = vmatprep.subr.mxu0 0.0
  %1571 = vmatpush1.msra.mxu0 0.0
  %1572 = vmatprep.subr.mxu0 0.0
  %1573 = vmatpush1.msra.mxu0 0.0
  %1574 = vmatprep.subr.mxu0 0.0
  %1575 = vmatpush1.msra.mxu0 0.0
  %1576 = vmatprep.subr.mxu0 0.0
  %1577 = vmatpush1.msra.mxu0 0.0
  %1578 = vmatprep.subr.mxu0 0.0
  %1579 = vmatpush1.msra.mxu0 0.0
  %1580 = vmatprep.subr.mxu0 0.0
  %1581 = vmatpush1.msra.mxu0 0.0
  %1582 = vmatprep.subr.mxu0 0.0
  %1583 = vmatpush1.msra.mxu0 0.0
  %1584 = vmatprep.subr.mxu0 0.0
  %1585 = vmatpush1.msra.mxu0 0.0
  %1586 = vmatprep.subr.mxu0 0.0
  %1587 = vmatpush1.msra.mxu0 0.0
  %1588 = vmatprep.subr.mxu0 0.0
  %1589 = vmatpush1.msra.mxu0 0.0
  %1590 = vmatprep.subr.mxu0 0.0
  %1591 = vmatpush1.msra.mxu0 0.0
  %1592 = vmatprep.subr.mxu0 0.0
  %1593 = vmatpush1.msra.mxu0 0.0
  %1594 = vmatprep.mubr.f32.mxu0 0.0
  %1595 = vmatmul.mubr.f32.gmra.mrb[0].mxu0 %v1525
  %v1596 = vpop.f32.mrb[0].mxu0
  %v1597 = vadd.f32 %v1522, %v1596
  %v1598 = vpop.f32.mrb[0].mxu0
  %1599 = vmatprep.mubr.f32.mxu0 0.0
  %1600 = vmatmul.mubr.f32.gmra.mrb[0].mxu0 %v1528
  %v1601 = vpop.f32.mrb[0].mxu0
  %v1602 = vadd.f32 %v1522, %v1601
  %v1603 = vpop.f32.mrb[0].mxu0
  %1604 = vdwg.mxu0
  %1606 = vrot.lane.b32.xlu0 %v1597, 96
  %v1607 = vpop.permute.xlu0 %1606
  %v1608 = vsel %vm217, %v1597, 0
  %v1610 = vsel %vm217, %v1607, 0
  %1612 = vmatprep.subr.mxu0 0.0
  %1613 = vmatpush1.xpose.msra.mxu0 %v1610
  %1614 = vmatprep.subr.mxu0 0.0
  %1615 = vmatpush1.xpose.msra.mxu0 0.0
  %1616 = vmatprep.subr.mxu0 0.0
  %1617 = vmatpush1.xpose.msra.mxu0 0.0
  %1618 = vmatprep.subr.mxu0 0.0
  %1619 = vmatpush1.xpose.msra.mxu0 0.0
  %1620 = vmatprep.subr.mxu0 0.0
  %1621 = vmatpush1.xpose.msra.mxu0 0.0
  %1622 = vmatprep.subr.mxu0 0.0
  %1623 = vmatpush1.xpose.msra.mxu0 0.0
  %1624 = vmatprep.subr.mxu0 0.0
  %1625 = vmatpush1.xpose.msra.mxu0 0.0
  %1626 = vmatprep.subr.mxu0 0.0
  %1627 = vmatpush1.xpose.msra.mxu0 0.0
  %1628 = vmatprep.subr.mxu0 0.0
  %1629 = vmatpush1.xpose.msra.mxu0 0.0
  %1630 = vmatprep.subr.mxu0 0.0
  %1631 = vmatpush1.xpose.msra.mxu0 0.0
  %1632 = vmatprep.subr.mxu0 0.0
  %1633 = vmatpush1.xpose.msra.mxu0 0.0
  %1634 = vmatprep.subr.mxu0 0.0
  %1635 = vmatpush1.xpose.msra.mxu0 0.0
  %1636 = vmatprep.subr.mxu0 0.0
  %1637 = vmatpush1.xpose.msra.mxu0 0.0
  %1638 = vmatprep.subr.mxu0 0.0
  %1639 = vmatpush1.xpose.msra.mxu0 0.0
  %1640 = vmatprep.subr.mxu0 0.0
  %1641 = vmatpush1.xpose.msra.mxu0 0.0
  %1642 = vmatprep.subr.mxu0 0.0
  %1643 = vmatpush1.xpose.msra.mxu0 0.0
  %1644 = vmatprep.subr.mxu0 0.0
  %1645 = vmatpush1.xpose.msra.mxu0 0.0
  %1646 = vmatprep.subr.mxu0 0.0
  %1647 = vmatpush1.xpose.msra.mxu0 0.0
  %1648 = vmatprep.subr.mxu0 0.0
  %1649 = vmatpush1.xpose.msra.mxu0 0.0
  %1650 = vmatprep.subr.mxu0 0.0
  %1651 = vmatpush1.xpose.msra.mxu0 0.0
  %1652 = vmatprep.subr.mxu0 0.0
  %1653 = vmatpush1.xpose.msra.mxu0 0.0
  %1654 = vmatprep.subr.mxu0 0.0
  %1655 = vmatpush1.xpose.msra.mxu0 0.0
  %1656 = vmatprep.subr.mxu0 0.0
  %1657 = vmatpush1.xpose.msra.mxu0 0.0
  %1658 = vmatprep.subr.mxu0 0.0
  %1659 = vmatpush1.xpose.msra.mxu0 0.0
  %1660 = vmatprep.subr.mxu0 0.0
  %1661 = vmatpush1.xpose.msra.mxu0 0.0
  %1662 = vmatprep.subr.mxu0 0.0
  %1663 = vmatpush1.xpose.msra.mxu0 0.0
  %1664 = vmatprep.subr.mxu0 0.0
  %1665 = vmatpush1.xpose.msra.mxu0 0.0
  %1666 = vmatprep.subr.mxu0 0.0
  %1667 = vmatpush1.xpose.msra.mxu0 0.0
  %1668 = vmatprep.subr.mxu0 0.0
  %1669 = vmatpush1.xpose.msra.mxu0 0.0
  %1670 = vmatprep.subr.mxu0 0.0
  %1671 = vmatpush1.xpose.msra.mxu0 0.0
  %1672 = vmatprep.subr.mxu0 0.0
  %1673 = vmatpush1.xpose.msra.mxu0 0.0
  %1674 = vmatprep.subr.mxu0 0.0
  %1675 = vmatpush1.xpose.msra.mxu0 0.0
  %1676 = vmatprep.mubr.f32.mxu0 0.0
  %1677 = vmatmul.mubr.f32.gmra.mrb[0].mxu0 %v1608
  %v1678 = vpop.f32.mrb[0].mxu0
  %v1679 = vadd.f32 0.0, %v1678
  %v1680 = vpop.f32.mrb[0].mxu0
  %1681 = vdwg.mxu0
  %v1682 = vmul.f32 %v1679, 0.25
  %v1683 = vadd.f32 %v1682, %v296
  %v1684 = vsel %vm298, %v1683, -inf
  %1685 = vmax.xlane.f32.xlu0 %v1684
  %v1686 = vpop.xlane.xlu0 %1685
  %v1687 = vsub.f32 %v1683, %v1686
  %v1688 = vmul.f32 %v1687, 1.442695
  %v1689 = vpow.pop %v1688
  %v1690 = vsel %vm298, %v1689, 0.0
  %1691 = vadd.xlane.f32.xlu0 %v1690
  %v1692 = vpop.xlane.xlu0 %1691
  %v1693 = vrcp.pop %v1692
  %v1694 = vmul.f32 %v1689, %v1693
  %1695 = vrot.lane.b32.xlu0 %v1597, 64
  %v1696 = vpop.permute.xlu0 %1695
  %v1699 = vsel %vm298, %v1694, 0
  %1701 = vmatprep.subr.mxu0 0.0
  %1702 = vmatpush1.msra.mxu0 %v1696
  %1703 = vmatprep.subr.mxu0 0.0
  %1704 = vmatpush1.msra.mxu0 0.0
  %1705 = vmatprep.subr.mxu0 0.0
  %1706 = vmatpush1.msra.mxu0 0.0
  %1707 = vmatprep.subr.mxu0 0.0
  %1708 = vmatpush1.msra.mxu0 0.0
  %1709 = vmatprep.subr.mxu0 0.0
  %1710 = vmatpush1.msra.mxu0 0.0
  %1711 = vmatprep.subr.mxu0 0.0
  %1712 = vmatpush1.msra.mxu0 0.0
  %1713 = vmatprep.subr.mxu0 0.0
  %1714 = vmatpush1.msra.mxu0 0.0
  %1715 = vmatprep.subr.mxu0 0.0
  %1716 = vmatpush1.msra.mxu0 0.0
  %1717 = vmatprep.subr.mxu0 0.0
  %1718 = vmatpush1.msra.mxu0 0.0
  %1719 = vmatprep.subr.mxu0 0.0
  %1720 = vmatpush1.msra.mxu0 0.0
  %1721 = vmatprep.subr.mxu0 0.0
  %1722 = vmatpush1.msra.mxu0 0.0
  %1723 = vmatprep.subr.mxu0 0.0
  %1724 = vmatpush1.msra.mxu0 0.0
  %1725 = vmatprep.subr.mxu0 0.0
  %1726 = vmatpush1.msra.mxu0 0.0
  %1727 = vmatprep.subr.mxu0 0.0
  %1728 = vmatpush1.msra.mxu0 0.0
  %1729 = vmatprep.subr.mxu0 0.0
  %1730 = vmatpush1.msra.mxu0 0.0
  %1731 = vmatprep.subr.mxu0 0.0
  %1732 = vmatpush1.msra.mxu0 0.0
  %1733 = vmatprep.subr.mxu0 0.0
  %1734 = vmatpush1.msra.mxu0 0.0
  %1735 = vmatprep.subr.mxu0 0.0
  %1736 = vmatpush1.msra.mxu0 0.0
  %1737 = vmatprep.subr.mxu0 0.0
  %1738 = vmatpush1.msra.mxu0 0.0
  %1739 = vmatprep.subr.mxu0 0.0
  %1740 = vmatpush1.msra.mxu0 0.0
  %1741 = vmatprep.subr.mxu0 0.0
  %1742 = vmatpush1.msra.mxu0 0.0
  %1743 = vmatprep.subr.mxu0 0.0
  %1744 = vmatpush1.msra.mxu0 0.0
  %1745 = vmatprep.subr.mxu0 0.0
  %1746 = vmatpush1.msra.mxu0 0.0
  %1747 = vmatprep.subr.mxu0 0.0
  %1748 = vmatpush1.msra.mxu0 0.0
  %1749 = vmatprep.subr.mxu0 0.0
  %1750 = vmatpush1.msra.mxu0 0.0
  %1751 = vmatprep.subr.mxu0 0.0
  %1752 = vmatpush1.msra.mxu0 0.0
  %1753 = vmatprep.subr.mxu0 0.0
  %1754 = vmatpush1.msra.mxu0 0.0
  %1755 = vmatprep.subr.mxu0 0.0
  %1756 = vmatpush1.msra.mxu0 0.0
  %1757 = vmatprep.subr.mxu0 0.0
  %1758 = vmatpush1.msra.mxu0 0.0
  %1759 = vmatprep.subr.mxu0 0.0
  %1760 = vmatpush1.msra.mxu0 0.0
  %1761 = vmatprep.subr.mxu0 0.0
  %1762 = vmatpush1.msra.mxu0 0.0
  %1763 = vmatprep.subr.mxu0 0.0
  %1764 = vmatpush1.msra.mxu0 0.0
  %1765 = vmatprep.mubr.f32.mxu0 0.0
  %1766 = vmatmul.mubr.f32.gmra.mrb[0].mxu0 %v1699
  %v1767 = vpop.f32.mrb[0].mxu0
  %v1768 = vadd.f32 0.0, %v1767
  %v1769 = vpop.f32.mrb[0].mxu0
  %1770 = vdwg.mxu0
  %1771 = vrot.lane.b32.xlu0 %v1597, 112
  %v1772 = vpop.permute.xlu0 %1771
  %1773 = vrot.lane.b32.xlu0 %v1597, 80
  %v1774 = vpop.permute.xlu0 %1773
  %v1775 = vsel %vm217, %v1772, 0
  %v1777 = vsel %vm217, %v1774, 0
  %1779 = vmatprep.subr.mxu0 0.0
  %1780 = vmatpush1.xpose.msra.mxu0 %v1777
  %1781 = vmatprep.subr.mxu0 0.0
  %1782 = vmatpush1.xpose.msra.mxu0 0.0
  %1783 = vmatprep.subr.mxu0 0.0
  %1784 = vmatpush1.xpose.msra.mxu0 0.0
  %1785 = vmatprep.subr.mxu0 0.0
  %1786 = vmatpush1.xpose.msra.mxu0 0.0
  %1787 = vmatprep.subr.mxu0 0.0
  %1788 = vmatpush1.xpose.msra.mxu0 0.0
  %1789 = vmatprep.subr.mxu0 0.0
  %1790 = vmatpush1.xpose.msra.mxu0 0.0
  %1791 = vmatprep.subr.mxu0 0.0
  %1792 = vmatpush1.xpose.msra.mxu0 0.0
  %1793 = vmatprep.subr.mxu0 0.0
  %1794 = vmatpush1.xpose.msra.mxu0 0.0
  %1795 = vmatprep.subr.mxu0 0.0
  %1796 = vmatpush1.xpose.msra.mxu0 0.0
  %1797 = vmatprep.subr.mxu0 0.0
  %1798 = vmatpush1.xpose.msra.mxu0 0.0
  %1799 = vmatprep.subr.mxu0 0.0
  %1800 = vmatpush1.xpose.msra.mxu0 0.0
  %1801 = vmatprep.subr.mxu0 0.0
  %1802 = vmatpush1.xpose.msra.mxu0 0.0
  %1803 = vmatprep.subr.mxu0 0.0
  %1804 = vmatpush1.xpose.msra.mxu0 0.0
  %1805 = vmatprep.subr.mxu0 0.0
  %1806 = vmatpush1.xpose.msra.mxu0 0.0
  %1807 = vmatprep.subr.mxu0 0.0
  %1808 = vmatpush1.xpose.msra.mxu0 0.0
  %1809 = vmatprep.subr.mxu0 0.0
  %1810 = vmatpush1.xpose.msra.mxu0 0.0
  %1811 = vmatprep.subr.mxu0 0.0
  %1812 = vmatpush1.xpose.msra.mxu0 0.0
  %1813 = vmatprep.subr.mxu0 0.0
  %1814 = vmatpush1.xpose.msra.mxu0 0.0
  %1815 = vmatprep.subr.mxu0 0.0
  %1816 = vmatpush1.xpose.msra.mxu0 0.0
  %1817 = vmatprep.subr.mxu0 0.0
  %1818 = vmatpush1.xpose.msra.mxu0 0.0
  %1819 = vmatprep.subr.mxu0 0.0
  %1820 = vmatpush1.xpose.msra.mxu0 0.0
  %1821 = vmatprep.subr.mxu0 0.0
  %1822 = vmatpush1.xpose.msra.mxu0 0.0
  %1823 = vmatprep.subr.mxu0 0.0
  %1824 = vmatpush1.xpose.msra.mxu0 0.0
  %1825 = vmatprep.subr.mxu0 0.0
  %1826 = vmatpush1.xpose.msra.mxu0 0.0
  %1827 = vmatprep.subr.mxu0 0.0
  %1828 = vmatpush1.xpose.msra.mxu0 0.0
  %1829 = vmatprep.subr.mxu0 0.0
  %1830 = vmatpush1.xpose.msra.mxu0 0.0
  %1831 = vmatprep.subr.mxu0 0.0
  %1832 = vmatpush1.xpose.msra.mxu0 0.0
  %1833 = vmatprep.subr.mxu0 0.0
  %1834 = vmatpush1.xpose.msra.mxu0 0.0
  %1835 = vmatprep.subr.mxu0 0.0
  %1836 = vmatpush1.xpose.msra.mxu0 0.0
  %1837 = vmatprep.subr.mxu0 0.0
  %1838 = vmatpush1.xpose.msra.mxu0 0.0
  %1839 = vmatprep.subr.mxu0 0.0
  %1840 = vmatpush1.xpose.msra.mxu0 0.0
  %1841 = vmatprep.subr.mxu0 0.0
  %1842 = vmatpush1.xpose.msra.mxu0 0.0
  %1843 = vmatprep.mubr.f32.mxu0 0.0
  %1844 = vmatmul.mubr.f32.gmra.mrb[0].mxu0 %v1775
  %v1845 = vpop.f32.mrb[0].mxu0
  %v1846 = vadd.f32 0.0, %v1845
  %v1847 = vpop.f32.mrb[0].mxu0
  %1848 = vdwg.mxu0
  %v1849 = vmul.f32 %v1846, 0.25
  %v1850 = vadd.f32 %v1849, %v296
  %v1851 = vsel %vm298, %v1850, -inf
  %1852 = vmax.xlane.f32.xlu0 %v1851
  %v1853 = vpop.xlane.xlu0 %1852
  %v1854 = vsub.f32 %v1850, %v1853
  %v1855 = vmul.f32 %v1854, 1.442695
  %v1856 = vpow.pop %v1855
  %v1857 = vsel %vm298, %v1856, 0.0
  %1858 = vadd.xlane.f32.xlu0 %v1857
  %v1859 = vpop.xlane.xlu0 %1858
  %v1860 = vrcp.pop %v1859
  %v1861 = vmul.f32 %v1856, %v1860
  %1862 = vrot.lane.b32.xlu0 %v1597, 48
  %v1863 = vpop.permute.xlu0 %1862
  %v1866 = vsel %vm298, %v1861, 0
  %1868 = vmatprep.subr.mxu0 0.0
  %1869 = vmatpush1.msra.mxu0 %v1863
  %1870 = vmatprep.subr.mxu0 0.0
  %1871 = vmatpush1.msra.mxu0 0.0
  %1872 = vmatprep.subr.mxu0 0.0
  %1873 = vmatpush1.msra.mxu0 0.0
  %1874 = vmatprep.subr.mxu0 0.0
  %1875 = vmatpush1.msra.mxu0 0.0
  %1876 = vmatprep.subr.mxu0 0.0
  %1877 = vmatpush1.msra.mxu0 0.0
  %1878 = vmatprep.subr.mxu0 0.0
  %1879 = vmatpush1.msra.mxu0 0.0
  %1880 = vmatprep.subr.mxu0 0.0
  %1881 = vmatpush1.msra.mxu0 0.0
  %1882 = vmatprep.subr.mxu0 0.0
  %1883 = vmatpush1.msra.mxu0 0.0
  %1884 = vmatprep.subr.mxu0 0.0
  %1885 = vmatpush1.msra.mxu0 0.0
  %1886 = vmatprep.subr.mxu0 0.0
  %1887 = vmatpush1.msra.mxu0 0.0
  %1888 = vmatprep.subr.mxu0 0.0
  %1889 = vmatpush1.msra.mxu0 0.0
  %1890 = vmatprep.subr.mxu0 0.0
  %1891 = vmatpush1.msra.mxu0 0.0
  %1892 = vmatprep.subr.mxu0 0.0
  %1893 = vmatpush1.msra.mxu0 0.0
  %1894 = vmatprep.subr.mxu0 0.0
  %1895 = vmatpush1.msra.mxu0 0.0
  %1896 = vmatprep.subr.mxu0 0.0
  %1897 = vmatpush1.msra.mxu0 0.0
  %1898 = vmatprep.subr.mxu0 0.0
  %1899 = vmatpush1.msra.mxu0 0.0
  %1900 = vmatprep.subr.mxu0 0.0
  %1901 = vmatpush1.msra.mxu0 0.0
  %1902 = vmatprep.subr.mxu0 0.0
  %1903 = vmatpush1.msra.mxu0 0.0
  %1904 = vmatprep.subr.mxu0 0.0
  %1905 = vmatpush1.msra.mxu0 0.0
  %1906 = vmatprep.subr.mxu0 0.0
  %1907 = vmatpush1.msra.mxu0 0.0
  %1908 = vmatprep.subr.mxu0 0.0
  %1909 = vmatpush1.msra.mxu0 0.0
  %1910 = vmatprep.subr.mxu0 0.0
  %1911 = vmatpush1.msra.mxu0 0.0
  %1912 = vmatprep.subr.mxu0 0.0
  %1913 = vmatpush1.msra.mxu0 0.0
  %1914 = vmatprep.subr.mxu0 0.0
  %1915 = vmatpush1.msra.mxu0 0.0
  %1916 = vmatprep.subr.mxu0 0.0
  %1917 = vmatpush1.msra.mxu0 0.0
  %1918 = vmatprep.subr.mxu0 0.0
  %1919 = vmatpush1.msra.mxu0 0.0
  %1920 = vmatprep.subr.mxu0 0.0
  %1921 = vmatpush1.msra.mxu0 0.0
  %1922 = vmatprep.subr.mxu0 0.0
  %1923 = vmatpush1.msra.mxu0 0.0
  %1924 = vmatprep.subr.mxu0 0.0
  %1925 = vmatpush1.msra.mxu0 0.0
  %1926 = vmatprep.subr.mxu0 0.0
  %1927 = vmatpush1.msra.mxu0 0.0
  %1928 = vmatprep.subr.mxu0 0.0
  %1929 = vmatpush1.msra.mxu0 0.0
  %1930 = vmatprep.subr.mxu0 0.0
  %1931 = vmatpush1.msra.mxu0 0.0
  %1932 = vmatprep.mubr.f32.mxu0 0.0
  %1933 = vmatmul.mubr.f32.gmra.mrb[0].mxu0 %v1866
  %v1934 = vpop.f32.mrb[0].mxu0
  %v1935 = vadd.f32 0.0, %v1934
  %v1936 = vpop.f32.mrb[0].mxu0
  %1937 = vdwg.mxu0
  %v1939 = vsel %vm217, %v1935, 0
  %1941 = vmatprep.subr.mxu0 0.0
  %1942 = vmatpush1.msra.mxu0 %v1510
  %1943 = vmatprep.subr.mxu0 0.0
  %1944 = vmatpush1.msra.mxu0 %v1511
  %1945 = vmatprep.subr.mxu0 0.0
  %1946 = vmatpush1.msra.mxu0 0.0
  %1947 = vmatprep.subr.mxu0 0.0
  %1948 = vmatpush1.msra.mxu0 0.0
  %1949 = vmatprep.subr.mxu0 0.0
  %1950 = vmatpush1.msra.mxu0 0.0
  %1951 = vmatprep.subr.mxu0 0.0
  %1952 = vmatpush1.msra.mxu0 0.0
  %1953 = vmatprep.subr.mxu0 0.0
  %1954 = vmatpush1.msra.mxu0 0.0
  %1955 = vmatprep.subr.mxu0 0.0
  %1956 = vmatpush1.msra.mxu0 0.0
  %1957 = vmatprep.subr.mxu0 0.0
  %1958 = vmatpush1.msra.mxu0 0.0
  %1959 = vmatprep.subr.mxu0 0.0
  %1960 = vmatpush1.msra.mxu0 0.0
  %1961 = vmatprep.subr.mxu0 0.0
  %1962 = vmatpush1.msra.mxu0 0.0
  %1963 = vmatprep.subr.mxu0 0.0
  %1964 = vmatpush1.msra.mxu0 0.0
  %1965 = vmatprep.subr.mxu0 0.0
  %1966 = vmatpush1.msra.mxu0 0.0
  %1967 = vmatprep.subr.mxu0 0.0
  %1968 = vmatpush1.msra.mxu0 0.0
  %1969 = vmatprep.subr.mxu0 0.0
  %1970 = vmatpush1.msra.mxu0 0.0
  %1971 = vmatprep.subr.mxu0 0.0
  %1972 = vmatpush1.msra.mxu0 0.0
  %1973 = vmatprep.subr.mxu0 0.0
  %1974 = vmatpush1.msra.mxu0 0.0
  %1975 = vmatprep.subr.mxu0 0.0
  %1976 = vmatpush1.msra.mxu0 0.0
  %1977 = vmatprep.subr.mxu0 0.0
  %1978 = vmatpush1.msra.mxu0 0.0
  %1979 = vmatprep.subr.mxu0 0.0
  %1980 = vmatpush1.msra.mxu0 0.0
  %1981 = vmatprep.subr.mxu0 0.0
  %1982 = vmatpush1.msra.mxu0 0.0
  %1983 = vmatprep.subr.mxu0 0.0
  %1984 = vmatpush1.msra.mxu0 0.0
  %1985 = vmatprep.subr.mxu0 0.0
  %1986 = vmatpush1.msra.mxu0 0.0
  %1987 = vmatprep.subr.mxu0 0.0
  %1988 = vmatpush1.msra.mxu0 0.0
  %1989 = vmatprep.subr.mxu0 0.0
  %1990 = vmatpush1.msra.mxu0 0.0
  %1991 = vmatprep.subr.mxu0 0.0
  %1992 = vmatpush1.msra.mxu0 0.0
  %1993 = vmatprep.subr.mxu0 0.0
  %1994 = vmatpush1.msra.mxu0 0.0
  %1995 = vmatprep.subr.mxu0 0.0
  %1996 = vmatpush1.msra.mxu0 0.0
  %1997 = vmatprep.subr.mxu0 0.0
  %1998 = vmatpush1.msra.mxu0 0.0
  %1999 = vmatprep.subr.mxu0 0.0
  %2000 = vmatpush1.msra.mxu0 0.0
  %2001 = vmatprep.subr.mxu0 0.0
  %2002 = vmatpush1.msra.mxu0 0.0
  %2003 = vmatprep.subr.mxu0 0.0
  %2004 = vmatpush1.msra.mxu0 0.0
  %2005 = vmatprep.mubr.f32.mxu0 0.0
  %2006 = vmatmul.mubr.f32.gmra.mrb[0].mxu0 %v1939
  %v2007 = vpop.f32.mrb[0].mxu0
  %v2008 = vadd.f32 0.0, %v2007
  %v2009 = vpop.f32.mrb[0].mxu0
  %2010 = vdwg.mxu0
  %v2012 = vsel %vm217, %v1768, 0
  %2014 = vmatprep.subr.mxu0 0.0
  %2015 = vmatpush1.msra.mxu0 %v1508
  %2016 = vmatprep.subr.mxu0 0.0
  %2017 = vmatpush1.msra.mxu0 %v1509
  %2018 = vmatprep.subr.mxu0 0.0
  %2019 = vmatpush1.msra.mxu0 0.0
  %2020 = vmatprep.subr.mxu0 0.0
  %2021 = vmatpush1.msra.mxu0 0.0
  %2022 = vmatprep.subr.mxu0 0.0
  %2023 = vmatpush1.msra.mxu0 0.0
  %2024 = vmatprep.subr.mxu0 0.0
  %2025 = vmatpush1.msra.mxu0 0.0
  %2026 = vmatprep.subr.mxu0 0.0
  %2027 = vmatpush1.msra.mxu0 0.0
  %2028 = vmatprep.subr.mxu0 0.0
  %2029 = vmatpush1.msra.mxu0 0.0
  %2030 = vmatprep.subr.mxu0 0.0
  %2031 = vmatpush1.msra.mxu0 0.0
  %2032 = vmatprep.subr.mxu0 0.0
  %2033 = vmatpush1.msra.mxu0 0.0
  %2034 = vmatprep.subr.mxu0 0.0
  %2035 = vmatpush1.msra.mxu0 0.0
  %2036 = vmatprep.subr.mxu0 0.0
  %2037 = vmatpush1.msra.mxu0 0.0
  %2038 = vmatprep.subr.mxu0 0.0
  %2039 = vmatpush1.msra.mxu0 0.0
  %2040 = vmatprep.subr.mxu0 0.0
  %2041 = vmatpush1.msra.mxu0 0.0
  %2042 = vmatprep.subr.mxu0 0.0
  %2043 = vmatpush1.msra.mxu0 0.0
  %2044 = vmatprep.subr.mxu0 0.0
  %2045 = vmatpush1.msra.mxu0 0.0
  %2046 = vmatprep.subr.mxu0 0.0
  %2047 = vmatpush1.msra.mxu0 0.0
  %2048 = vmatprep.subr.mxu0 0.0
  %2049 = vmatpush1.msra.mxu0 0.0
  %2050 = vmatprep.subr.mxu0 0.0
  %2051 = vmatpush1.msra.mxu0 0.0
  %2052 = vmatprep.subr.mxu0 0.0
  %2053 = vmatpush1.msra.mxu0 0.0
  %2054 = vmatprep.subr.mxu0 0.0
  %2055 = vmatpush1.msra.mxu0 0.0
  %2056 = vmatprep.subr.mxu0 0.0
  %2057 = vmatpush1.msra.mxu0 0.0
  %2058 = vmatprep.subr.mxu0 0.0
  %2059 = vmatpush1.msra.mxu0 0.0
  %2060 = vmatprep.subr.mxu0 0.0
  %2061 = vmatpush1.msra.mxu0 0.0
  %2062 = vmatprep.subr.mxu0 0.0
  %2063 = vmatpush1.msra.mxu0 0.0
  %2064 = vmatprep.subr.mxu0 0.0
  %2065 = vmatpush1.msra.mxu0 0.0
  %2066 = vmatprep.subr.mxu0 0.0
  %2067 = vmatpush1.msra.mxu0 0.0
  %2068 = vmatprep.subr.mxu0 0.0
  %2069 = vmatpush1.msra.mxu0 0.0
  %2070 = vmatprep.subr.mxu0 0.0
  %2071 = vmatpush1.msra.mxu0 0.0
  %2072 = vmatprep.subr.mxu0 0.0
  %2073 = vmatpush1.msra.mxu0 0.0
  %2074 = vmatprep.subr.mxu0 0.0
  %2075 = vmatpush1.msra.mxu0 0.0
  %2076 = vmatprep.subr.mxu0 0.0
  %2077 = vmatpush1.msra.mxu0 0.0
  %2078 = vmatprep.mubr.f32.mxu0 0.0
  %2079 = vmatmul.mubr.f32.gmra.mrb[0].mxu0 %v2012
  %v2080 = vpop.f32.mrb[0].mxu0
  %v2081 = vadd.f32 %v2008, %v2080
  %v2082 = vpop.f32.mrb[0].mxu0
  %2083 = vdwg.mxu0
  %2085 = vrot.lane.b32.xlu0 %v1602, 96
  %v2086 = vpop.permute.xlu0 %2085
  %v2087 = vsel %vm217, %v1602, 0
  %v2089 = vsel %vm217, %v2086, 0
  %2091 = vmatprep.subr.mxu0 0.0
  %2092 = vmatpush1.xpose.msra.mxu0 %v2089
  %2093 = vmatprep.subr.mxu0 0.0
  %2094 = vmatpush1.xpose.msra.mxu0 0.0
  %2095 = vmatprep.subr.mxu0 0.0
  %2096 = vmatpush1.xpose.msra.mxu0 0.0
  %2097 = vmatprep.subr.mxu0 0.0
  %2098 = vmatpush1.xpose.msra.mxu0 0.0
  %2099 = vmatprep.subr.mxu0 0.0
  %2100 = vmatpush1.xpose.msra.mxu0 0.0
  %2101 = vmatprep.subr.mxu0 0.0
  %2102 = vmatpush1.xpose.msra.mxu0 0.0
  %2103 = vmatprep.subr.mxu0 0.0
  %2104 = vmatpush1.xpose.msra.mxu0 0.0
  %2105 = vmatprep.subr.mxu0 0.0
  %2106 = vmatpush1.xpose.msra.mxu0 0.0
  %2107 = vmatprep.subr.mxu0 0.0
  %2108 = vmatpush1.xpose.msra.mxu0 0.0
  %2109 = vmatprep.subr.mxu0 0.0
  %2110 = vmatpush1.xpose.msra.mxu0 0.0
  %2111 = vmatprep.subr.mxu0 0.0
  %2112 = vmatpush1.xpose.msra.mxu0 0.0
  %2113 = vmatprep.subr.mxu0 0.0
  %2114 = vmatpush1.xpose.msra.mxu0 0.0
  %2115 = vmatprep.subr.mxu0 0.0
  %2116 = vmatpush1.xpose.msra.mxu0 0.0
  %2117 = vmatprep.subr.mxu0 0.0
  %2118 = vmatpush1.xpose.msra.mxu0 0.0
  %2119 = vmatprep.subr.mxu0 0.0
  %2120 = vmatpush1.xpose.msra.mxu0 0.0
  %2121 = vmatprep.subr.mxu0 0.0
  %2122 = vmatpush1.xpose.msra.mxu0 0.0
  %2123 = vmatprep.subr.mxu0 0.0
  %2124 = vmatpush1.xpose.msra.mxu0 0.0
  %2125 = vmatprep.subr.mxu0 0.0
  %2126 = vmatpush1.xpose.msra.mxu0 0.0
  %2127 = vmatprep.subr.mxu0 0.0
  %2128 = vmatpush1.xpose.msra.mxu0 0.0
  %2129 = vmatprep.subr.mxu0 0.0
  %2130 = vmatpush1.xpose.msra.mxu0 0.0
  %2131 = vmatprep.subr.mxu0 0.0
  %2132 = vmatpush1.xpose.msra.mxu0 0.0
  %2133 = vmatprep.subr.mxu0 0.0
  %2134 = vmatpush1.xpose.msra.mxu0 0.0
  %2135 = vmatprep.subr.mxu0 0.0
  %2136 = vmatpush1.xpose.msra.mxu0 0.0
  %2137 = vmatprep.subr.mxu0 0.0
  %2138 = vmatpush1.xpose.msra.mxu0 0.0
  %2139 = vmatprep.subr.mxu0 0.0
  %2140 = vmatpush1.xpose.msra.mxu0 0.0
  %2141 = vmatprep.subr.mxu0 0.0
  %2142 = vmatpush1.xpose.msra.mxu0 0.0
  %2143 = vmatprep.subr.mxu0 0.0
  %2144 = vmatpush1.xpose.msra.mxu0 0.0
  %2145 = vmatprep.subr.mxu0 0.0
  %2146 = vmatpush1.xpose.msra.mxu0 0.0
  %2147 = vmatprep.subr.mxu0 0.0
  %2148 = vmatpush1.xpose.msra.mxu0 0.0
  %2149 = vmatprep.subr.mxu0 0.0
  %2150 = vmatpush1.xpose.msra.mxu0 0.0
  %2151 = vmatprep.subr.mxu0 0.0
  %2152 = vmatpush1.xpose.msra.mxu0 0.0
  %2153 = vmatprep.subr.mxu0 0.0
  %2154 = vmatpush1.xpose.msra.mxu0 0.0
  %2155 = vmatprep.mubr.f32.mxu0 0.0
  %2156 = vmatmul.mubr.f32.gmra.mrb[0].mxu0 %v2087
  %v2157 = vpop.f32.mrb[0].mxu0
  %v2158 = vadd.f32 0.0, %v2157
  %v2159 = vpop.f32.mrb[0].mxu0
  %2160 = vdwg.mxu0
  %v2161 = vmul.f32 %v2158, 0.25
  %v2162 = vadd.f32 %v2161, %v780
  %v2163 = vsel %vm298, %v2162, -inf
  %2164 = vmax.xlane.f32.xlu0 %v2163
  %v2165 = vpop.xlane.xlu0 %2164
  %v2166 = vsub.f32 %v2162, %v2165
  %v2167 = vmul.f32 %v2166, 1.442695
  %v2168 = vpow.pop %v2167
  %v2169 = vsel %vm298, %v2168, 0.0
  %2170 = vadd.xlane.f32.xlu0 %v2169
  %v2171 = vpop.xlane.xlu0 %2170
  %v2172 = vrcp.pop %v2171
  %v2173 = vmul.f32 %v2168, %v2172
  %2174 = vrot.lane.b32.xlu0 %v1602, 64
  %v2175 = vpop.permute.xlu0 %2174
  %v2178 = vsel %vm298, %v2173, 0
  %2180 = vmatprep.subr.mxu0 0.0
  %2181 = vmatpush1.msra.mxu0 %v2175
  %2182 = vmatprep.subr.mxu0 0.0
  %2183 = vmatpush1.msra.mxu0 0.0
  %2184 = vmatprep.subr.mxu0 0.0
  %2185 = vmatpush1.msra.mxu0 0.0
  %2186 = vmatprep.subr.mxu0 0.0
  %2187 = vmatpush1.msra.mxu0 0.0
  %2188 = vmatprep.subr.mxu0 0.0
  %2189 = vmatpush1.msra.mxu0 0.0
  %2190 = vmatprep.subr.mxu0 0.0
  %2191 = vmatpush1.msra.mxu0 0.0
  %2192 = vmatprep.subr.mxu0 0.0
  %2193 = vmatpush1.msra.mxu0 0.0
  %2194 = vmatprep.subr.mxu0 0.0
  %2195 = vmatpush1.msra.mxu0 0.0
  %2196 = vmatprep.subr.mxu0 0.0
  %2197 = vmatpush1.msra.mxu0 0.0
  %2198 = vmatprep.subr.mxu0 0.0
  %2199 = vmatpush1.msra.mxu0 0.0
  %2200 = vmatprep.subr.mxu0 0.0
  %2201 = vmatpush1.msra.mxu0 0.0
  %2202 = vmatprep.subr.mxu0 0.0
  %2203 = vmatpush1.msra.mxu0 0.0
  %2204 = vmatprep.subr.mxu0 0.0
  %2205 = vmatpush1.msra.mxu0 0.0
  %2206 = vmatprep.subr.mxu0 0.0
  %2207 = vmatpush1.msra.mxu0 0.0
  %2208 = vmatprep.subr.mxu0 0.0
  %2209 = vmatpush1.msra.mxu0 0.0
  %2210 = vmatprep.subr.mxu0 0.0
  %2211 = vmatpush1.msra.mxu0 0.0
  %2212 = vmatprep.subr.mxu0 0.0
  %2213 = vmatpush1.msra.mxu0 0.0
  %2214 = vmatprep.subr.mxu0 0.0
  %2215 = vmatpush1.msra.mxu0 0.0
  %2216 = vmatprep.subr.mxu0 0.0
  %2217 = vmatpush1.msra.mxu0 0.0
  %2218 = vmatprep.subr.mxu0 0.0
  %2219 = vmatpush1.msra.mxu0 0.0
  %2220 = vmatprep.subr.mxu0 0.0
  %2221 = vmatpush1.msra.mxu0 0.0
  %2222 = vmatprep.subr.mxu0 0.0
  %2223 = vmatpush1.msra.mxu0 0.0
  %2224 = vmatprep.subr.mxu0 0.0
  %2225 = vmatpush1.msra.mxu0 0.0
  %2226 = vmatprep.subr.mxu0 0.0
  %2227 = vmatpush1.msra.mxu0 0.0
  %2228 = vmatprep.subr.mxu0 0.0
  %2229 = vmatpush1.msra.mxu0 0.0
  %2230 = vmatprep.subr.mxu0 0.0
  %2231 = vmatpush1.msra.mxu0 0.0
  %2232 = vmatprep.subr.mxu0 0.0
  %2233 = vmatpush1.msra.mxu0 0.0
  %2234 = vmatprep.subr.mxu0 0.0
  %2235 = vmatpush1.msra.mxu0 0.0
  %2236 = vmatprep.subr.mxu0 0.0
  %2237 = vmatpush1.msra.mxu0 0.0
  %2238 = vmatprep.subr.mxu0 0.0
  %2239 = vmatpush1.msra.mxu0 0.0
  %2240 = vmatprep.subr.mxu0 0.0
  %2241 = vmatpush1.msra.mxu0 0.0
  %2242 = vmatprep.subr.mxu0 0.0
  %2243 = vmatpush1.msra.mxu0 0.0
  %2244 = vmatprep.mubr.f32.mxu0 0.0
  %2245 = vmatmul.mubr.f32.gmra.mrb[0].mxu0 %v2178
  %v2246 = vpop.f32.mrb[0].mxu0
  %v2247 = vadd.f32 0.0, %v2246
  %v2248 = vpop.f32.mrb[0].mxu0
  %2249 = vdwg.mxu0
  %2250 = vrot.lane.b32.xlu0 %v1602, 112
  %v2251 = vpop.permute.xlu0 %2250
  %2252 = vrot.lane.b32.xlu0 %v1602, 80
  %v2253 = vpop.permute.xlu0 %2252
  %v2254 = vsel %vm217, %v2251, 0
  %v2256 = vsel %vm217, %v2253, 0
  %2258 = vmatprep.subr.mxu0 0.0
  %2259 = vmatpush1.xpose.msra.mxu0 %v2256
  %2260 = vmatprep.subr.mxu0 0.0
  %2261 = vmatpush1.xpose.msra.mxu0 0.0
  %2262 = vmatprep.subr.mxu0 0.0
  %2263 = vmatpush1.xpose.msra.mxu0 0.0
  %2264 = vmatprep.subr.mxu0 0.0
  %2265 = vmatpush1.xpose.msra.mxu0 0.0
  %2266 = vmatprep.subr.mxu0 0.0
  %2267 = vmatpush1.xpose.msra.mxu0 0.0
  %2268 = vmatprep.subr.mxu0 0.0
  %2269 = vmatpush1.xpose.msra.mxu0 0.0
  %2270 = vmatprep.subr.mxu0 0.0
  %2271 = vmatpush1.xpose.msra.mxu0 0.0
  %2272 = vmatprep.subr.mxu0 0.0
  %2273 = vmatpush1.xpose.msra.mxu0 0.0
  %2274 = vmatprep.subr.mxu0 0.0
  %2275 = vmatpush1.xpose.msra.mxu0 0.0
  %2276 = vmatprep.subr.mxu0 0.0
  %2277 = vmatpush1.xpose.msra.mxu0 0.0
  %2278 = vmatprep.subr.mxu0 0.0
  %2279 = vmatpush1.xpose.msra.mxu0 0.0
  %2280 = vmatprep.subr.mxu0 0.0
  %2281 = vmatpush1.xpose.msra.mxu0 0.0
  %2282 = vmatprep.subr.mxu0 0.0
  %2283 = vmatpush1.xpose.msra.mxu0 0.0
  %2284 = vmatprep.subr.mxu0 0.0
  %2285 = vmatpush1.xpose.msra.mxu0 0.0
  %2286 = vmatprep.subr.mxu0 0.0
  %2287 = vmatpush1.xpose.msra.mxu0 0.0
  %2288 = vmatprep.subr.mxu0 0.0
  %2289 = vmatpush1.xpose.msra.mxu0 0.0
  %2290 = vmatprep.subr.mxu0 0.0
  %2291 = vmatpush1.xpose.msra.mxu0 0.0
  %2292 = vmatprep.subr.mxu0 0.0
  %2293 = vmatpush1.xpose.msra.mxu0 0.0
  %2294 = vmatprep.subr.mxu0 0.0
  %2295 = vmatpush1.xpose.msra.mxu0 0.0
  %2296 = vmatprep.subr.mxu0 0.0
  %2297 = vmatpush1.xpose.msra.mxu0 0.0
  %2298 = vmatprep.subr.mxu0 0.0
  %2299 = vmatpush1.xpose.msra.mxu0 0.0
  %2300 = vmatprep.subr.mxu0 0.0
  %2301 = vmatpush1.xpose.msra.mxu0 0.0
  %2302 = vmatprep.subr.mxu0 0.0
  %2303 = vmatpush1.xpose.msra.mxu0 0.0
  %2304 = vmatprep.subr.mxu0 0.0
  %2305 = vmatpush1.xpose.msra.mxu0 0.0
  %2306 = vmatprep.subr.mxu0 0.0
  %2307 = vmatpush1.xpose.msra.mxu0 0.0
  %2308 = vmatprep.subr.mxu0 0.0
  %2309 = vmatpush1.xpose.msra.mxu0 0.0
  %2310 = vmatprep.subr.mxu0 0.0
  %2311 = vmatpush1.xpose.msra.mxu0 0.0
  %2312 = vmatprep.subr.mxu0 0.0
  %2313 = vmatpush1.xpose.msra.mxu0 0.0
  %2314 = vmatprep.subr.mxu0 0.0
  %2315 = vmatpush1.xpose.msra.mxu0 0.0
  %2316 = vmatprep.subr.mxu0 0.0
  %2317 = vmatpush1.xpose.msra.mxu0 0.0
  %2318 = vmatprep.subr.mxu0 0.0
  %2319 = vmatpush1.xpose.msra.mxu0 0.0
  %2320 = vmatprep.subr.mxu0 0.0
  %2321 = vmatpush1.xpose.msra.mxu0 0.0
  %2322 = vmatprep.mubr.f32.mxu0 0.0
  %2323 = vmatmul.mubr.f32.gmra.mrb[0].mxu0 %v2254
  %v2324 = vpop.f32.mrb[0].mxu0
  %v2325 = vadd.f32 0.0, %v2324
  %v2326 = vpop.f32.mrb[0].mxu0
  %2327 = vdwg.mxu0
  %v2328 = vmul.f32 %v2325, 0.25
  %v2329 = vadd.f32 %v2328, %v780
  %v2330 = vsel %vm298, %v2329, -inf
  %2331 = vmax.xlane.f32.xlu0 %v2330
  %v2332 = vpop.xlane.xlu0 %2331
  %v2333 = vsub.f32 %v2329, %v2332
  %v2334 = vmul.f32 %v2333, 1.442695
  %v2335 = vpow.pop %v2334
  %v2336 = vsel %vm298, %v2335, 0.0
  %2337 = vadd.xlane.f32.xlu0 %v2336
  %v2338 = vpop.xlane.xlu0 %2337
  %v2339 = vrcp.pop %v2338
  %v2340 = vmul.f32 %v2335, %v2339
  %2341 = vrot.lane.b32.xlu0 %v1602, 48
  %v2342 = vpop.permute.xlu0 %2341
  %v2345 = vsel %vm298, %v2340, 0
  %2347 = vmatprep.subr.mxu0 0.0
  %2348 = vmatpush1.msra.mxu0 %v2342
  %2349 = vmatprep.subr.mxu0 0.0
  %2350 = vmatpush1.msra.mxu0 0.0
  %2351 = vmatprep.subr.mxu0 0.0
  %2352 = vmatpush1.msra.mxu0 0.0
  %2353 = vmatprep.subr.mxu0 0.0
  %2354 = vmatpush1.msra.mxu0 0.0
  %2355 = vmatprep.subr.mxu0 0.0
  %2356 = vmatpush1.msra.mxu0 0.0
  %2357 = vmatprep.subr.mxu0 0.0
  %2358 = vmatpush1.msra.mxu0 0.0
  %2359 = vmatprep.subr.mxu0 0.0
  %2360 = vmatpush1.msra.mxu0 0.0
  %2361 = vmatprep.subr.mxu0 0.0
  %2362 = vmatpush1.msra.mxu0 0.0
  %2363 = vmatprep.subr.mxu0 0.0
  %2364 = vmatpush1.msra.mxu0 0.0
  %2365 = vmatprep.subr.mxu0 0.0
  %2366 = vmatpush1.msra.mxu0 0.0
  %2367 = vmatprep.subr.mxu0 0.0
  %2368 = vmatpush1.msra.mxu0 0.0
  %2369 = vmatprep.subr.mxu0 0.0
  %2370 = vmatpush1.msra.mxu0 0.0
  %2371 = vmatprep.subr.mxu0 0.0
  %2372 = vmatpush1.msra.mxu0 0.0
  %2373 = vmatprep.subr.mxu0 0.0
  %2374 = vmatpush1.msra.mxu0 0.0
  %2375 = vmatprep.subr.mxu0 0.0
  %2376 = vmatpush1.msra.mxu0 0.0
  %2377 = vmatprep.subr.mxu0 0.0
  %2378 = vmatpush1.msra.mxu0 0.0
  %2379 = vmatprep.subr.mxu0 0.0
  %2380 = vmatpush1.msra.mxu0 0.0
  %2381 = vmatprep.subr.mxu0 0.0
  %2382 = vmatpush1.msra.mxu0 0.0
  %2383 = vmatprep.subr.mxu0 0.0
  %2384 = vmatpush1.msra.mxu0 0.0
  %2385 = vmatprep.subr.mxu0 0.0
  %2386 = vmatpush1.msra.mxu0 0.0
  %2387 = vmatprep.subr.mxu0 0.0
  %2388 = vmatpush1.msra.mxu0 0.0
  %2389 = vmatprep.subr.mxu0 0.0
  %2390 = vmatpush1.msra.mxu0 0.0
  %2391 = vmatprep.subr.mxu0 0.0
  %2392 = vmatpush1.msra.mxu0 0.0
  %2393 = vmatprep.subr.mxu0 0.0
  %2394 = vmatpush1.msra.mxu0 0.0
  %2395 = vmatprep.subr.mxu0 0.0
  %2396 = vmatpush1.msra.mxu0 0.0
  %2397 = vmatprep.subr.mxu0 0.0
  %2398 = vmatpush1.msra.mxu0 0.0
  %2399 = vmatprep.subr.mxu0 0.0
  %2400 = vmatpush1.msra.mxu0 0.0
  %2401 = vmatprep.subr.mxu0 0.0
  %2402 = vmatpush1.msra.mxu0 0.0
  %2403 = vmatprep.subr.mxu0 0.0
  %2404 = vmatpush1.msra.mxu0 0.0
  %2405 = vmatprep.subr.mxu0 0.0
  %2406 = vmatpush1.msra.mxu0 0.0
  %2407 = vmatprep.subr.mxu0 0.0
  %2408 = vmatpush1.msra.mxu0 0.0
  %2409 = vmatprep.subr.mxu0 0.0
  %2410 = vmatpush1.msra.mxu0 0.0
  %2411 = vmatprep.mubr.f32.mxu0 0.0
  %2412 = vmatmul.mubr.f32.gmra.mrb[0].mxu0 %v2345
  %v2413 = vpop.f32.mrb[0].mxu0
  %v2414 = vadd.f32 0.0, %v2413
  %v2415 = vpop.f32.mrb[0].mxu0
  %2416 = vdwg.mxu0
  %v2418 = vsel %vm217, %v2414, 0
  %2420 = vmatprep.subr.mxu0 0.0
  %2421 = vmatpush1.msra.mxu0 %v1510
  %2422 = vmatprep.subr.mxu0 0.0
  %2423 = vmatpush1.msra.mxu0 %v1511
  %2424 = vmatprep.subr.mxu0 0.0
  %2425 = vmatpush1.msra.mxu0 0.0
  %2426 = vmatprep.subr.mxu0 0.0
  %2427 = vmatpush1.msra.mxu0 0.0
  %2428 = vmatprep.subr.mxu0 0.0
  %2429 = vmatpush1.msra.mxu0 0.0
  %2430 = vmatprep.subr.mxu0 0.0
  %2431 = vmatpush1.msra.mxu0 0.0
  %2432 = vmatprep.subr.mxu0 0.0
  %2433 = vmatpush1.msra.mxu0 0.0
  %2434 = vmatprep.subr.mxu0 0.0
  %2435 = vmatpush1.msra.mxu0 0.0
  %2436 = vmatprep.subr.mxu0 0.0
  %2437 = vmatpush1.msra.mxu0 0.0
  %2438 = vmatprep.subr.mxu0 0.0
  %2439 = vmatpush1.msra.mxu0 0.0
  %2440 = vmatprep.subr.mxu0 0.0
  %2441 = vmatpush1.msra.mxu0 0.0
  %2442 = vmatprep.subr.mxu0 0.0
  %2443 = vmatpush1.msra.mxu0 0.0
  %2444 = vmatprep.subr.mxu0 0.0
  %2445 = vmatpush1.msra.mxu0 0.0
  %2446 = vmatprep.subr.mxu0 0.0
  %2447 = vmatpush1.msra.mxu0 0.0
  %2448 = vmatprep.subr.mxu0 0.0
  %2449 = vmatpush1.msra.mxu0 0.0
  %2450 = vmatprep.subr.mxu0 0.0
  %2451 = vmatpush1.msra.mxu0 0.0
  %2452 = vmatprep.subr.mxu0 0.0
  %2453 = vmatpush1.msra.mxu0 0.0
  %2454 = vmatprep.subr.mxu0 0.0
  %2455 = vmatpush1.msra.mxu0 0.0
  %2456 = vmatprep.subr.mxu0 0.0
  %2457 = vmatpush1.msra.mxu0 0.0
  %2458 = vmatprep.subr.mxu0 0.0
  %2459 = vmatpush1.msra.mxu0 0.0
  %2460 = vmatprep.subr.mxu0 0.0
  %2461 = vmatpush1.msra.mxu0 0.0
  %2462 = vmatprep.subr.mxu0 0.0
  %2463 = vmatpush1.msra.mxu0 0.0
  %2464 = vmatprep.subr.mxu0 0.0
  %2465 = vmatpush1.msra.mxu0 0.0
  %2466 = vmatprep.subr.mxu0 0.0
  %2467 = vmatpush1.msra.mxu0 0.0
  %2468 = vmatprep.subr.mxu0 0.0
  %2469 = vmatpush1.msra.mxu0 0.0
  %2470 = vmatprep.subr.mxu0 0.0
  %2471 = vmatpush1.msra.mxu0 0.0
  %2472 = vmatprep.subr.mxu0 0.0
  %2473 = vmatpush1.msra.mxu0 0.0
  %2474 = vmatprep.subr.mxu0 0.0
  %2475 = vmatpush1.msra.mxu0 0.0
  %2476 = vmatprep.subr.mxu0 0.0
  %2477 = vmatpush1.msra.mxu0 0.0
  %2478 = vmatprep.subr.mxu0 0.0
  %2479 = vmatpush1.msra.mxu0 0.0
  %2480 = vmatprep.subr.mxu0 0.0
  %2481 = vmatpush1.msra.mxu0 0.0
  %2482 = vmatprep.subr.mxu0 0.0
  %2483 = vmatpush1.msra.mxu0 0.0
  %2484 = vmatprep.mubr.f32.mxu0 0.0
  %2485 = vmatmul.mubr.f32.gmra.mrb[0].mxu0 %v2418
  %v2486 = vpop.f32.mrb[0].mxu0
  %v2487 = vadd.f32 0.0, %v2486
  %v2488 = vpop.f32.mrb[0].mxu0
  %2489 = vdwg.mxu0
  %v2491 = vsel %vm217, %v2247, 0
  %2493 = vmatprep.subr.mxu0 0.0
  %2494 = vmatpush1.msra.mxu0 %v1508
  %2495 = vmatprep.subr.mxu0 0.0
  %2496 = vmatpush1.msra.mxu0 %v1509
  %2497 = vmatprep.subr.mxu0 0.0
  %2498 = vmatpush1.msra.mxu0 0.0
  %2499 = vmatprep.subr.mxu0 0.0
  %2500 = vmatpush1.msra.mxu0 0.0
  %2501 = vmatprep.subr.mxu0 0.0
  %2502 = vmatpush1.msra.mxu0 0.0
  %2503 = vmatprep.subr.mxu0 0.0
  %2504 = vmatpush1.msra.mxu0 0.0
  %2505 = vmatprep.subr.mxu0 0.0
  %2506 = vmatpush1.msra.mxu0 0.0
  %2507 = vmatprep.subr.mxu0 0.0
  %2508 = vmatpush1.msra.mxu0 0.0
  %2509 = vmatprep.subr.mxu0 0.0
  %2510 = vmatpush1.msra.mxu0 0.0
  %2511 = vmatprep.subr.mxu0 0.0
  %2512 = vmatpush1.msra.mxu0 0.0
  %2513 = vmatprep.subr.mxu0 0.0
  %2514 = vmatpush1.msra.mxu0 0.0
  %2515 = vmatprep.subr.mxu0 0.0
  %2516 = vmatpush1.msra.mxu0 0.0
  %2517 = vmatprep.subr.mxu0 0.0
  %2518 = vmatpush1.msra.mxu0 0.0
  %2519 = vmatprep.subr.mxu0 0.0
  %2520 = vmatpush1.msra.mxu0 0.0
  %2521 = vmatprep.subr.mxu0 0.0
  %2522 = vmatpush1.msra.mxu0 0.0
  %2523 = vmatprep.subr.mxu0 0.0
  %2524 = vmatpush1.msra.mxu0 0.0
  %2525 = vmatprep.subr.mxu0 0.0
  %2526 = vmatpush1.msra.mxu0 0.0
  %2527 = vmatprep.subr.mxu0 0.0
  %2528 = vmatpush1.msra.mxu0 0.0
  %2529 = vmatprep.subr.mxu0 0.0
  %2530 = vmatpush1.msra.mxu0 0.0
  %2531 = vmatprep.subr.mxu0 0.0
  %2532 = vmatpush1.msra.mxu0 0.0
  %2533 = vmatprep.subr.mxu0 0.0
  %2534 = vmatpush1.msra.mxu0 0.0
  %2535 = vmatprep.subr.mxu0 0.0
  %2536 = vmatpush1.msra.mxu0 0.0
  %2537 = vmatprep.subr.mxu0 0.0
  %2538 = vmatpush1.msra.mxu0 0.0
  %2539 = vmatprep.subr.mxu0 0.0
  %2540 = vmatpush1.msra.mxu0 0.0
  %2541 = vmatprep.subr.mxu0 0.0
  %2542 = vmatpush1.msra.mxu0 0.0
  %2543 = vmatprep.subr.mxu0 0.0
  %2544 = vmatpush1.msra.mxu0 0.0
  %2545 = vmatprep.subr.mxu0 0.0
  %2546 = vmatpush1.msra.mxu0 0.0
  %2547 = vmatprep.subr.mxu0 0.0
  %2548 = vmatpush1.msra.mxu0 0.0
  %2549 = vmatprep.subr.mxu0 0.0
  %2550 = vmatpush1.msra.mxu0 0.0
  %2551 = vmatprep.subr.mxu0 0.0
  %2552 = vmatpush1.msra.mxu0 0.0
  %2553 = vmatprep.subr.mxu0 0.0
  %2554 = vmatpush1.msra.mxu0 0.0
  %2555 = vmatprep.subr.mxu0 0.0
  %2556 = vmatpush1.msra.mxu0 0.0
  %2557 = vmatprep.mubr.f32.mxu0 0.0
  %2558 = vmatmul.mubr.f32.gmra.mrb[0].mxu0 %v2491
  %v2559 = vpop.f32.mrb[0].mxu0
  %v2560 = vadd.f32 %v2487, %v2559
  %v2561 = vpop.f32.mrb[0].mxu0
  %2562 = vdwg.mxu0
  %v2563 = vlaneseq
  %v2564 = vshrl.u32 %v2563, 7
  %v2565 = vsub.s32 0, %v2564
  %v2566 = vrot.slane %v1512, %v2565
  %v2567 = vadd.f32 %v2081, %v2566
  %v2568 = vadd.f32 %v2560, %v2566
  %v2569 = vadd.f32 %v1506, %v2567
  %v2570 = vadd.f32 %v1507, %v2568
  %v2571 = vsel %vm73, %v2569, 0.0
  %2572 = vadd.xlane.f32.xlu0 %v2571
  %v2573 = vpop.xlane.xlu0 %2572
  %v2574 = vsel %vm73, %v2570, 0.0
  %2575 = vadd.xlane.f32.xlu0 %v2574
  %v2576 = vpop.xlane.xlu0 %2575
  %v2577 = vmul.f32 %v2573, %v80
  %v2578 = vmul.f32 %v2576, %v80
  %v2579 = vsub.f32 %v2569, %v2577
  %v2580 = vsub.f32 %v2570, %v2578
  %v2581 = vmul.f32 %v2579, %v2579
  %v2582 = vmul.f32 %v2580, %v2580
  %v2583 = vsel %vm73, %v2581, 0.0
  %2584 = vadd.xlane.f32.xlu0 %v2583
  %v2585 = vpop.xlane.xlu0 %2584
  %v2586 = vsel %vm73, %v2582, 0.0
  %2587 = vadd.xlane.f32.xlu0 %v2586
  %v2588 = vpop.xlane.xlu0 %2587
  %v2589 = vmul.f32 %v2585, %v80
  %v2590 = vmul.f32 %v2588, %v80
  %v2591 = vadd.f32 %v2589, 1e-12
  %v2592 = vadd.f32 %v2590, 1e-12
  %v2593 = vrsqrt.pop %v2591
  %v2594 = vrsqrt.pop %v2592
  %v2595 = vmul.f32 %v2579, %v2593
  %v2596 = vmul.f32 %v2580, %v2594
  %v2597 = vlaneseq
  %v2598 = vshrl.u32 %v2597, 7
  %v2599 = vsub.s32 1, %v2598
  %v2600 = vrot.slane %v1512, %v2599
  %v2601 = vmul.f32 %v2595, %v2600
  %v2602 = vmul.f32 %v2596, %v2600
  %v2603 = vlaneseq
  %v2604 = vshrl.u32 %v2603, 7
  %v2605 = vsub.s32 2, %v2604
  %v2606 = vrot.slane %v1512, %v2605
  %v2607 = vadd.f32 %v2601, %v2606
  %v2608 = vadd.f32 %v2602, %v2606
  %v2609 = vld [vmem:[%s13] sm:$0xff]
  %v2610 = vld [vmem:[%s13 + $0x8] sm:$0xff]
  %v2611 = vld [vmem:[%s13 + $0x10] sm:$0xff]
  %v2612 = vld [vmem:[%s13 + $0x18] sm:$0xff]
  %v2613 = vld [vmem:[%s16] sm:$0x1]
  %v2615 = vlaneseq
  %v2616 = vshrl.u32 %v2615, 7
  %v2617 = vsub.s32 0, %v2616
  %v2618 = vrot.slane %v2613, %v2617
  %v2621 = vsel %vm73, %v2607, 0
  %v2624 = vsel %vm73, %v2608, 0
  %2626 = vmatprep.subr.mxu0 0.0
  %2627 = vmatpush1.msra.mxu0 %v2609
  %2628 = vmatprep.subr.mxu0 0.0
  %2629 = vmatpush1.msra.mxu0 %v2610
  %2630 = vmatprep.subr.mxu0 0.0
  %2631 = vmatpush1.msra.mxu0 %v2611
  %2632 = vmatprep.subr.mxu0 0.0
  %2633 = vmatpush1.msra.mxu0 %v2612
  %2634 = vmatprep.subr.mxu0 0.0
  %2635 = vmatpush1.msra.mxu0 0.0
  %2636 = vmatprep.subr.mxu0 0.0
  %2637 = vmatpush1.msra.mxu0 0.0
  %2638 = vmatprep.subr.mxu0 0.0
  %2639 = vmatpush1.msra.mxu0 0.0
  %2640 = vmatprep.subr.mxu0 0.0
  %2641 = vmatpush1.msra.mxu0 0.0
  %2642 = vmatprep.subr.mxu0 0.0
  %2643 = vmatpush1.msra.mxu0 0.0
  %2644 = vmatprep.subr.mxu0 0.0
  %2645 = vmatpush1.msra.mxu0 0.0
  %2646 = vmatprep.subr.mxu0 0.0
  %2647 = vmatpush1.msra.mxu0 0.0
  %2648 = vmatprep.subr.mxu0 0.0
  %2649 = vmatpush1.msra.mxu0 0.0
  %2650 = vmatprep.subr.mxu0 0.0
  %2651 = vmatpush1.msra.mxu0 0.0
  %2652 = vmatprep.subr.mxu0 0.0
  %2653 = vmatpush1.msra.mxu0 0.0
  %2654 = vmatprep.subr.mxu0 0.0
  %2655 = vmatpush1.msra.mxu0 0.0
  %2656 = vmatprep.subr.mxu0 0.0
  %2657 = vmatpush1.msra.mxu0 0.0
  %2658 = vmatprep.subr.mxu0 0.0
  %2659 = vmatpush1.msra.mxu0 0.0
  %2660 = vmatprep.subr.mxu0 0.0
  %2661 = vmatpush1.msra.mxu0 0.0
  %2662 = vmatprep.subr.mxu0 0.0
  %2663 = vmatpush1.msra.mxu0 0.0
  %2664 = vmatprep.subr.mxu0 0.0
  %2665 = vmatpush1.msra.mxu0 0.0
  %2666 = vmatprep.subr.mxu0 0.0
  %2667 = vmatpush1.msra.mxu0 0.0
  %2668 = vmatprep.subr.mxu0 0.0
  %2669 = vmatpush1.msra.mxu0 0.0
  %2670 = vmatprep.subr.mxu0 0.0
  %2671 = vmatpush1.msra.mxu0 0.0
  %2672 = vmatprep.subr.mxu0 0.0
  %2673 = vmatpush1.msra.mxu0 0.0
  %2674 = vmatprep.subr.mxu0 0.0
  %2675 = vmatpush1.msra.mxu0 0.0
  %2676 = vmatprep.subr.mxu0 0.0
  %2677 = vmatpush1.msra.mxu0 0.0
  %2678 = vmatprep.subr.mxu0 0.0
  %2679 = vmatpush1.msra.mxu0 0.0
  %2680 = vmatprep.subr.mxu0 0.0
  %2681 = vmatpush1.msra.mxu0 0.0
  %2682 = vmatprep.subr.mxu0 0.0
  %2683 = vmatpush1.msra.mxu0 0.0
  %2684 = vmatprep.subr.mxu0 0.0
  %2685 = vmatpush1.msra.mxu0 0.0
  %2686 = vmatprep.subr.mxu0 0.0
  %2687 = vmatpush1.msra.mxu0 0.0
  %2688 = vmatprep.subr.mxu0 0.0
  %2689 = vmatpush1.msra.mxu0 0.0
  %2690 = vmatprep.mubr.f32.mxu0 0.0
  %2691 = vmatmul.mubr.f32.gmra.mrb[0].mxu0 %v2621
  %v2692 = vpop.f32.mrb[0].mxu0
  %v2693 = vadd.f32 %v2618, %v2692
  %v2694 = vpop.f32.mrb[0].mxu0
  %2695 = vmatprep.mubr.f32.mxu0 0.0
  %2696 = vmatmul.mubr.f32.gmra.mrb[0].mxu0 %v2624
  %v2697 = vpop.f32.mrb[0].mxu0
  %v2698 = vadd.f32 %v2618, %v2697
  %v2699 = vpop.f32.mrb[0].mxu0
  %2700 = vdwg.mxu0
  %v2701 = vmul.f32 %v2693, 0.5
  %v2702 = vmul.f32 %v2698, 0.5
  %v2703 = vmul.f32 %v2693, 0.70710677
  %v2704 = vmul.f32 %v2698, 0.70710677
  %v2705 = vand.u32 2147483647, %v2703
  %v2706 = vand.u32 2147483647, %v2704
  %v2707 = vmul.f32 %v2705, 0.3275911
  %v2708 = vmul.f32 %v2706, 0.3275911
  %v2709 = vadd.f32 %v2707, 1.0
  %v2710 = vadd.f32 %v2708, 1.0
  %v2711 = vrcp.pop %v2709
  %v2712 = vmul.f32 1.0, %v2711
  %v2713 = vrcp.pop %v2710
  %v2714 = vmul.f32 1.0, %v2713
  %v2715 = vmul.f32 %v2712, 1.0614054
  %v2716 = vmul.f32 %v2714, 1.0614054
  %v2717 = vadd.f32 %v2715, -1.4531521
  %v2718 = vadd.f32 %v2716, -1.4531521
  %v2719 = vmul.f32 %v2717, %v2712
  %v2720 = vmul.f32 %v2718, %v2714
  %v2721 = vadd.f32 %v2719, 1.4214138
  %v2722 = vadd.f32 %v2720, 1.4214138
  %v2723 = vmul.f32 %v2721, %v2712
  %v2724 = vmul.f32 %v2722, %v2714
  %v2725 = vadd.f32 %v2723, -0.28449672
  %v2726 = vadd.f32 %v2724, -0.28449672
  %v2727 = vmul.f32 %v2725, %v2712
  %v2728 = vmul.f32 %v2726, %v2714
  %v2729 = vadd.f32 %v2727, 0.2548296
  %v2730 = vadd.f32 %v2728, 0.2548296
  %v2731 = vmul.f32 %v2729, %v2712
  %v2732 = vmul.f32 %v2730, %v2714
  %v2733 = vsub.f32 0.0, %v2705
  %v2734 = vsub.f32 0.0, %v2706
  %v2735 = vmul.f32 %v2733, %v2705
  %v2736 = vmul.f32 %v2734, %v2706
  %v2737 = vmul.f32 %v2735, 1.442695
  %v2738 = vpow.pop %v2737
  %v2739 = vmul.f32 %v2736, 1.442695
  %v2740 = vpow.pop %v2739
  %v2741 = vmul.f32 %v2731, %v2738
  %v2742 = vmul.f32 %v2732, %v2740
  %v2743 = vsub.f32 1.0, %v2741
  %v2744 = vsub.f32 1.0, %v2742
  %vm2745 = vcmp.ge.f32.partialorder %v2703, 0.0
  %vm2746 = vcmp.ge.f32.partialorder %v2704, 0.0
  %v2747 = vsub.f32 0.0, %v2743
  %v2748 = vsub.f32 0.0, %v2744
  %v2749 = vsel %vm2745, %v2743, %v2747
  %v2750 = vsel %vm2746, %v2744, %v2748
  %v2751 = vadd.f32 %v2749, 1.0
  %v2752 = vadd.f32 %v2750, 1.0
  %v2753 = vmul.f32 %v2701, %v2751
  %v2754 = vmul.f32 %v2702, %v2752
  %v2755 = vld [vmem:[%s14] sm:$0xff]
  %v2756 = vld [vmem:[%s14 + $0x8] sm:$0xff]
  %v2757 = vld [vmem:[%s14 + $0x10] sm:$0xff]
  %v2758 = vld [vmem:[%s14 + $0x18] sm:$0xff]
  %v2759 = vld [vmem:[%s14 + $0x20] sm:$0xff]
  %v2760 = vld [vmem:[%s14 + $0x28] sm:$0xff]
  %v2761 = vld [vmem:[%s14 + $0x30] sm:$0xff]
  %v2762 = vld [vmem:[%s14 + $0x38] sm:$0xff]
  %v2763 = vlaneseq
  %v2764 = vshrl.u32 %v2763, 7
  %v2765 = vsub.s32 3, %v2764
  %v2766 = vrot.slane %v1512, %v2765
  %v2768 = vsel %vm1386, %v2753, 0
  %v2771 = vsel %vm1386, %v2754, 0
  %2773 = vmatprep.subr.mxu0 0.0
  %2774 = vmatpush1.msra.mxu0 %v2755
  %2775 = vmatprep.subr.mxu0 0.0
  %2776 = vmatpush1.msra.mxu0 %v2756
  %2777 = vmatprep.subr.mxu0 0.0
  %2778 = vmatpush1.msra.mxu0 %v2757
  %2779 = vmatprep.subr.mxu0 0.0
  %2780 = vmatpush1.msra.mxu0 %v2758
  %2781 = vmatprep.subr.mxu0 0.0
  %2782 = vmatpush1.msra.mxu0 %v2759
  %2783 = vmatprep.subr.mxu0 0.0
  %2784 = vmatpush1.msra.mxu0 %v2760
  %2785 = vmatprep.subr.mxu0 0.0
  %2786 = vmatpush1.msra.mxu0 %v2761
  %2787 = vmatprep.subr.mxu0 0.0
  %2788 = vmatpush1.msra.mxu0 %v2762
  %2789 = vmatprep.subr.mxu0 0.0
  %2790 = vmatpush1.msra.mxu0 0.0
  %2791 = vmatprep.subr.mxu0 0.0
  %2792 = vmatpush1.msra.mxu0 0.0
  %2793 = vmatprep.subr.mxu0 0.0
  %2794 = vmatpush1.msra.mxu0 0.0
  %2795 = vmatprep.subr.mxu0 0.0
  %2796 = vmatpush1.msra.mxu0 0.0
  %2797 = vmatprep.subr.mxu0 0.0
  %2798 = vmatpush1.msra.mxu0 0.0
  %2799 = vmatprep.subr.mxu0 0.0
  %2800 = vmatpush1.msra.mxu0 0.0
  %2801 = vmatprep.subr.mxu0 0.0
  %2802 = vmatpush1.msra.mxu0 0.0
  %2803 = vmatprep.subr.mxu0 0.0
  %2804 = vmatpush1.msra.mxu0 0.0
  %2805 = vmatprep.subr.mxu0 0.0
  %2806 = vmatpush1.msra.mxu0 0.0
  %2807 = vmatprep.subr.mxu0 0.0
  %2808 = vmatpush1.msra.mxu0 0.0
  %2809 = vmatprep.subr.mxu0 0.0
  %2810 = vmatpush1.msra.mxu0 0.0
  %2811 = vmatprep.subr.mxu0 0.0
  %2812 = vmatpush1.msra.mxu0 0.0
  %2813 = vmatprep.subr.mxu0 0.0
  %2814 = vmatpush1.msra.mxu0 0.0
  %2815 = vmatprep.subr.mxu0 0.0
  %2816 = vmatpush1.msra.mxu0 0.0
  %2817 = vmatprep.subr.mxu0 0.0
  %2818 = vmatpush1.msra.mxu0 0.0
  %2819 = vmatprep.subr.mxu0 0.0
  %2820 = vmatpush1.msra.mxu0 0.0
  %2821 = vmatprep.subr.mxu0 0.0
  %2822 = vmatpush1.msra.mxu0 0.0
  %2823 = vmatprep.subr.mxu0 0.0
  %2824 = vmatpush1.msra.mxu0 0.0
  %2825 = vmatprep.subr.mxu0 0.0
  %2826 = vmatpush1.msra.mxu0 0.0
  %2827 = vmatprep.subr.mxu0 0.0
  %2828 = vmatpush1.msra.mxu0 0.0
  %2829 = vmatprep.subr.mxu0 0.0
  %2830 = vmatpush1.msra.mxu0 0.0
  %2831 = vmatprep.subr.mxu0 0.0
  %2832 = vmatpush1.msra.mxu0 0.0
  %2833 = vmatprep.subr.mxu0 0.0
  %2834 = vmatpush1.msra.mxu0 0.0
  %2835 = vmatprep.subr.mxu0 0.0
  %2836 = vmatpush1.msra.mxu0 0.0
  %2837 = vmatprep.mubr.f32.mxu0 0.0
  %2838 = vmatmul.mubr.f32.gmra.mrb[0].mxu0 %v2768
  %v2839 = vpop.f32.mrb[0].mxu0
  %v2840 = vadd.f32 %v2766, %v2839
  %v2841 = vpop.f32.mrb[0].mxu0
  %2842 = vmatprep.mubr.f32.mxu0 0.0
  %2843 = vmatmul.mubr.f32.gmra.mrb[0].mxu0 %v2771
  %v2844 = vpop.f32.mrb[0].mxu0
  %v2845 = vadd.f32 %v2766, %v2844
  %v2846 = vpop.f32.mrb[0].mxu0
  %2847 = vdwg.mxu0
  %v2848 = vadd.f32 %v2607, %v2840
  %v2849 = vadd.f32 %v2608, %v2845
  %v2850 = vsel %vm73, %v2848, 0.0
  %2851 = vadd.xlane.f32.xlu0 %v2850
  %v2852 = vpop.xlane.xlu0 %2851
  %v2853 = vsel %vm73, %v2849, 0.0
  %2854 = vadd.xlane.f32.xlu0 %v2853
  %v2855 = vpop.xlane.xlu0 %2854
  %v2856 = vmul.f32 %v2852, %v80
  %v2857 = vmul.f32 %v2855, %v80
  %v2858 = vsub.f32 %v2848, %v2856
  %v2859 = vsub.f32 %v2849, %v2857
  %v2860 = vmul.f32 %v2858, %v2858
  %v2861 = vmul.f32 %v2859, %v2859
  %v2862 = vsel %vm73, %v2860, 0.0
  %2863 = vadd.xlane.f32.xlu0 %v2862
  %v2864 = vpop.xlane.xlu0 %2863
  %v2865 = vsel %vm73, %v2861, 0.0
  %2866 = vadd.xlane.f32.xlu0 %v2865
  %v2867 = vpop.xlane.xlu0 %2866
  %v2868 = vmul.f32 %v2864, %v80
  %v2869 = vmul.f32 %v2867, %v80
  %v2870 = vadd.f32 %v2868, 1e-12
  %v2871 = vadd.f32 %v2869, 1e-12
  %v2872 = vrsqrt.pop %v2870
  %v2873 = vrsqrt.pop %v2871
  %v2874 = vmul.f32 %v2858, %v2872
  %v2875 = vmul.f32 %v2859, %v2873
  %v2876 = vlaneseq
  %v2877 = vshrl.u32 %v2876, 7
  %v2878 = vsub.s32 4, %v2877
  %v2879 = vrot.slane %v1512, %v2878
  %v2880 = vmul.f32 %v2874, %v2879
  %v2881 = vmul.f32 %v2875, %v2879
  %v2882 = vlaneseq
  %v2883 = vshrl.u32 %v2882, 7
  %v2884 = vsub.s32 5, %v2883
  %v2885 = vrot.slane %v1512, %v2884
  %v2886 = vadd.f32 %v2880, %v2885
  %v2887 = vadd.f32 %v2881, %v2885
  %v2889 = vrot.slane %v2887, 7
  %vm2891 = vcmask 1040384
  %v2892 = vsel %vm2891, %v2886, %v2889
  %v2893 = vld [vmem:[%s19] sm:$0x3]
  %v2894 = vld [vmem:[%s18] sm:$0xff]
  %v2895 = vld [vmem:[%s18 + $0x8] sm:$0xff]
  %v2896 = vld [vmem:[%s18 + $0x10] sm:$0xff]
  %v2897 = vld [vmem:[%s18 + $0x18] sm:$0xff]
  %v2898 = vlaneseq
  %v2899 = vshrl.u32 %v2898, 7
  %v2900 = vsub.s32 0, %v2899
  %v2901 = vrot.slane %v2893, %v2900
  %v2903 = vsel %vm73, %v2892, 0
  %2905 = vmatprep.subr.mxu0 0.0
  %2906 = vmatpush1.msra.mxu0 %v2894
  %2907 = vmatprep.subr.mxu0 0.0
  %2908 = vmatpush1.msra.mxu0 %v2895
  %2909 = vmatprep.subr.mxu0 0.0
  %2910 = vmatpush1.msra.mxu0 %v2896
  %2911 = vmatprep.subr.mxu0 0.0
  %2912 = vmatpush1.msra.mxu0 %v2897
  %2913 = vmatprep.subr.mxu0 0.0
  %2914 = vmatpush1.msra.mxu0 0.0
  %2915 = vmatprep.subr.mxu0 0.0
  %2916 = vmatpush1.msra.mxu0 0.0
  %2917 = vmatprep.subr.mxu0 0.0
  %2918 = vmatpush1.msra.mxu0 0.0
  %2919 = vmatprep.subr.mxu0 0.0
  %2920 = vmatpush1.msra.mxu0 0.0
  %2921 = vmatprep.subr.mxu0 0.0
  %2922 = vmatpush1.msra.mxu0 0.0
  %2923 = vmatprep.subr.mxu0 0.0
  %2924 = vmatpush1.msra.mxu0 0.0
  %2925 = vmatprep.subr.mxu0 0.0
  %2926 = vmatpush1.msra.mxu0 0.0
  %2927 = vmatprep.subr.mxu0 0.0
  %2928 = vmatpush1.msra.mxu0 0.0
  %2929 = vmatprep.subr.mxu0 0.0
  %2930 = vmatpush1.msra.mxu0 0.0
  %2931 = vmatprep.subr.mxu0 0.0
  %2932 = vmatpush1.msra.mxu0 0.0
  %2933 = vmatprep.subr.mxu0 0.0
  %2934 = vmatpush1.msra.mxu0 0.0
  %2935 = vmatprep.subr.mxu0 0.0
  %2936 = vmatpush1.msra.mxu0 0.0
  %2937 = vmatprep.subr.mxu0 0.0
  %2938 = vmatpush1.msra.mxu0 0.0
  %2939 = vmatprep.subr.mxu0 0.0
  %2940 = vmatpush1.msra.mxu0 0.0
  %2941 = vmatprep.subr.mxu0 0.0
  %2942 = vmatpush1.msra.mxu0 0.0
  %2943 = vmatprep.subr.mxu0 0.0
  %2944 = vmatpush1.msra.mxu0 0.0
  %2945 = vmatprep.subr.mxu0 0.0
  %2946 = vmatpush1.msra.mxu0 0.0
  %2947 = vmatprep.subr.mxu0 0.0
  %2948 = vmatpush1.msra.mxu0 0.0
  %2949 = vmatprep.subr.mxu0 0.0
  %2950 = vmatpush1.msra.mxu0 0.0
  %2951 = vmatprep.subr.mxu0 0.0
  %2952 = vmatpush1.msra.mxu0 0.0
  %2953 = vmatprep.subr.mxu0 0.0
  %2954 = vmatpush1.msra.mxu0 0.0
  %2955 = vmatprep.subr.mxu0 0.0
  %2956 = vmatpush1.msra.mxu0 0.0
  %2957 = vmatprep.subr.mxu0 0.0
  %2958 = vmatpush1.msra.mxu0 0.0
  %2959 = vmatprep.subr.mxu0 0.0
  %2960 = vmatpush1.msra.mxu0 0.0
  %2961 = vmatprep.subr.mxu0 0.0
  %2962 = vmatpush1.msra.mxu0 0.0
  %2963 = vmatprep.subr.mxu0 0.0
  %2964 = vmatpush1.msra.mxu0 0.0
  %2965 = vmatprep.subr.mxu0 0.0
  %2966 = vmatpush1.msra.mxu0 0.0
  %2967 = vmatprep.subr.mxu0 0.0
  %2968 = vmatpush1.msra.mxu0 0.0
  %2969 = vmatprep.mubr.f32.mxu0 0.0
  %2970 = vmatmul.mubr.f32.gmra.mrb[0].mxu0 %v2903
  %v2971 = vpop.f32.mrb[0].mxu0
  %v2972 = vadd.f32 %v2901, %v2971
  %v2973 = vpop.f32.mrb[0].mxu0
  %2974 = vdwg.mxu0
  %v2975 = vtanh.pop %v2972
  %v2976 = vlaneseq
  %v2977 = vshrl.u32 %v2976, 7
  %v2978 = vsub.s32 1, %v2977
  %v2979 = vrot.slane %v2893, %v2978
  %v2980 = vmul.f32 %v2975, %v2979
  %vm2981 = vcmask 254976
  %v2982 = vsel %vm2981, %v2980, 0.0
  %2983 = vadd.xlane.f32.xlu0 %v2982
  %v2984 = vpop.xlane.xlu0 %2983
  %v2985 = vld [vmem:[#allocation2] sm:$0x1]
  %v2987 = vlaneseq
  %v2988 = vshrl.u32 %v2987, 7
  %v2989 = vsub.s32 0, %v2988
  %v2990 = vrot.slane %v2985, %v2989
  %v2992 = vadd.f32 %v2984, %v2990
  %v2993 = vxor.u32 %v2992, 2147483648
  %v2994 = vmul.f32 %v2993, 1.442695
  %v2995 = vpow.pop %v2994
  %v2996 = vadd.f32 %v2995, 1.0
  %v2997 = vrcp.pop %v2996
  %v2998 = vmul.f32 1.0, %v2997
  %v2999 = vld [vmem:[%s2] sm:$0x3]
  %v3000 = vlog2.pop %v2998
  %v3001 = vmul.f32 %v3000, 0.6931472
  %v3002 = vmax.f32 %v3001, -100.0
  %v3003 = vsub.f32 1.0, %v2998
  %v3004 = vlog2.pop %v3003
  %v3005 = vmul.f32 %v3004, 0.6931472
  %v3006 = vmax.f32 %v3005, -100.0
  %v3007 = vmul.f32 %v2999, %v3002
  %v3008 = vsub.f32 1.0, %v2999
  %v3009 = vmul.f32 %v3008, %v3006
  %v3010 = vadd.f32 %v3007, %v3009
  %v3011 = vsub.f32 0.0, %v3010
  %vm3012 = vcmask 1024
  %3013 = vst.msk [vmem:[%s21] sm:$0x3] %vm3012, %v3011
  // Predicated region
  $region86: #{bert_binary_classification_loss.1} parent=0 // pred_check
    _
  $region87: #{bert_binary_classification_loss.1} parent=0 // pred_check_branch
    %3015 = sbr.rel (0) target = $region89
  $region88: #{bert_binary_classification_loss.1} parent=0 // pred_region
    _
  $region89: #{bert_binary_classification_loss.1} parent=0 // pred_fallthru
    _
  // Predicated region
  $region90: #{bert_binary_classification_loss.1} parent=0 // pred_check
    _
  $region91: #{bert_binary_classification_loss.1} parent=0 // pred_check_branch
    %3017 = sbr.rel (0) target = $region93
  $region92: #{bert_binary_classification_loss.1} parent=0 // pred_region
    _
  $region93: #{bert_binary_classification_loss.1} parent=0 // pred_fallthru
    _

</llo_original>
